<compile_context>
chip_gen: v7x
topology: tpu7x:2x2x1
jax: 0.10.0
libtpu: 0.0.40
codegen_flags: <defaults>
</compile_context>

<pallas_src>
import jax
import jax.numpy as jnp
from jax.experimental import pallas as pl
from jax.experimental.pallas import tpu as pltpu


def _round_up(n, m):
    return ((n + m - 1) // m) * m


def _pick_tile(n, candidates=(512, 256, 128)):
    """Largest tile that divides n; n is already padded to a multiple of 128."""
    for t in candidates:
        if n >= t and n % t == 0:
            return t
    return n


# ---------------------------------------------------------------------------
# Kernel 1: fused global pairwise distance + hard positive/negative mining
#   dist = sqrt(clamp(||x_i||^2 + ||x_j||^2 - 2 x_i . x_j, 1e-12))
#   dist_ap / p_inds = max / argmax over positives (same label, diag included)
#   dist_an / n_inds = min / argmin over negatives (different label, non-padded)
# ---------------------------------------------------------------------------
def _global_mine_kernel(xr_ref, xct_ref, rn_ref, cn_ref, tr_ref, tc_ref,
                        ap_ref, an_ref, pi_ref, ni_ref):
    j = pl.program_id(1)
    tn = cn_ref.shape[1]

    @pl.when(j == 0)
    def _init():
        ap_ref[...] = jnp.full(ap_ref.shape, -jnp.inf, jnp.float32)
        an_ref[...] = jnp.full(an_ref.shape, jnp.inf, jnp.float32)
        pi_ref[...] = jnp.zeros(pi_ref.shape, jnp.int32)
        ni_ref[...] = jnp.zeros(ni_ref.shape, jnp.int32)

    # bf16 operands -> single MXU pass, f32 accumulation.  The column operand is
    # pre-transposed in the wrapper, so this is a plain NN matmul (no in-kernel
    # vxpose competing with vmatmul for the vector-extended slot).
    prod = jnp.dot(xr_ref[...], xct_ref[...], preferred_element_type=jnp.float32)
    # Squared norms are precomputed in the wrapper: no per-step full-D reduces and
    # no (tn,1)->(1,tn) transpose in the epilogue.
    d = jnp.sqrt(jnp.maximum(rn_ref[...] + cn_ref[...] - 2.0 * prod, 1e-12))

    tr = tr_ref[...]                                  # (tm, 1) int32
    tc = tc_ref[...]                                  # (1, tn) int32
    is_pos = tr == tc                                 # padded cols carry -1, never match
    is_neg = jnp.logical_and(tr != tc, tc >= 0)       # exclude padded columns

    pos_d = jnp.where(is_pos, d, -jnp.inf)
    neg_d = jnp.where(is_neg, d, jnp.inf)
    tile_ap = jnp.max(pos_d, axis=1, keepdims=True)   # (tm, 1)
    tile_an = jnp.min(neg_d, axis=1, keepdims=True)   # (tm, 1)

    # First-occurrence arg emulation (Mosaic has no indexed reduce): min column id
    # among entries achieving the extremum.  At tm=tn=128 each temporary is 16
    # vregs, so this stays register-resident (no spill traffic).
    col_ids = jax.lax.broadcasted_iota(jnp.int32, d.shape, 1) + j * tn
    big = jnp.int32(2 ** 30)
    tile_pi = jnp.min(jnp.where(pos_d == tile_ap, col_ids, big),
                      axis=1, keepdims=True)
    tile_ni = jnp.min(jnp.where(neg_d == tile_an, col_ids, big),
                      axis=1, keepdims=True)

    better_p = tile_ap > ap_ref[...]
    pi_ref[...] = jnp.where(better_p, tile_pi, pi_ref[...])
    ap_ref[...] = jnp.where(better_p, tile_ap, ap_ref[...])

    better_n = tile_an < an_ref[...]
    ni_ref[...] = jnp.where(better_n, tile_ni, ni_ref[...])
    an_ref[...] = jnp.where(better_n, tile_an, an_ref[...])


def global_hard_mining(x, targets):
    """x: (NP, D) f32, NP a multiple of 128; targets: (NP,) int32, -1 = padding."""
    n, d = x.shape
    tm = tn = 128   # 128 keeps >=2 row tiles for v7x megacore at modest N and keeps
                    # the mining-epilogue temporaries small on v5e (1 store slot).

    x_bf = x.astype(jnp.bfloat16)
    xf = x_bf.astype(jnp.float32)
    sq = jnp.sum(xf * xf, axis=1)        # norms of the bf16-rounded rows (consistent
    row_norm = sq.reshape(n, 1)          # with the bf16 MXU product -> exact 0 diag)
    col_norm = sq.reshape(1, n)
    xt_bf = x_bf.T                       # (D, NP): plain NN matmul inside the kernel
    t = targets.astype(jnp.int32)
    t_row = t.reshape(n, 1)
    t_col = t.reshape(1, n)

    row_out = pl.BlockSpec((tm, 1), lambda i, j: (i, 0))
    dist_ap, dist_an, p_inds, n_inds = pl.pallas_call(
        _global_mine_kernel,
        out_shape=(
            jax.ShapeDtypeStruct((n, 1), jnp.float32),   # dist_ap
            jax.ShapeDtypeStruct((n, 1), jnp.float32),   # dist_an
            jax.ShapeDtypeStruct((n, 1), jnp.int32),     # p_inds
            jax.ShapeDtypeStruct((n, 1), jnp.int32),     # n_inds
        ),
        grid=(n // tm, n // tn),
        in_specs=[
            pl.BlockSpec((tm, d), lambda i, j: (i, 0)),   # row block of x (bf16)
            pl.BlockSpec((d, tn), lambda i, j: (0, j)),   # pre-transposed col block (bf16)
            pl.BlockSpec((tm, 1), lambda i, j: (i, 0)),   # row norms (f32)
            pl.BlockSpec((1, tn), lambda i, j: (0, j)),   # col norms (f32)
            pl.BlockSpec((tm, 1), lambda i, j: (i, 0)),   # row targets
            pl.BlockSpec((1, tn), lambda i, j: (0, j)),   # col targets
        ],
        out_specs=(row_out, row_out, row_out, row_out),
        compiler_params=pltpu.CompilerParams(
            dimension_semantics=("parallel", "arbitrary")),
    )(x_bf, xt_bf, row_norm, col_norm, t_row, t_col)
    return dist_ap[:, 0], dist_an[:, 0], p_inds[:, 0], n_inds[:, 0]


# ---------------------------------------------------------------------------
# Kernel 2: merged batch_local_dist for the positive and negative pairs.
#   stripe distances (batch lane-resident, VPU) -> tanh(d/2) -> anti-diagonal
#   wavefront shortest-path DP over both problems at once (2*bn lanes).
# ---------------------------------------------------------------------------
def _local_pair_kernel(x_ref, yp_ref, yn_ref, out_ref):
    m, _, bn = x_ref.shape
    x = x_ref[...].astype(jnp.float32)               # (M, C, bn), batch on lanes
    xx = jnp.sum(x * x, axis=1)                      # (M, bn)

    def dm_rows(y):
        """rows[i][k, :] = tanh(d(x stripe i, y stripe k)/2); batch lane-resident."""
        yy = jnp.sum(y * y, axis=1)                  # (M, bn)
        rows = []
        for i in range(m):
            xy = jnp.sum(x[i:i + 1] * y, axis=1)     # (M, bn): VPU mult + sublane reduce
            d2 = xx[i:i + 1] + yy - 2.0 * xy
            rows.append(jnp.tanh(0.5 * jnp.sqrt(jnp.maximum(d2, 1e-12))))
        return rows

    rows_p = dm_rows(yp_ref[...].astype(jnp.float32))
    rows_n = dm_rows(yn_ref[...].astype(jnp.float32))
    # Fuse pos/neg on the lane axis: the serial DP below runs once over 2*bn lanes
    # instead of twice over bn (the DP is latency-bound, extra lanes are free).
    dm = [jnp.concatenate([p, q], axis=1) for p, q in zip(rows_p, rows_n)]

    inf = jnp.float32(jnp.inf)
    ivec = jax.lax.broadcasted_iota(jnp.int32, (m, 1), 0)

    # Anti-diagonal wavefront DP: F[i, :] holds cell (i, t - i) of the current
    # diagonal; invalid cells are +inf so min(up, left) picks the correct
    # predecessor at the borders.  Dependent-chain length is 2m-1 instead of m^2.
    # The sublane shift is a static 2-slice concat (jnp.roll semantics, ~1 vreg move).
    F = jnp.where(ivec == 0, dm[0][0:1], inf)        # t = 0: only cell (0, 0)
    for t in range(1, 2 * m - 1):
        rolled = jnp.concatenate([F[m - 1:m], F[:m - 1]], axis=0)   # rolled[i] = F[i-1] (up)
        diag = jnp.concatenate(
            [dm[i][((t - i) % m):((t - i) % m) + 1] for i in range(m)], axis=0)
        cand = jnp.minimum(F, rolled) + diag
        valid = jnp.logical_and(ivec <= t, ivec >= t - (m - 1))
        F = jnp.where(valid, cand, inf)

    res = F[m - 1:m, :]                              # (1, 2*bn): [positive | negative]
    out_ref[0:1, :] = res[:, :bn]
    out_ref[1:2, :] = res[:, bn:]


def batch_local_dist_pair(lf_t, p_lf_t, n_lf_t):
    """Inputs are (M, C, NP) with the batch on the lane axis; NP multiple of 128."""
    m, c, n = lf_t.shape
    bn = _pick_tile(n)   # up to 512 samples per step: per-sample footprint is tiny and
                         # the serial DP chain is amortised over more lanes.
    spec = pl.BlockSpec((m, c, bn), lambda b: (0, 0, b))
    out = pl.pallas_call(
        _local_pair_kernel,
        out_shape=jax.ShapeDtypeStruct((2, n), jnp.float32),
        grid=(n // bn,),
        in_specs=[spec, spec, spec],
        out_specs=pl.BlockSpec((2, bn), lambda b: (0, b)),    # lane-dense output slab
        compiler_params=pltpu.CompilerParams(
            dimension_semantics=("parallel",)),
    )(lf_t, p_lf_t, n_lf_t)
    return out[0], out[1]


# ---------------------------------------------------------------------------
# Forward pass (mutual_flag=False): returns global_loss + local_loss
# ---------------------------------------------------------------------------
def triplet_loss_aligned_reid(inputs, targets, local_features, margin=0.3):
    n = inputs.shape[0]
    n_pad = _round_up(n, 128)
    pad = n_pad - n

    # Pad to 128-aligned tiles; padded rows get label -1 (assumes real labels >= 0)
    # and are excluded from mining (columns) and from both loss means (rows).
    x = jnp.pad(inputs.astype(jnp.float32), ((0, pad), (0, 0)))
    t = jnp.pad(targets.astype(jnp.int32), (0, pad), constant_values=-1)

    dist_ap, dist_an, p_inds, n_inds = global_hard_mining(x, t)
    # NOTE: a row whose label has no negative in the batch keeps dist_an=+inf and
    # n_inds=0 (its global term becomes 0); the reference would error instead.

    # local features: (N, C, M); pad the batch, gather the mined hard pairs, and go
    # to the lane-major (M, C, N) layout the DP kernel wants.
    # TODO(synk): the data-dependent row gather stays in XLA (jnp.take); moving it
    # in-kernel would need per-row manual DMA from a pl.ANY-space ref.
    lf = jnp.pad(local_features.astype(jnp.float32), ((0, pad), (0, 0), (0, 0)))
    lf_t = jnp.transpose(lf, (2, 1, 0))
    p_lf_t = jnp.transpose(jnp.take(lf, p_inds, axis=0), (2, 1, 0))
    n_lf_t = jnp.transpose(jnp.take(lf, n_inds, axis=0), (2, 1, 0))

    local_ap, local_an = batch_local_dist_pair(lf_t, p_lf_t, n_lf_t)

    # MarginRankingLoss(margin) with y = 1: mean(relu(x2 - x1 + margin)), x1 = dist_an.
    global_loss = jnp.mean(jnp.maximum(dist_ap[:n] - dist_an[:n] + margin, 0.0))
    local_loss = jnp.mean(jnp.maximum(local_ap[:n] - local_an[:n] + margin, 0.0))
    # TODO(synk): mutual_flag=True (also returning the full NxN dist matrix) is not
    # implemented; mining is fused so the matrix is never materialized in HBM.
    return global_loss + local_loss


if __name__ == "__main__":
    key = jax.random.PRNGKey(0)
    k1, k2 = jax.random.split(key)

    N, FEAT, C_LOCAL, M = 8, 32, 32, 8
    inputs = jax.random.normal(k1, (N, FEAT), dtype=jnp.float32)
    local_features = jax.random.normal(k2, (N, C_LOCAL, M), dtype=jnp.float32)
    # 4 identities x 2 samples each (guarantees positives and negatives exist)
    targets = jnp.array([0, 0, 1, 1, 2, 2, 3, 3], dtype=jnp.int32)

    loss = jax.jit(triplet_loss_aligned_reid)(inputs, targets, local_features)
    jax.block_until_ready(loss)
    print("KERNEL_OK")
</pallas_src>

<mosaic_0001>
module attributes {stable_mosaic.version = 11 : i64} {
  func.func @_global_mine_kernel(%arg0: i32, %arg1: i32, %arg2: memref<128x32xbf16, #tpu.memory_space<vmem>>, %arg3: memref<32x128xbf16, #tpu.memory_space<vmem>>, %arg4: memref<128x1xf32, #tpu.memory_space<vmem>>, %arg5: memref<1x128xf32, #tpu.memory_space<vmem>>, %arg6: memref<128x1xi32, #tpu.memory_space<vmem>>, %arg7: memref<1x128xi32, #tpu.memory_space<vmem>>, %arg8: memref<128x1xf32, #tpu.memory_space<vmem>>, %arg9: memref<128x1xf32, #tpu.memory_space<vmem>>, %arg10: memref<128x1xi32, #tpu.memory_space<vmem>>, %arg11: memref<128x1xi32, #tpu.memory_space<vmem>>) attributes {dimension_semantics = [#tpu.dimension_semantics<parallel>, #tpu.dimension_semantics<arbitrary>], iteration_bounds = array<i64: 1, 1>, scalar_prefetch = 0 : i64, scratch_operands = 0 : i64, tpu.core_type = #tpu.core_type<tc>, window_params = [{transform_indices = @transform_0, window_bounds = array<i64: 128, 32>}, {transform_indices = @transform_1, window_bounds = array<i64: 32, 128>}, {transform_indices = @transform_2, window_bounds = array<i64: 128, 1>}, {transform_indices = @transform_3, window_bounds = array<i64: 1, 128>}, {transform_indices = @transform_4, window_bounds = array<i64: 128, 1>}, {transform_indices = @transform_5, window_bounds = array<i64: 1, 128>}, {transform_indices = @transform_6, window_bounds = array<i64: 128, 1>}, {transform_indices = @transform_7, window_bounds = array<i64: 128, 1>}, {transform_indices = @transform_8, window_bounds = array<i64: 128, 1>}, {transform_indices = @transform_9, window_bounds = array<i64: 128, 1>}]} {
    %c0_i32 = arith.constant 0 : i32
    %0 = arith.cmpi eq, %arg1, %c0_i32 : i32
    %1 = arith.extui %0 : i1 to i32
    %c0_i32_0 = arith.constant 0 : i32
    %2 = arith.cmpi ne, %1, %c0_i32_0 : i32
    scf.if %2 {
      %cst_42 = arith.constant 0xFF800000 : f32
      %69 = vector.broadcast %cst_42 : f32 to vector<128x1xf32>
      %c0_43 = arith.constant 0 : index
      %c0_44 = arith.constant 0 : index
      %70 = vector.load %arg8[%c0_43, %c0_44] : memref<128x1xf32, #tpu.memory_space<vmem>>, vector<128x1xf32>
      tpu.vector_store %arg8[%c0_43, %c0_44], %69 {strides = array<i32>} : memref<128x1xf32, #tpu.memory_space<vmem>>, vector<128x1xf32>,
      %cst_45 = arith.constant 0x7F800000 : f32
      %71 = vector.broadcast %cst_45 : f32 to vector<128x1xf32>
      %c0_46 = arith.constant 0 : index
      %c0_47 = arith.constant 0 : index
      %72 = vector.load %arg9[%c0_46, %c0_47] : memref<128x1xf32, #tpu.memory_space<vmem>>, vector<128x1xf32>
      tpu.vector_store %arg9[%c0_46, %c0_47], %71 {strides = array<i32>} : memref<128x1xf32, #tpu.memory_space<vmem>>, vector<128x1xf32>,
      %c0_i32_48 = arith.constant 0 : i32
      %73 = vector.broadcast %c0_i32_48 : i32 to vector<128x1xi32>
      %c0_49 = arith.constant 0 : index
      %c0_50 = arith.constant 0 : index
      %74 = vector.load %arg10[%c0_49, %c0_50] : memref<128x1xi32, #tpu.memory_space<vmem>>, vector<128x1xi32>
      tpu.vector_store %arg10[%c0_49, %c0_50], %73 {strides = array<i32>} : memref<128x1xi32, #tpu.memory_space<vmem>>, vector<128x1xi32>,
      %c0_i32_51 = arith.constant 0 : i32
      %75 = vector.broadcast %c0_i32_51 : i32 to vector<128x1xi32>
      %c0_52 = arith.constant 0 : index
      %c0_53 = arith.constant 0 : index
      %76 = vector.load %arg11[%c0_52, %c0_53] : memref<128x1xi32, #tpu.memory_space<vmem>>, vector<128x1xi32>
      tpu.vector_store %arg11[%c0_52, %c0_53], %75 {strides = array<i32>} : memref<128x1xi32, #tpu.memory_space<vmem>>, vector<128x1xi32>,
    } else {
    }
    %c0 = arith.constant 0 : index
    %c0_1 = arith.constant 0 : index
    %3 = vector.load %arg2[%c0, %c0_1] : memref<128x32xbf16, #tpu.memory_space<vmem>>, vector<128x32xbf16>
    %c0_2 = arith.constant 0 : index
    %c0_3 = arith.constant 0 : index
    %4 = vector.load %arg3[%c0_2, %c0_3] : memref<32x128xbf16, #tpu.memory_space<vmem>>, vector<32x128xbf16>
    %cst = arith.constant dense<0.000000e+00> : vector<128x128xf32>
    %5 = tpu.matmul %3, %4, %cst {dimension_numbers = #tpu.dot_dimension_numbers<[1], [0], [0], [1], [0, 0, 1, 1], [], []>} : vector<128x32xbf16>, vector<32x128xbf16>, vector<128x128xf32> -> vector<128x128xf32>
    %c0_4 = arith.constant 0 : index
    %c0_5 = arith.constant 0 : index
    %6 = vector.load %arg4[%c0_4, %c0_5] : memref<128x1xf32, #tpu.memory_space<vmem>>, vector<128x1xf32>
    %c0_6 = arith.constant 0 : index
    %c0_7 = arith.constant 0 : index
    %7 = vector.load %arg5[%c0_6, %c0_7] : memref<1x128xf32, #tpu.memory_space<vmem>>, vector<1x128xf32>
    %8 = vector.broadcast %6 : vector<128x1xf32> to vector<128x128xf32>
    %9 = vector.broadcast %7 : vector<1x128xf32> to vector<128x128xf32>
    %10 = arith.addf %8, %9 : vector<128x128xf32>
    %cst_8 = arith.constant 2.000000e+00 : f32
    %11 = vector.broadcast %cst_8 : f32 to vector<128x128xf32>
    %12 = arith.mulf %11, %5 : vector<128x128xf32>
    %13 = arith.subf %10, %12 : vector<128x128xf32>
    %cst_9 = arith.constant 9.99999996E-13 : f32
    %14 = vector.broadcast %cst_9 : f32 to vector<128x128xf32>
    %15 = arith.maximumf %13, %14 : vector<128x128xf32>
    %16 = math.sqrt %15 : vector<128x128xf32>
    %c0_10 = arith.constant 0 : index
    %c0_11 = arith.constant 0 : index
    %17 = vector.load %arg6[%c0_10, %c0_11] : memref<128x1xi32, #tpu.memory_space<vmem>>, vector<128x1xi32>
    %c0_12 = arith.constant 0 : index
    %c0_13 = arith.constant 0 : index
    %18 = vector.load %arg7[%c0_12, %c0_13] : memref<1x128xi32, #tpu.memory_space<vmem>>, vector<1x128xi32>
    %19 = vector.broadcast %17 : vector<128x1xi32> to vector<128x128xi32>
    %20 = vector.broadcast %18 : vector<1x128xi32> to vector<128x128xi32>
    %21 = arith.cmpi eq, %19, %20 : vector<128x128xi32>
    %22 = vector.broadcast %17 : vector<128x1xi32> to vector<128x128xi32>
    %23 = vector.broadcast %18 : vector<1x128xi32> to vector<128x128xi32>
    %24 = arith.cmpi ne, %22, %23 : vector<128x128xi32>
    %c0_i32_14 = arith.constant 0 : i32
    %25 = vector.broadcast %c0_i32_14 : i32 to vector<1x128xi32>
    %26 = arith.cmpi sge, %18, %25 : vector<1x128xi32>
    %27 = vector.broadcast %26 : vector<1x128xi1> to vector<128x128xi1>
    %28 = arith.andi %24, %27 : vector<128x128xi1>
    %cst_15 = arith.constant 0xFF800000 : f32
    %29 = vector.broadcast %cst_15 : f32 to vector<128x128xf32>
    %30 = arith.select %21, %16, %29 : vector<128x128xi1>, vector<128x128xf32>
    %cst_16 = arith.constant 0x7F800000 : f32
    %31 = vector.broadcast %cst_16 : f32 to vector<128x128xf32>
    %32 = arith.select %28, %16, %31 : vector<128x128xi1>, vector<128x128xf32>
    %cst_17 = arith.constant dense<0xFF800000> : vector<128xf32>
    %33 = vector.multi_reduction <maximumf>, %30, %cst_17 [1] : vector<128x128xf32> to vector<128xf32>
    %34 = vector.shape_cast %33 : vector<128xf32> to vector<128x1xf32>
    %cst_18 = arith.constant dense<0x7F800000> : vector<128xf32>
    %35 = vector.multi_reduction <minimumf>, %32, %cst_18 [1] : vector<128x128xf32> to vector<128xf32>
    %36 = vector.shape_cast %35 : vector<128xf32> to vector<128x1xf32>
    %37 = tpu.iota {dimensions = array<i32: 1>} : vector<128x128xi32>
    %c128_i32 = arith.constant 128 : i32
    %38 = arith.muli %arg1, %c128_i32 : i32
    %39 = vector.broadcast %38 : i32 to vector<128x128xi32>
    %40 = arith.addi %37, %39 : vector<128x128xi32>
    %41 = vector.broadcast %34 : vector<128x1xf32> to vector<128x128xf32>
    %42 = arith.cmpf oeq, %30, %41 : vector<128x128xf32>
    %c1073741824_i32 = arith.constant 1073741824 : i32
    %43 = vector.broadcast %c1073741824_i32 : i32 to vector<128x128xi32>
    %44 = arith.select %42, %40, %43 : vector<128x128xi1>, vector<128x128xi32>
    %cst_19 = arith.constant dense<2147483647> : vector<128xi32>
    %45 = vector.multi_reduction <minsi>, %44, %cst_19 [1] : vector<128x128xi32> to vector<128xi32>
    %46 = vector.shape_cast %45 : vector<128xi32> to vector<128x1xi32>
    %47 = vector.broadcast %36 : vector<128x1xf32> to vector<128x128xf32>
    %48 = arith.cmpf oeq, %32, %47 : vector<128x128xf32>
    %c1073741824_i32_20 = arith.constant 1073741824 : i32
    %49 = vector.broadcast %c1073741824_i32_20 : i32 to vector<128x128xi32>
    %50 = arith.select %48, %40, %49 : vector<128x128xi1>, vector<128x128xi32>
    %cst_21 = arith.constant dense<2147483647> : vector<128xi32>
    %51 = vector.multi_reduction <minsi>, %50, %cst_21 [1] : vector<128x128xi32> to vector<128xi32>
    %52 = vector.shape_cast %51 : vector<128xi32> to vector<128x1xi32>
    %c0_22 = arith.constant 0 : index
    %c0_23 = arith.constant 0 : index
    %53 = vector.load %arg8[%c0_22, %c0_23] : memref<128x1xf32, #tpu.memory_space<vmem>>, vector<128x1xf32>
    %54 = arith.cmpf ogt, %34, %53 : vector<128x1xf32>
    %c0_24 = arith.constant 0 : index
    %c0_25 = arith.constant 0 : index
    %55 = vector.load %arg10[%c0_24, %c0_25] : memref<128x1xi32, #tpu.memory_space<vmem>>, vector<128x1xi32>
    %56 = arith.select %54, %46, %55 : vector<128x1xi1>, vector<128x1xi32>
    %c0_26 = arith.constant 0 : index
    %c0_27 = arith.constant 0 : index
    %57 = vector.load %arg10[%c0_26, %c0_27] : memref<128x1xi32, #tpu.memory_space<vmem>>, vector<128x1xi32>
    tpu.vector_store %arg10[%c0_26, %c0_27], %56 {strides = array<i32>} : memref<128x1xi32, #tpu.memory_space<vmem>>, vector<128x1xi32>,
    %c0_28 = arith.constant 0 : index
    %c0_29 = arith.constant 0 : index
    %58 = vector.load %arg8[%c0_28, %c0_29] : memref<128x1xf32, #tpu.memory_space<vmem>>, vector<128x1xf32>
    %59 = arith.select %54, %34, %58 : vector<128x1xi1>, vector<128x1xf32>
    %c0_30 = arith.constant 0 : index
    %c0_31 = arith.constant 0 : index
    %60 = vector.load %arg8[%c0_30, %c0_31] : memref<128x1xf32, #tpu.memory_space<vmem>>, vector<128x1xf32>
    tpu.vector_store %arg8[%c0_30, %c0_31], %59 {strides = array<i32>} : memref<128x1xf32, #tpu.memory_space<vmem>>, vector<128x1xf32>,
    %c0_32 = arith.constant 0 : index
    %c0_33 = arith.constant 0 : index
    %61 = vector.load %arg9[%c0_32, %c0_33] : memref<128x1xf32, #tpu.memory_space<vmem>>, vector<128x1xf32>
    %62 = arith.cmpf olt, %36, %61 : vector<128x1xf32>
    %c0_34 = arith.constant 0 : index
    %c0_35 = arith.constant 0 : index
    %63 = vector.load %arg11[%c0_34, %c0_35] : memref<128x1xi32, #tpu.memory_space<vmem>>, vector<128x1xi32>
    %64 = arith.select %62, %52, %63 : vector<128x1xi1>, vector<128x1xi32>
    %c0_36 = arith.constant 0 : index
    %c0_37 = arith.constant 0 : index
    %65 = vector.load %arg11[%c0_36, %c0_37] : memref<128x1xi32, #tpu.memory_space<vmem>>, vector<128x1xi32>
    tpu.vector_store %arg11[%c0_36, %c0_37], %64 {strides = array<i32>} : memref<128x1xi32, #tpu.memory_space<vmem>>, vector<128x1xi32>,
    %c0_38 = arith.constant 0 : index
    %c0_39 = arith.constant 0 : index
    %66 = vector.load %arg9[%c0_38, %c0_39] : memref<128x1xf32, #tpu.memory_space<vmem>>, vector<128x1xf32>
    %67 = arith.select %62, %36, %66 : vector<128x1xi1>, vector<128x1xf32>
    %c0_40 = arith.constant 0 : index
    %c0_41 = arith.constant 0 : index
    %68 = vector.load %arg9[%c0_40, %c0_41] : memref<128x1xf32, #tpu.memory_space<vmem>>, vector<128x1xf32>
    tpu.vector_store %arg9[%c0_40, %c0_41], %67 {strides = array<i32>} : memref<128x1xf32, #tpu.memory_space<vmem>>, vector<128x1xf32>,
    return
  }
  func.func @transform_0(%arg0: i32, %arg1: i32) -> (i32, i32) {
    %c0_i32 = arith.constant 0 : i32
    %c0_i32_0 = arith.constant 0 : i32
    return %arg0, %c0_i32 : i32, i32
  }
  func.func @transform_1(%arg0: i32, %arg1: i32) -> (i32, i32) {
    %c0_i32 = arith.constant 0 : i32
    %c0_i32_0 = arith.constant 0 : i32
    return %c0_i32, %arg1 : i32, i32
  }
  func.func @transform_2(%arg0: i32, %arg1: i32) -> (i32, i32) {
    %c0_i32 = arith.constant 0 : i32
    %c0_i32_0 = arith.constant 0 : i32
    return %arg0, %c0_i32 : i32, i32
  }
  func.func @transform_3(%arg0: i32, %arg1: i32) -> (i32, i32) {
    %c0_i32 = arith.constant 0 : i32
    %c0_i32_0 = arith.constant 0 : i32
    return %c0_i32, %arg1 : i32, i32
  }
  func.func @transform_4(%arg0: i32, %arg1: i32) -> (i32, i32) {
    %c0_i32 = arith.constant 0 : i32
    %c0_i32_0 = arith.constant 0 : i32
    return %arg0, %c0_i32 : i32, i32
  }
  func.func @transform_5(%arg0: i32, %arg1: i32) -> (i32, i32) {
    %c0_i32 = arith.constant 0 : i32
    %c0_i32_0 = arith.constant 0 : i32
    return %c0_i32, %arg1 : i32, i32
  }
  func.func @transform_6(%arg0: i32, %arg1: i32) -> (i32, i32) {
    %c0_i32 = arith.constant 0 : i32
    %c0_i32_0 = arith.constant 0 : i32
    return %arg0, %c0_i32 : i32, i32
  }
  func.func @transform_7(%arg0: i32, %arg1: i32) -> (i32, i32) {
    %c0_i32 = arith.constant 0 : i32
    %c0_i32_0 = arith.constant 0 : i32
    return %arg0, %c0_i32 : i32, i32
  }
  func.func @transform_8(%arg0: i32, %arg1: i32) -> (i32, i32) {
    %c0_i32 = arith.constant 0 : i32
    %c0_i32_0 = arith.constant 0 : i32
    return %arg0, %c0_i32 : i32, i32
  }
  func.func @transform_9(%arg0: i32, %arg1: i32) -> (i32, i32) {
    %c0_i32 = arith.constant 0 : i32
    %c0_i32_0 = arith.constant 0 : i32
    return %arg0, %c0_i32 : i32, i32
  }
}

module attributes {stable_mosaic.version = 11 : i64} {
  func.func @_local_pair_kernel(%arg0: i32, %arg1: memref<8x32x128xf32, #tpu.memory_space<vmem>>, %arg2: memref<8x32x128xf32, #tpu.memory_space<vmem>>, %arg3: memref<8x32x128xf32, #tpu.memory_space<vmem>>, %arg4: memref<2x128xf32, #tpu.memory_space<vmem>>) attributes {dimension_semantics = [#tpu.dimension_semantics<parallel>], iteration_bounds = array<i64: 1>, scalar_prefetch = 0 : i64, scratch_operands = 0 : i64, tpu.core_type = #tpu.core_type<tc>, window_params = [{transform_indices = @transform_0, window_bounds = array<i64: 8, 32, 128>}, {transform_indices = @transform_1, window_bounds = array<i64: 8, 32, 128>}, {transform_indices = @transform_2, window_bounds = array<i64: 8, 32, 128>}, {transform_indices = @transform_3, window_bounds = array<i64: 2, 128>}]} {
    %c0 = arith.constant 0 : index
    %c0_0 = arith.constant 0 : index
    %c0_1 = arith.constant 0 : index
    %0 = vector.load %arg1[%c0, %c0_0, %c0_1] : memref<8x32x128xf32, #tpu.memory_space<vmem>>, vector<8x32x128xf32>
    %1 = arith.mulf %0, %0 : vector<8x32x128xf32>
    %cst = arith.constant dense<0.000000e+00> : vector<8x128xf32>
    %2 = vector.multi_reduction <add>, %1, %cst [1] : vector<8x32x128xf32> to vector<8x128xf32>
    %c0_2 = arith.constant 0 : index
    %c0_3 = arith.constant 0 : index
    %c0_4 = arith.constant 0 : index
    %3 = vector.load %arg2[%c0_2, %c0_3, %c0_4] : memref<8x32x128xf32, #tpu.memory_space<vmem>>, vector<8x32x128xf32>
    %4 = arith.mulf %3, %3 : vector<8x32x128xf32>
    %cst_5 = arith.constant dense<0.000000e+00> : vector<8x128xf32>
    %5 = vector.multi_reduction <add>, %4, %cst_5 [1] : vector<8x32x128xf32> to vector<8x128xf32>
    %6 = vector.extract_strided_slice %0 {offsets = [0, 0, 0], sizes = [1, 32, 128], strides = [1, 1, 1]} : vector<8x32x128xf32> to vector<1x32x128xf32>
    %7 = vector.broadcast %6 : vector<1x32x128xf32> to vector<8x32x128xf32>
    %8 = arith.mulf %7, %3 : vector<8x32x128xf32>
    %cst_6 = arith.constant dense<0.000000e+00> : vector<8x128xf32>
    %9 = vector.multi_reduction <add>, %8, %cst_6 [1] : vector<8x32x128xf32> to vector<8x128xf32>
    %10 = vector.extract_strided_slice %2 {offsets = [0, 0], sizes = [1, 128], strides = [1, 1]} : vector<8x128xf32> to vector<1x128xf32>
    %11 = vector.broadcast %10 : vector<1x128xf32> to vector<8x128xf32>
    %12 = arith.addf %11, %5 : vector<8x128xf32>
    %cst_7 = arith.constant 2.000000e+00 : f32
    %13 = vector.broadcast %cst_7 : f32 to vector<8x128xf32>
    %14 = arith.mulf %13, %9 : vector<8x128xf32>
    %15 = arith.subf %12, %14 : vector<8x128xf32>
    %cst_8 = arith.constant 9.99999996E-13 : f32
    %16 = vector.broadcast %cst_8 : f32 to vector<8x128xf32>
    %17 = arith.maximumf %15, %16 : vector<8x128xf32>
    %18 = math.sqrt %17 : vector<8x128xf32>
    %cst_9 = arith.constant 5.000000e-01 : f32
    %19 = vector.broadcast %cst_9 : f32 to vector<8x128xf32>
    %20 = arith.mulf %19, %18 : vector<8x128xf32>
    %21 = math.tanh %20 : vector<8x128xf32>
    %22 = vector.extract_strided_slice %0 {offsets = [1, 0, 0], sizes = [1, 32, 128], strides = [1, 1, 1]} : vector<8x32x128xf32> to vector<1x32x128xf32>
    %23 = vector.broadcast %22 : vector<1x32x128xf32> to vector<8x32x128xf32>
    %24 = arith.mulf %23, %3 : vector<8x32x128xf32>
    %cst_10 = arith.constant dense<0.000000e+00> : vector<8x128xf32>
    %25 = vector.multi_reduction <add>, %24, %cst_10 [1] : vector<8x32x128xf32> to vector<8x128xf32>
    %26 = vector.extract_strided_slice %2 {offsets = [1, 0], sizes = [1, 128], strides = [1, 1]} : vector<8x128xf32> to vector<1x128xf32>
    %27 = vector.broadcast %26 : vector<1x128xf32> to vector<8x128xf32>
    %28 = arith.addf %27, %5 : vector<8x128xf32>
    %cst_11 = arith.constant 2.000000e+00 : f32
    %29 = vector.broadcast %cst_11 : f32 to vector<8x128xf32>
    %30 = arith.mulf %29, %25 : vector<8x128xf32>
    %31 = arith.subf %28, %30 : vector<8x128xf32>
    %cst_12 = arith.constant 9.99999996E-13 : f32
    %32 = vector.broadcast %cst_12 : f32 to vector<8x128xf32>
    %33 = arith.maximumf %31, %32 : vector<8x128xf32>
    %34 = math.sqrt %33 : vector<8x128xf32>
    %cst_13 = arith.constant 5.000000e-01 : f32
    %35 = vector.broadcast %cst_13 : f32 to vector<8x128xf32>
    %36 = arith.mulf %35, %34 : vector<8x128xf32>
    %37 = math.tanh %36 : vector<8x128xf32>
    %38 = vector.extract_strided_slice %0 {offsets = [2, 0, 0], sizes = [1, 32, 128], strides = [1, 1, 1]} : vector<8x32x128xf32> to vector<1x32x128xf32>
    %39 = vector.broadcast %38 : vector<1x32x128xf32> to vector<8x32x128xf32>
    %40 = arith.mulf %39, %3 : vector<8x32x128xf32>
    %cst_14 = arith.constant dense<0.000000e+00> : vector<8x128xf32>
    %41 = vector.multi_reduction <add>, %40, %cst_14 [1] : vector<8x32x128xf32> to vector<8x128xf32>
    %42 = vector.extract_strided_slice %2 {offsets = [2, 0], sizes = [1, 128], strides = [1, 1]} : vector<8x128xf32> to vector<1x128xf32>
    %43 = vector.broadcast %42 : vector<1x128xf32> to vector<8x128xf32>
    %44 = arith.addf %43, %5 : vector<8x128xf32>
    %cst_15 = arith.constant 2.000000e+00 : f32
    %45 = vector.broadcast %cst_15 : f32 to vector<8x128xf32>
    %46 = arith.mulf %45, %41 : vector<8x128xf32>
    %47 = arith.subf %44, %46 : vector<8x128xf32>
    %cst_16 = arith.constant 9.99999996E-13 : f32
    %48 = vector.broadcast %cst_16 : f32 to vector<8x128xf32>
    %49 = arith.maximumf %47, %48 : vector<8x128xf32>
    %50 = math.sqrt %49 : vector<8x128xf32>
    %cst_17 = arith.constant 5.000000e-01 : f32
    %51 = vector.broadcast %cst_17 : f32 to vector<8x128xf32>
    %52 = arith.mulf %51, %50 : vector<8x128xf32>
    %53 = math.tanh %52 : vector<8x128xf32>
    %54 = vector.extract_strided_slice %0 {offsets = [3, 0, 0], sizes = [1, 32, 128], strides = [1, 1, 1]} : vector<8x32x128xf32> to vector<1x32x128xf32>
    %55 = vector.broadcast %54 : vector<1x32x128xf32> to vector<8x32x128xf32>
    %56 = arith.mulf %55, %3 : vector<8x32x128xf32>
    %cst_18 = arith.constant dense<0.000000e+00> : vector<8x128xf32>
    %57 = vector.multi_reduction <add>, %56, %cst_18 [1] : vector<8x32x128xf32> to vector<8x128xf32>
    %58 = vector.extract_strided_slice %2 {offsets = [3, 0], sizes = [1, 128], strides = [1, 1]} : vector<8x128xf32> to vector<1x128xf32>
    %59 = vector.broadcast %58 : vector<1x128xf32> to vector<8x128xf32>
    %60 = arith.addf %59, %5 : vector<8x128xf32>
    %cst_19 = arith.constant 2.000000e+00 : f32
    %61 = vector.broadcast %cst_19 : f32 to vector<8x128xf32>
    %62 = arith.mulf %61, %57 : vector<8x128xf32>
    %63 = arith.subf %60, %62 : vector<8x128xf32>
    %cst_20 = arith.constant 9.99999996E-13 : f32
    %64 = vector.broadcast %cst_20 : f32 to vector<8x128xf32>
    %65 = arith.maximumf %63, %64 : vector<8x128xf32>
    %66 = math.sqrt %65 : vector<8x128xf32>
    %cst_21 = arith.constant 5.000000e-01 : f32
    %67 = vector.broadcast %cst_21 : f32 to vector<8x128xf32>
    %68 = arith.mulf %67, %66 : vector<8x128xf32>
    %69 = math.tanh %68 : vector<8x128xf32>
    %70 = vector.extract_strided_slice %0 {offsets = [4, 0, 0], sizes = [1, 32, 128], strides = [1, 1, 1]} : vector<8x32x128xf32> to vector<1x32x128xf32>
    %71 = vector.broadcast %70 : vector<1x32x128xf32> to vector<8x32x128xf32>
    %72 = arith.mulf %71, %3 : vector<8x32x128xf32>
    %cst_22 = arith.constant dense<0.000000e+00> : vector<8x128xf32>
    %73 = vector.multi_reduction <add>, %72, %cst_22 [1] : vector<8x32x128xf32> to vector<8x128xf32>
    %74 = vector.extract_strided_slice %2 {offsets = [4, 0], sizes = [1, 128], strides = [1, 1]} : vector<8x128xf32> to vector<1x128xf32>
    %75 = vector.broadcast %74 : vector<1x128xf32> to vector<8x128xf32>
    %76 = arith.addf %75, %5 : vector<8x128xf32>
    %cst_23 = arith.constant 2.000000e+00 : f32
    %77 = vector.broadcast %cst_23 : f32 to vector<8x128xf32>
    %78 = arith.mulf %77, %73 : vector<8x128xf32>
    %79 = arith.subf %76, %78 : vector<8x128xf32>
    %cst_24 = arith.constant 9.99999996E-13 : f32
    %80 = vector.broadcast %cst_24 : f32 to vector<8x128xf32>
    %81 = arith.maximumf %79, %80 : vector<8x128xf32>
    %82 = math.sqrt %81 : vector<8x128xf32>
    %cst_25 = arith.constant 5.000000e-01 : f32
    %83 = vector.broadcast %cst_25 : f32 to vector<8x128xf32>
    %84 = arith.mulf %83, %82 : vector<8x128xf32>
    %85 = math.tanh %84 : vector<8x128xf32>
    %86 = vector.extract_strided_slice %0 {offsets = [5, 0, 0], sizes = [1, 32, 128], strides = [1, 1, 1]} : vector<8x32x128xf32> to vector<1x32x128xf32>
    %87 = vector.broadcast %86 : vector<1x32x128xf32> to vector<8x32x128xf32>
    %88 = arith.mulf %87, %3 : vector<8x32x128xf32>
    %cst_26 = arith.constant dense<0.000000e+00> : vector<8x128xf32>
    %89 = vector.multi_reduction <add>, %88, %cst_26 [1] : vector<8x32x128xf32> to vector<8x128xf32>
    %90 = vector.extract_strided_slice %2 {offsets = [5, 0], sizes = [1, 128], strides = [1, 1]} : vector<8x128xf32> to vector<1x128xf32>
    %91 = vector.broadcast %90 : vector<1x128xf32> to vector<8x128xf32>
    %92 = arith.addf %91, %5 : vector<8x128xf32>
    %cst_27 = arith.constant 2.000000e+00 : f32
    %93 = vector.broadcast %cst_27 : f32 to vector<8x128xf32>
    %94 = arith.mulf %93, %89 : vector<8x128xf32>
    %95 = arith.subf %92, %94 : vector<8x128xf32>
    %cst_28 = arith.constant 9.99999996E-13 : f32
    %96 = vector.broadcast %cst_28 : f32 to vector<8x128xf32>
    %97 = arith.maximumf %95, %96 : vector<8x128xf32>
    %98 = math.sqrt %97 : vector<8x128xf32>
    %cst_29 = arith.constant 5.000000e-01 : f32
    %99 = vector.broadcast %cst_29 : f32 to vector<8x128xf32>
    %100 = arith.mulf %99, %98 : vector<8x128xf32>
    %101 = math.tanh %100 : vector<8x128xf32>
    %102 = vector.extract_strided_slice %0 {offsets = [6, 0, 0], sizes = [1, 32, 128], strides = [1, 1, 1]} : vector<8x32x128xf32> to vector<1x32x128xf32>
    %103 = vector.broadcast %102 : vector<1x32x128xf32> to vector<8x32x128xf32>
    %104 = arith.mulf %103, %3 : vector<8x32x128xf32>
    %cst_30 = arith.constant dense<0.000000e+00> : vector<8x128xf32>
    %105 = vector.multi_reduction <add>, %104, %cst_30 [1] : vector<8x32x128xf32> to vector<8x128xf32>
    %106 = vector.extract_strided_slice %2 {offsets = [6, 0], sizes = [1, 128], strides = [1, 1]} : vector<8x128xf32> to vector<1x128xf32>
    %107 = vector.broadcast %106 : vector<1x128xf32> to vector<8x128xf32>
    %108 = arith.addf %107, %5 : vector<8x128xf32>
    %cst_31 = arith.constant 2.000000e+00 : f32
    %109 = vector.broadcast %cst_31 : f32 to vector<8x128xf32>
    %110 = arith.mulf %109, %105 : vector<8x128xf32>
    %111 = arith.subf %108, %110 : vector<8x128xf32>
    %cst_32 = arith.constant 9.99999996E-13 : f32
    %112 = vector.broadcast %cst_32 : f32 to vector<8x128xf32>
    %113 = arith.maximumf %111, %112 : vector<8x128xf32>
    %114 = math.sqrt %113 : vector<8x128xf32>
    %cst_33 = arith.constant 5.000000e-01 : f32
    %115 = vector.broadcast %cst_33 : f32 to vector<8x128xf32>
    %116 = arith.mulf %115, %114 : vector<8x128xf32>
    %117 = math.tanh %116 : vector<8x128xf32>
    %118 = vector.extract_strided_slice %0 {offsets = [7, 0, 0], sizes = [1, 32, 128], strides = [1, 1, 1]} : vector<8x32x128xf32> to vector<1x32x128xf32>
    %119 = vector.broadcast %118 : vector<1x32x128xf32> to vector<8x32x128xf32>
    %120 = arith.mulf %119, %3 : vector<8x32x128xf32>
    %cst_34 = arith.constant dense<0.000000e+00> : vector<8x128xf32>
    %121 = vector.multi_reduction <add>, %120, %cst_34 [1] : vector<8x32x128xf32> to vector<8x128xf32>
    %122 = vector.extract_strided_slice %2 {offsets = [7, 0], sizes = [1, 128], strides = [1, 1]} : vector<8x128xf32> to vector<1x128xf32>
    %123 = vector.broadcast %122 : vector<1x128xf32> to vector<8x128xf32>
    %124 = arith.addf %123, %5 : vector<8x128xf32>
    %cst_35 = arith.constant 2.000000e+00 : f32
    %125 = vector.broadcast %cst_35 : f32 to vector<8x128xf32>
    %126 = arith.mulf %125, %121 : vector<8x128xf32>
    %127 = arith.subf %124, %126 : vector<8x128xf32>
    %cst_36 = arith.constant 9.99999996E-13 : f32
    %128 = vector.broadcast %cst_36 : f32 to vector<8x128xf32>
    %129 = arith.maximumf %127, %128 : vector<8x128xf32>
    %130 = math.sqrt %129 : vector<8x128xf32>
    %cst_37 = arith.constant 5.000000e-01 : f32
    %131 = vector.broadcast %cst_37 : f32 to vector<8x128xf32>
    %132 = arith.mulf %131, %130 : vector<8x128xf32>
    %133 = math.tanh %132 : vector<8x128xf32>
    %c0_38 = arith.constant 0 : index
    %c0_39 = arith.constant 0 : index
    %c0_40 = arith.constant 0 : index
    %134 = vector.load %arg3[%c0_38, %c0_39, %c0_40] : memref<8x32x128xf32, #tpu.memory_space<vmem>>, vector<8x32x128xf32>
    %135 = arith.mulf %134, %134 : vector<8x32x128xf32>
    %cst_41 = arith.constant dense<0.000000e+00> : vector<8x128xf32>
    %136 = vector.multi_reduction <add>, %135, %cst_41 [1] : vector<8x32x128xf32> to vector<8x128xf32>
    %137 = vector.extract_strided_slice %0 {offsets = [0, 0, 0], sizes = [1, 32, 128], strides = [1, 1, 1]} : vector<8x32x128xf32> to vector<1x32x128xf32>
    %138 = vector.broadcast %137 : vector<1x32x128xf32> to vector<8x32x128xf32>
    %139 = arith.mulf %138, %134 : vector<8x32x128xf32>
    %cst_42 = arith.constant dense<0.000000e+00> : vector<8x128xf32>
    %140 = vector.multi_reduction <add>, %139, %cst_42 [1] : vector<8x32x128xf32> to vector<8x128xf32>
    %141 = vector.extract_strided_slice %2 {offsets = [0, 0], sizes = [1, 128], strides = [1, 1]} : vector<8x128xf32> to vector<1x128xf32>
    %142 = vector.broadcast %141 : vector<1x128xf32> to vector<8x128xf32>
    %143 = arith.addf %142, %136 : vector<8x128xf32>
    %cst_43 = arith.constant 2.000000e+00 : f32
    %144 = vector.broadcast %cst_43 : f32 to vector<8x128xf32>
    %145 = arith.mulf %144, %140 : vector<8x128xf32>
    %146 = arith.subf %143, %145 : vector<8x128xf32>
    %cst_44 = arith.constant 9.99999996E-13 : f32
    %147 = vector.broadcast %cst_44 : f32 to vector<8x128xf32>
    %148 = arith.maximumf %146, %147 : vector<8x128xf32>
    %149 = math.sqrt %148 : vector<8x128xf32>
    %cst_45 = arith.constant 5.000000e-01 : f32
    %150 = vector.broadcast %cst_45 : f32 to vector<8x128xf32>
    %151 = arith.mulf %150, %149 : vector<8x128xf32>
    %152 = math.tanh %151 : vector<8x128xf32>
    %153 = vector.extract_strided_slice %0 {offsets = [1, 0, 0], sizes = [1, 32, 128], strides = [1, 1, 1]} : vector<8x32x128xf32> to vector<1x32x128xf32>
    %154 = vector.broadcast %153 : vector<1x32x128xf32> to vector<8x32x128xf32>
    %155 = arith.mulf %154, %134 : vector<8x32x128xf32>
    %cst_46 = arith.constant dense<0.000000e+00> : vector<8x128xf32>
    %156 = vector.multi_reduction <add>, %155, %cst_46 [1] : vector<8x32x128xf32> to vector<8x128xf32>
    %157 = vector.extract_strided_slice %2 {offsets = [1, 0], sizes = [1, 128], strides = [1, 1]} : vector<8x128xf32> to vector<1x128xf32>
    %158 = vector.broadcast %157 : vector<1x128xf32> to vector<8x128xf32>
    %159 = arith.addf %158, %136 : vector<8x128xf32>
    %cst_47 = arith.constant 2.000000e+00 : f32
    %160 = vector.broadcast %cst_47 : f32 to vector<8x128xf32>
    %161 = arith.mulf %160, %156 : vector<8x128xf32>
    %162 = arith.subf %159, %161 : vector<8x128xf32>
    %cst_48 = arith.constant 9.99999996E-13 : f32
    %163 = vector.broadcast %cst_48 : f32 to vector<8x128xf32>
    %164 = arith.maximumf %162, %163 : vector<8x128xf32>
    %165 = math.sqrt %164 : vector<8x128xf32>
    %cst_49 = arith.constant 5.000000e-01 : f32
    %166 = vector.broadcast %cst_49 : f32 to vector<8x128xf32>
    %167 = arith.mulf %166, %165 : vector<8x128xf32>
    %168 = math.tanh %167 : vector<8x128xf32>
    %169 = vector.extract_strided_slice %0 {offsets = [2, 0, 0], sizes = [1, 32, 128], strides = [1, 1, 1]} : vector<8x32x128xf32> to vector<1x32x128xf32>
    %170 = vector.broadcast %169 : vector<1x32x128xf32> to vector<8x32x128xf32>
    %171 = arith.mulf %170, %134 : vector<8x32x128xf32>
    %cst_50 = arith.constant dense<0.000000e+00> : vector<8x128xf32>
    %172 = vector.multi_reduction <add>, %171, %cst_50 [1] : vector<8x32x128xf32> to vector<8x128xf32>
    %173 = vector.extract_strided_slice %2 {offsets = [2, 0], sizes = [1, 128], strides = [1, 1]} : vector<8x128xf32> to vector<1x128xf32>
    %174 = vector.broadcast %173 : vector<1x128xf32> to vector<8x128xf32>
    %175 = arith.addf %174, %136 : vector<8x128xf32>
    %cst_51 = arith.constant 2.000000e+00 : f32
    %176 = vector.broadcast %cst_51 : f32 to vector<8x128xf32>
    %177 = arith.mulf %176, %172 : vector<8x128xf32>
    %178 = arith.subf %175, %177 : vector<8x128xf32>
    %cst_52 = arith.constant 9.99999996E-13 : f32
    %179 = vector.broadcast %cst_52 : f32 to vector<8x128xf32>
    %180 = arith.maximumf %178, %179 : vector<8x128xf32>
    %181 = math.sqrt %180 : vector<8x128xf32>
    %cst_53 = arith.constant 5.000000e-01 : f32
    %182 = vector.broadcast %cst_53 : f32 to vector<8x128xf32>
    %183 = arith.mulf %182, %181 : vector<8x128xf32>
    %184 = math.tanh %183 : vector<8x128xf32>
    %185 = vector.extract_strided_slice %0 {offsets = [3, 0, 0], sizes = [1, 32, 128], strides = [1, 1, 1]} : vector<8x32x128xf32> to vector<1x32x128xf32>
    %186 = vector.broadcast %185 : vector<1x32x128xf32> to vector<8x32x128xf32>
    %187 = arith.mulf %186, %134 : vector<8x32x128xf32>
    %cst_54 = arith.constant dense<0.000000e+00> : vector<8x128xf32>
    %188 = vector.multi_reduction <add>, %187, %cst_54 [1] : vector<8x32x128xf32> to vector<8x128xf32>
    %189 = vector.extract_strided_slice %2 {offsets = [3, 0], sizes = [1, 128], strides = [1, 1]} : vector<8x128xf32> to vector<1x128xf32>
    %190 = vector.broadcast %189 : vector<1x128xf32> to vector<8x128xf32>
    %191 = arith.addf %190, %136 : vector<8x128xf32>
    %cst_55 = arith.constant 2.000000e+00 : f32
    %192 = vector.broadcast %cst_55 : f32 to vector<8x128xf32>
    %193 = arith.mulf %192, %188 : vector<8x128xf32>
    %194 = arith.subf %191, %193 : vector<8x128xf32>
    %cst_56 = arith.constant 9.99999996E-13 : f32
    %195 = vector.broadcast %cst_56 : f32 to vector<8x128xf32>
    %196 = arith.maximumf %194, %195 : vector<8x128xf32>
    %197 = math.sqrt %196 : vector<8x128xf32>
    %cst_57 = arith.constant 5.000000e-01 : f32
    %198 = vector.broadcast %cst_57 : f32 to vector<8x128xf32>
    %199 = arith.mulf %198, %197 : vector<8x128xf32>
    %200 = math.tanh %199 : vector<8x128xf32>
    %201 = vector.extract_strided_slice %0 {offsets = [4, 0, 0], sizes = [1, 32, 128], strides = [1, 1, 1]} : vector<8x32x128xf32> to vector<1x32x128xf32>
    %202 = vector.broadcast %201 : vector<1x32x128xf32> to vector<8x32x128xf32>
    %203 = arith.mulf %202, %134 : vector<8x32x128xf32>
    %cst_58 = arith.constant dense<0.000000e+00> : vector<8x128xf32>
    %204 = vector.multi_reduction <add>, %203, %cst_58 [1] : vector<8x32x128xf32> to vector<8x128xf32>
    %205 = vector.extract_strided_slice %2 {offsets = [4, 0], sizes = [1, 128], strides = [1, 1]} : vector<8x128xf32> to vector<1x128xf32>
    %206 = vector.broadcast %205 : vector<1x128xf32> to vector<8x128xf32>
    %207 = arith.addf %206, %136 : vector<8x128xf32>
    %cst_59 = arith.constant 2.000000e+00 : f32
    %208 = vector.broadcast %cst_59 : f32 to vector<8x128xf32>
    %209 = arith.mulf %208, %204 : vector<8x128xf32>
    %210 = arith.subf %207, %209 : vector<8x128xf32>
    %cst_60 = arith.constant 9.99999996E-13 : f32
    %211 = vector.broadcast %cst_60 : f32 to vector<8x128xf32>
    %212 = arith.maximumf %210, %211 : vector<8x128xf32>
    %213 = math.sqrt %212 : vector<8x128xf32>
    %cst_61 = arith.constant 5.000000e-01 : f32
    %214 = vector.broadcast %cst_61 : f32 to vector<8x128xf32>
    %215 = arith.mulf %214, %213 : vector<8x128xf32>
    %216 = math.tanh %215 : vector<8x128xf32>
    %217 = vector.extract_strided_slice %0 {offsets = [5, 0, 0], sizes = [1, 32, 128], strides = [1, 1, 1]} : vector<8x32x128xf32> to vector<1x32x128xf32>
    %218 = vector.broadcast %217 : vector<1x32x128xf32> to vector<8x32x128xf32>
    %219 = arith.mulf %218, %134 : vector<8x32x128xf32>
    %cst_62 = arith.constant dense<0.000000e+00> : vector<8x128xf32>
    %220 = vector.multi_reduction <add>, %219, %cst_62 [1] : vector<8x32x128xf32> to vector<8x128xf32>
    %221 = vector.extract_strided_slice %2 {offsets = [5, 0], sizes = [1, 128], strides = [1, 1]} : vector<8x128xf32> to vector<1x128xf32>
    %222 = vector.broadcast %221 : vector<1x128xf32> to vector<8x128xf32>
    %223 = arith.addf %222, %136 : vector<8x128xf32>
    %cst_63 = arith.constant 2.000000e+00 : f32
    %224 = vector.broadcast %cst_63 : f32 to vector<8x128xf32>
    %225 = arith.mulf %224, %220 : vector<8x128xf32>
    %226 = arith.subf %223, %225 : vector<8x128xf32>
    %cst_64 = arith.constant 9.99999996E-13 : f32
    %227 = vector.broadcast %cst_64 : f32 to vector<8x128xf32>
    %228 = arith.maximumf %226, %227 : vector<8x128xf32>
    %229 = math.sqrt %228 : vector<8x128xf32>
    %cst_65 = arith.constant 5.000000e-01 : f32
    %230 = vector.broadcast %cst_65 : f32 to vector<8x128xf32>
    %231 = arith.mulf %230, %229 : vector<8x128xf32>
    %232 = math.tanh %231 : vector<8x128xf32>
    %233 = vector.extract_strided_slice %0 {offsets = [6, 0, 0], sizes = [1, 32, 128], strides = [1, 1, 1]} : vector<8x32x128xf32> to vector<1x32x128xf32>
    %234 = vector.broadcast %233 : vector<1x32x128xf32> to vector<8x32x128xf32>
    %235 = arith.mulf %234, %134 : vector<8x32x128xf32>
    %cst_66 = arith.constant dense<0.000000e+00> : vector<8x128xf32>
    %236 = vector.multi_reduction <add>, %235, %cst_66 [1] : vector<8x32x128xf32> to vector<8x128xf32>
    %237 = vector.extract_strided_slice %2 {offsets = [6, 0], sizes = [1, 128], strides = [1, 1]} : vector<8x128xf32> to vector<1x128xf32>
    %238 = vector.broadcast %237 : vector<1x128xf32> to vector<8x128xf32>
    %239 = arith.addf %238, %136 : vector<8x128xf32>
    %cst_67 = arith.constant 2.000000e+00 : f32
    %240 = vector.broadcast %cst_67 : f32 to vector<8x128xf32>
    %241 = arith.mulf %240, %236 : vector<8x128xf32>
    %242 = arith.subf %239, %241 : vector<8x128xf32>
    %cst_68 = arith.constant 9.99999996E-13 : f32
    %243 = vector.broadcast %cst_68 : f32 to vector<8x128xf32>
    %244 = arith.maximumf %242, %243 : vector<8x128xf32>
    %245 = math.sqrt %244 : vector<8x128xf32>
    %cst_69 = arith.constant 5.000000e-01 : f32
    %246 = vector.broadcast %cst_69 : f32 to vector<8x128xf32>
    %247 = arith.mulf %246, %245 : vector<8x128xf32>
    %248 = math.tanh %247 : vector<8x128xf32>
    %249 = vector.extract_strided_slice %0 {offsets = [7, 0, 0], sizes = [1, 32, 128], strides = [1, 1, 1]} : vector<8x32x128xf32> to vector<1x32x128xf32>
    %250 = vector.broadcast %249 : vector<1x32x128xf32> to vector<8x32x128xf32>
    %251 = arith.mulf %250, %134 : vector<8x32x128xf32>
    %cst_70 = arith.constant dense<0.000000e+00> : vector<8x128xf32>
    %252 = vector.multi_reduction <add>, %251, %cst_70 [1] : vector<8x32x128xf32> to vector<8x128xf32>
    %253 = vector.extract_strided_slice %2 {offsets = [7, 0], sizes = [1, 128], strides = [1, 1]} : vector<8x128xf32> to vector<1x128xf32>
    %254 = vector.broadcast %253 : vector<1x128xf32> to vector<8x128xf32>
    %255 = arith.addf %254, %136 : vector<8x128xf32>
    %cst_71 = arith.constant 2.000000e+00 : f32
    %256 = vector.broadcast %cst_71 : f32 to vector<8x128xf32>
    %257 = arith.mulf %256, %252 : vector<8x128xf32>
    %258 = arith.subf %255, %257 : vector<8x128xf32>
    %cst_72 = arith.constant 9.99999996E-13 : f32
    %259 = vector.broadcast %cst_72 : f32 to vector<8x128xf32>
    %260 = arith.maximumf %258, %259 : vector<8x128xf32>
    %261 = math.sqrt %260 : vector<8x128xf32>
    %cst_73 = arith.constant 5.000000e-01 : f32
    %262 = vector.broadcast %cst_73 : f32 to vector<8x128xf32>
    %263 = arith.mulf %262, %261 : vector<8x128xf32>
    %264 = math.tanh %263 : vector<8x128xf32>
    %265 = tpu.concatenate %21, %152 in 1 : vector<8x128xf32>, vector<8x128xf32> -> vector<8x256xf32>
    %266 = tpu.concatenate %37, %168 in 1 : vector<8x128xf32>, vector<8x128xf32> -> vector<8x256xf32>
    %267 = tpu.concatenate %53, %184 in 1 : vector<8x128xf32>, vector<8x128xf32> -> vector<8x256xf32>
    %268 = tpu.concatenate %69, %200 in 1 : vector<8x128xf32>, vector<8x128xf32> -> vector<8x256xf32>
    %269 = tpu.concatenate %85, %216 in 1 : vector<8x128xf32>, vector<8x128xf32> -> vector<8x256xf32>
    %270 = tpu.concatenate %101, %232 in 1 : vector<8x128xf32>, vector<8x128xf32> -> vector<8x256xf32>
    %271 = tpu.concatenate %117, %248 in 1 : vector<8x128xf32>, vector<8x128xf32> -> vector<8x256xf32>
    %272 = tpu.concatenate %133, %264 in 1 : vector<8x128xf32>, vector<8x128xf32> -> vector<8x256xf32>
    %273 = tpu.iota {dimensions = array<i32: 0>} : vector<8x1xi32>
    %c0_i32 = arith.constant 0 : i32
    %274 = vector.broadcast %c0_i32 : i32 to vector<8x1xi32>
    %275 = arith.cmpi eq, %273, %274 : vector<8x1xi32>
    %276 = vector.extract_strided_slice %265 {offsets = [0, 0], sizes = [1, 256], strides = [1, 1]} : vector<8x256xf32> to vector<1x256xf32>
    %cst_74 = arith.constant 0x7F800000 : f32
    %277 = vector.shape_cast %275 : vector<8x1xi1> to vector<8x1xi1>
    %278 = vector.broadcast %277 : vector<8x1xi1> to vector<8x256xi1>
    %279 = vector.shape_cast %276 : vector<1x256xf32> to vector<1x256xf32>
    %280 = vector.broadcast %279 : vector<1x256xf32> to vector<8x256xf32>
    %281 = vector.broadcast %cst_74 : f32 to vector<8x256xf32>
    %282 = arith.select %278, %280, %281 : vector<8x256xi1>, vector<8x256xf32>
    %283 = vector.extract_strided_slice %282 {offsets = [7, 0], sizes = [1, 256], strides = [1, 1]} : vector<8x256xf32> to vector<1x256xf32>
    %284 = vector.extract_strided_slice %282 {offsets = [0, 0], sizes = [7, 256], strides = [1, 1]} : vector<8x256xf32> to vector<7x256xf32>
    %285 = tpu.concatenate %283, %284 in 0 : vector<1x256xf32>, vector<7x256xf32> -> vector<8x256xf32>
    %286 = vector.extract_strided_slice %265 {offsets = [1, 0], sizes = [1, 256], strides = [1, 1]} : vector<8x256xf32> to vector<1x256xf32>
    %287 = vector.extract_strided_slice %266 {offsets = [0, 0], sizes = [1, 256], strides = [1, 1]} : vector<8x256xf32> to vector<1x256xf32>
    %288 = vector.extract_strided_slice %267 {offsets = [7, 0], sizes = [1, 256], strides = [1, 1]} : vector<8x256xf32> to vector<1x256xf32>
    %289 = vector.extract_strided_slice %268 {offsets = [6, 0], sizes = [1, 256], strides = [1, 1]} : vector<8x256xf32> to vector<1x256xf32>
    %290 = vector.extract_strided_slice %269 {offsets = [5, 0], sizes = [1, 256], strides = [1, 1]} : vector<8x256xf32> to vector<1x256xf32>
    %291 = vector.extract_strided_slice %270 {offsets = [4, 0], sizes = [1, 256], strides = [1, 1]} : vector<8x256xf32> to vector<1x256xf32>
    %292 = vector.extract_strided_slice %271 {offsets = [3, 0], sizes = [1, 256], strides = [1, 1]} : vector<8x256xf32> to vector<1x256xf32>
    %293 = vector.extract_strided_slice %272 {offsets = [2, 0], sizes = [1, 256], strides = [1, 1]} : vector<8x256xf32> to vector<1x256xf32>
    %294 = tpu.concatenate %286, %287, %288, %289, %290, %291, %292, %293 in 0 : vector<1x256xf32>, vector<1x256xf32>, vector<1x256xf32>, vector<1x256xf32>, vector<1x256xf32>, vector<1x256xf32>, vector<1x256xf32>, vector<1x256xf32> -> vector<8x256xf32>
    %295 = arith.minimumf %282, %285 : vector<8x256xf32>
    %296 = arith.addf %295, %294 : vector<8x256xf32>
    %c1_i32 = arith.constant 1 : i32
    %297 = vector.broadcast %c1_i32 : i32 to vector<8x1xi32>
    %298 = arith.cmpi sle, %273, %297 : vector<8x1xi32>
    %c-6_i32 = arith.constant -6 : i32
    %299 = vector.broadcast %c-6_i32 : i32 to vector<8x1xi32>
    %300 = arith.cmpi sge, %273, %299 : vector<8x1xi32>
    %301 = arith.andi %298, %300 : vector<8x1xi1>
    %cst_75 = arith.constant 0x7F800000 : f32
    %302 = vector.shape_cast %301 : vector<8x1xi1> to vector<8x1xi1>
    %303 = vector.broadcast %302 : vector<8x1xi1> to vector<8x256xi1>
    %304 = vector.broadcast %cst_75 : f32 to vector<8x256xf32>
    %305 = arith.select %303, %296, %304 : vector<8x256xi1>, vector<8x256xf32>
    %306 = vector.extract_strided_slice %305 {offsets = [7, 0], sizes = [1, 256], strides = [1, 1]} : vector<8x256xf32> to vector<1x256xf32>
    %307 = vector.extract_strided_slice %305 {offsets = [0, 0], sizes = [7, 256], strides = [1, 1]} : vector<8x256xf32> to vector<7x256xf32>
    %308 = tpu.concatenate %306, %307 in 0 : vector<1x256xf32>, vector<7x256xf32> -> vector<8x256xf32>
    %309 = vector.extract_strided_slice %265 {offsets = [2, 0], sizes = [1, 256], strides = [1, 1]} : vector<8x256xf32> to vector<1x256xf32>
    %310 = vector.extract_strided_slice %266 {offsets = [1, 0], sizes = [1, 256], strides = [1, 1]} : vector<8x256xf32> to vector<1x256xf32>
    %311 = vector.extract_strided_slice %267 {offsets = [0, 0], sizes = [1, 256], strides = [1, 1]} : vector<8x256xf32> to vector<1x256xf32>
    %312 = vector.extract_strided_slice %268 {offsets = [7, 0], sizes = [1, 256], strides = [1, 1]} : vector<8x256xf32> to vector<1x256xf32>
    %313 = vector.extract_strided_slice %269 {offsets = [6, 0], sizes = [1, 256], strides = [1, 1]} : vector<8x256xf32> to vector<1x256xf32>
    %314 = vector.extract_strided_slice %270 {offsets = [5, 0], sizes = [1, 256], strides = [1, 1]} : vector<8x256xf32> to vector<1x256xf32>
    %315 = vector.extract_strided_slice %271 {offsets = [4, 0], sizes = [1, 256], strides = [1, 1]} : vector<8x256xf32> to vector<1x256xf32>
    %316 = vector.extract_strided_slice %272 {offsets = [3, 0], sizes = [1, 256], strides = [1, 1]} : vector<8x256xf32> to vector<1x256xf32>
    %317 = tpu.concatenate %309, %310, %311, %312, %313, %314, %315, %316 in 0 : vector<1x256xf32>, vector<1x256xf32>, vector<1x256xf32>, vector<1x256xf32>, vector<1x256xf32>, vector<1x256xf32>, vector<1x256xf32>, vector<1x256xf32> -> vector<8x256xf32>
    %318 = arith.minimumf %305, %308 : vector<8x256xf32>
    %319 = arith.addf %318, %317 : vector<8x256xf32>
    %c2_i32 = arith.constant 2 : i32
    %320 = vector.broadcast %c2_i32 : i32 to vector<8x1xi32>
    %321 = arith.cmpi sle, %273, %320 : vector<8x1xi32>
    %c-5_i32 = arith.constant -5 : i32
    %322 = vector.broadcast %c-5_i32 : i32 to vector<8x1xi32>
    %323 = arith.cmpi sge, %273, %322 : vector<8x1xi32>
    %324 = arith.andi %321, %323 : vector<8x1xi1>
    %cst_76 = arith.constant 0x7F800000 : f32
    %325 = vector.shape_cast %324 : vector<8x1xi1> to vector<8x1xi1>
    %326 = vector.broadcast %325 : vector<8x1xi1> to vector<8x256xi1>
    %327 = vector.broadcast %cst_76 : f32 to vector<8x256xf32>
    %328 = arith.select %326, %319, %327 : vector<8x256xi1>, vector<8x256xf32>
    %329 = vector.extract_strided_slice %328 {offsets = [7, 0], sizes = [1, 256], strides = [1, 1]} : vector<8x256xf32> to vector<1x256xf32>
    %330 = vector.extract_strided_slice %328 {offsets = [0, 0], sizes = [7, 256], strides = [1, 1]} : vector<8x256xf32> to vector<7x256xf32>
    %331 = tpu.concatenate %329, %330 in 0 : vector<1x256xf32>, vector<7x256xf32> -> vector<8x256xf32>
    %332 = vector.extract_strided_slice %265 {offsets = [3, 0], sizes = [1, 256], strides = [1, 1]} : vector<8x256xf32> to vector<1x256xf32>
    %333 = vector.extract_strided_slice %266 {offsets = [2, 0], sizes = [1, 256], strides = [1, 1]} : vector<8x256xf32> to vector<1x256xf32>
    %334 = vector.extract_strided_slice %267 {offsets = [1, 0], sizes = [1, 256], strides = [1, 1]} : vector<8x256xf32> to vector<1x256xf32>
    %335 = vector.extract_strided_slice %268 {offsets = [0, 0], sizes = [1, 256], strides = [1, 1]} : vector<8x256xf32> to vector<1x256xf32>
    %336 = vector.extract_strided_slice %269 {offsets = [7, 0], sizes = [1, 256], strides = [1, 1]} : vector<8x256xf32> to vector<1x256xf32>
    %337 = vector.extract_strided_slice %270 {offsets = [6, 0], sizes = [1, 256], strides = [1, 1]} : vector<8x256xf32> to vector<1x256xf32>
    %338 = vector.extract_strided_slice %271 {offsets = [5, 0], sizes = [1, 256], strides = [1, 1]} : vector<8x256xf32> to vector<1x256xf32>
    %339 = vector.extract_strided_slice %272 {offsets = [4, 0], sizes = [1, 256], strides = [1, 1]} : vector<8x256xf32> to vector<1x256xf32>
    %340 = tpu.concatenate %332, %333, %334, %335, %336, %337, %338, %339 in 0 : vector<1x256xf32>, vector<1x256xf32>, vector<1x256xf32>, vector<1x256xf32>, vector<1x256xf32>, vector<1x256xf32>, vector<1x256xf32>, vector<1x256xf32> -> vector<8x256xf32>
    %341 = arith.minimumf %328, %331 : vector<8x256xf32>
    %342 = arith.addf %341, %340 : vector<8x256xf32>
    %c3_i32 = arith.constant 3 : i32
    %343 = vector.broadcast %c3_i32 : i32 to vector<8x1xi32>
    %344 = arith.cmpi sle, %273, %343 : vector<8x1xi32>
    %c-4_i32 = arith.constant -4 : i32
    %345 = vector.broadcast %c-4_i32 : i32 to vector<8x1xi32>
    %346 = arith.cmpi sge, %273, %345 : vector<8x1xi32>
    %347 = arith.andi %344, %346 : vector<8x1xi1>
    %cst_77 = arith.constant 0x7F800000 : f32
    %348 = vector.shape_cast %347 : vector<8x1xi1> to vector<8x1xi1>
    %349 = vector.broadcast %348 : vector<8x1xi1> to vector<8x256xi1>
    %350 = vector.broadcast %cst_77 : f32 to vector<8x256xf32>
    %351 = arith.select %349, %342, %350 : vector<8x256xi1>, vector<8x256xf32>
    %352 = vector.extract_strided_slice %351 {offsets = [7, 0], sizes = [1, 256], strides = [1, 1]} : vector<8x256xf32> to vector<1x256xf32>
    %353 = vector.extract_strided_slice %351 {offsets = [0, 0], sizes = [7, 256], strides = [1, 1]} : vector<8x256xf32> to vector<7x256xf32>
    %354 = tpu.concatenate %352, %353 in 0 : vector<1x256xf32>, vector<7x256xf32> -> vector<8x256xf32>
    %355 = vector.extract_strided_slice %265 {offsets = [4, 0], sizes = [1, 256], strides = [1, 1]} : vector<8x256xf32> to vector<1x256xf32>
    %356 = vector.extract_strided_slice %266 {offsets = [3, 0], sizes = [1, 256], strides = [1, 1]} : vector<8x256xf32> to vector<1x256xf32>
    %357 = vector.extract_strided_slice %267 {offsets = [2, 0], sizes = [1, 256], strides = [1, 1]} : vector<8x256xf32> to vector<1x256xf32>
    %358 = vector.extract_strided_slice %268 {offsets = [1, 0], sizes = [1, 256], strides = [1, 1]} : vector<8x256xf32> to vector<1x256xf32>
    %359 = vector.extract_strided_slice %269 {offsets = [0, 0], sizes = [1, 256], strides = [1, 1]} : vector<8x256xf32> to vector<1x256xf32>
    %360 = vector.extract_strided_slice %270 {offsets = [7, 0], sizes = [1, 256], strides = [1, 1]} : vector<8x256xf32> to vector<1x256xf32>
    %361 = vector.extract_strided_slice %271 {offsets = [6, 0], sizes = [1, 256], strides = [1, 1]} : vector<8x256xf32> to vector<1x256xf32>
    %362 = vector.extract_strided_slice %272 {offsets = [5, 0], sizes = [1, 256], strides = [1, 1]} : vector<8x256xf32> to vector<1x256xf32>
    %363 = tpu.concatenate %355, %356, %357, %358, %359, %360, %361, %362 in 0 : vector<1x256xf32>, vector<1x256xf32>, vector<1x256xf32>, vector<1x256xf32>, vector<1x256xf32>, vector<1x256xf32>, vector<1x256xf32>, vector<1x256xf32> -> vector<8x256xf32>
    %364 = arith.minimumf %351, %354 : vector<8x256xf32>
    %365 = arith.addf %364, %363 : vector<8x256xf32>
    %c4_i32 = arith.constant 4 : i32
    %366 = vector.broadcast %c4_i32 : i32 to vector<8x1xi32>
    %367 = arith.cmpi sle, %273, %366 : vector<8x1xi32>
    %c-3_i32 = arith.constant -3 : i32
    %368 = vector.broadcast %c-3_i32 : i32 to vector<8x1xi32>
    %369 = arith.cmpi sge, %273, %368 : vector<8x1xi32>
    %370 = arith.andi %367, %369 : vector<8x1xi1>
    %cst_78 = arith.constant 0x7F800000 : f32
    %371 = vector.shape_cast %370 : vector<8x1xi1> to vector<8x1xi1>
    %372 = vector.broadcast %371 : vector<8x1xi1> to vector<8x256xi1>
    %373 = vector.broadcast %cst_78 : f32 to vector<8x256xf32>
    %374 = arith.select %372, %365, %373 : vector<8x256xi1>, vector<8x256xf32>
    %375 = vector.extract_strided_slice %374 {offsets = [7, 0], sizes = [1, 256], strides = [1, 1]} : vector<8x256xf32> to vector<1x256xf32>
    %376 = vector.extract_strided_slice %374 {offsets = [0, 0], sizes = [7, 256], strides = [1, 1]} : vector<8x256xf32> to vector<7x256xf32>
    %377 = tpu.concatenate %375, %376 in 0 : vector<1x256xf32>, vector<7x256xf32> -> vector<8x256xf32>
    %378 = vector.extract_strided_slice %265 {offsets = [5, 0], sizes = [1, 256], strides = [1, 1]} : vector<8x256xf32> to vector<1x256xf32>
    %379 = vector.extract_strided_slice %266 {offsets = [4, 0], sizes = [1, 256], strides = [1, 1]} : vector<8x256xf32> to vector<1x256xf32>
    %380 = vector.extract_strided_slice %267 {offsets = [3, 0], sizes = [1, 256], strides = [1, 1]} : vector<8x256xf32> to vector<1x256xf32>
    %381 = vector.extract_strided_slice %268 {offsets = [2, 0], sizes = [1, 256], strides = [1, 1]} : vector<8x256xf32> to vector<1x256xf32>
    %382 = vector.extract_strided_slice %269 {offsets = [1, 0], sizes = [1, 256], strides = [1, 1]} : vector<8x256xf32> to vector<1x256xf32>
    %383 = vector.extract_strided_slice %270 {offsets = [0, 0], sizes = [1, 256], strides = [1, 1]} : vector<8x256xf32> to vector<1x256xf32>
    %384 = vector.extract_strided_slice %271 {offsets = [7, 0], sizes = [1, 256], strides = [1, 1]} : vector<8x256xf32> to vector<1x256xf32>
    %385 = vector.extract_strided_slice %272 {offsets = [6, 0], sizes = [1, 256], strides = [1, 1]} : vector<8x256xf32> to vector<1x256xf32>
    %386 = tpu.concatenate %378, %379, %380, %381, %382, %383, %384, %385 in 0 : vector<1x256xf32>, vector<1x256xf32>, vector<1x256xf32>, vector<1x256xf32>, vector<1x256xf32>, vector<1x256xf32>, vector<1x256xf32>, vector<1x256xf32> -> vector<8x256xf32>
    %387 = arith.minimumf %374, %377 : vector<8x256xf32>
    %388 = arith.addf %387, %386 : vector<8x256xf32>
    %c5_i32 = arith.constant 5 : i32
    %389 = vector.broadcast %c5_i32 : i32 to vector<8x1xi32>
    %390 = arith.cmpi sle, %273, %389 : vector<8x1xi32>
    %c-2_i32 = arith.constant -2 : i32
    %391 = vector.broadcast %c-2_i32 : i32 to vector<8x1xi32>
    %392 = arith.cmpi sge, %273, %391 : vector<8x1xi32>
    %393 = arith.andi %390, %392 : vector<8x1xi1>
    %cst_79 = arith.constant 0x7F800000 : f32
    %394 = vector.shape_cast %393 : vector<8x1xi1> to vector<8x1xi1>
    %395 = vector.broadcast %394 : vector<8x1xi1> to vector<8x256xi1>
    %396 = vector.broadcast %cst_79 : f32 to vector<8x256xf32>
    %397 = arith.select %395, %388, %396 : vector<8x256xi1>, vector<8x256xf32>
    %398 = vector.extract_strided_slice %397 {offsets = [7, 0], sizes = [1, 256], strides = [1, 1]} : vector<8x256xf32> to vector<1x256xf32>
    %399 = vector.extract_strided_slice %397 {offsets = [0, 0], sizes = [7, 256], strides = [1, 1]} : vector<8x256xf32> to vector<7x256xf32>
    %400 = tpu.concatenate %398, %399 in 0 : vector<1x256xf32>, vector<7x256xf32> -> vector<8x256xf32>
    %401 = vector.extract_strided_slice %265 {offsets = [6, 0], sizes = [1, 256], strides = [1, 1]} : vector<8x256xf32> to vector<1x256xf32>
    %402 = vector.extract_strided_slice %266 {offsets = [5, 0], sizes = [1, 256], strides = [1, 1]} : vector<8x256xf32> to vector<1x256xf32>
    %403 = vector.extract_strided_slice %267 {offsets = [4, 0], sizes = [1, 256], strides = [1, 1]} : vector<8x256xf32> to vector<1x256xf32>
    %404 = vector.extract_strided_slice %268 {offsets = [3, 0], sizes = [1, 256], strides = [1, 1]} : vector<8x256xf32> to vector<1x256xf32>
    %405 = vector.extract_strided_slice %269 {offsets = [2, 0], sizes = [1, 256], strides = [1, 1]} : vector<8x256xf32> to vector<1x256xf32>
    %406 = vector.extract_strided_slice %270 {offsets = [1, 0], sizes = [1, 256], strides = [1, 1]} : vector<8x256xf32> to vector<1x256xf32>
    %407 = vector.extract_strided_slice %271 {offsets = [0, 0], sizes = [1, 256], strides = [1, 1]} : vector<8x256xf32> to vector<1x256xf32>
    %408 = vector.extract_strided_slice %272 {offsets = [7, 0], sizes = [1, 256], strides = [1, 1]} : vector<8x256xf32> to vector<1x256xf32>
    %409 = tpu.concatenate %401, %402, %403, %404, %405, %406, %407, %408 in 0 : vector<1x256xf32>, vector<1x256xf32>, vector<1x256xf32>, vector<1x256xf32>, vector<1x256xf32>, vector<1x256xf32>, vector<1x256xf32>, vector<1x256xf32> -> vector<8x256xf32>
    %410 = arith.minimumf %397, %400 : vector<8x256xf32>
    %411 = arith.addf %410, %409 : vector<8x256xf32>
    %c6_i32 = arith.constant 6 : i32
    %412 = vector.broadcast %c6_i32 : i32 to vector<8x1xi32>
    %413 = arith.cmpi sle, %273, %412 : vector<8x1xi32>
    %c-1_i32 = arith.constant -1 : i32
    %414 = vector.broadcast %c-1_i32 : i32 to vector<8x1xi32>
    %415 = arith.cmpi sge, %273, %414 : vector<8x1xi32>
    %416 = arith.andi %413, %415 : vector<8x1xi1>
    %cst_80 = arith.constant 0x7F800000 : f32
    %417 = vector.shape_cast %416 : vector<8x1xi1> to vector<8x1xi1>
    %418 = vector.broadcast %417 : vector<8x1xi1> to vector<8x256xi1>
    %419 = vector.broadcast %cst_80 : f32 to vector<8x256xf32>
    %420 = arith.select %418, %411, %419 : vector<8x256xi1>, vector<8x256xf32>
    %421 = vector.extract_strided_slice %420 {offsets = [7, 0], sizes = [1, 256], strides = [1, 1]} : vector<8x256xf32> to vector<1x256xf32>
    %422 = vector.extract_strided_slice %420 {offsets = [0, 0], sizes = [7, 256], strides = [1, 1]} : vector<8x256xf32> to vector<7x256xf32>
    %423 = tpu.concatenate %421, %422 in 0 : vector<1x256xf32>, vector<7x256xf32> -> vector<8x256xf32>
    %424 = vector.extract_strided_slice %265 {offsets = [7, 0], sizes = [1, 256], strides = [1, 1]} : vector<8x256xf32> to vector<1x256xf32>
    %425 = vector.extract_strided_slice %266 {offsets = [6, 0], sizes = [1, 256], strides = [1, 1]} : vector<8x256xf32> to vector<1x256xf32>
    %426 = vector.extract_strided_slice %267 {offsets = [5, 0], sizes = [1, 256], strides = [1, 1]} : vector<8x256xf32> to vector<1x256xf32>
    %427 = vector.extract_strided_slice %268 {offsets = [4, 0], sizes = [1, 256], strides = [1, 1]} : vector<8x256xf32> to vector<1x256xf32>
    %428 = vector.extract_strided_slice %269 {offsets = [3, 0], sizes = [1, 256], strides = [1, 1]} : vector<8x256xf32> to vector<1x256xf32>
    %429 = vector.extract_strided_slice %270 {offsets = [2, 0], sizes = [1, 256], strides = [1, 1]} : vector<8x256xf32> to vector<1x256xf32>
    %430 = vector.extract_strided_slice %271 {offsets = [1, 0], sizes = [1, 256], strides = [1, 1]} : vector<8x256xf32> to vector<1x256xf32>
    %431 = vector.extract_strided_slice %272 {offsets = [0, 0], sizes = [1, 256], strides = [1, 1]} : vector<8x256xf32> to vector<1x256xf32>
    %432 = tpu.concatenate %424, %425, %426, %427, %428, %429, %430, %431 in 0 : vector<1x256xf32>, vector<1x256xf32>, vector<1x256xf32>, vector<1x256xf32>, vector<1x256xf32>, vector<1x256xf32>, vector<1x256xf32>, vector<1x256xf32> -> vector<8x256xf32>
    %433 = arith.minimumf %420, %423 : vector<8x256xf32>
    %434 = arith.addf %433, %432 : vector<8x256xf32>
    %c7_i32 = arith.constant 7 : i32
    %435 = vector.broadcast %c7_i32 : i32 to vector<8x1xi32>
    %436 = arith.cmpi sle, %273, %435 : vector<8x1xi32>
    %c0_i32_81 = arith.constant 0 : i32
    %437 = vector.broadcast %c0_i32_81 : i32 to vector<8x1xi32>
    %438 = arith.cmpi sge, %273, %437 : vector<8x1xi32>
    %439 = arith.andi %436, %438 : vector<8x1xi1>
    %cst_82 = arith.constant 0x7F800000 : f32
    %440 = vector.shape_cast %439 : vector<8x1xi1> to vector<8x1xi1>
    %441 = vector.broadcast %440 : vector<8x1xi1> to vector<8x256xi1>
    %442 = vector.broadcast %cst_82 : f32 to vector<8x256xf32>
    %443 = arith.select %441, %434, %442 : vector<8x256xi1>, vector<8x256xf32>
    %444 = vector.extract_strided_slice %443 {offsets = [7, 0], sizes = [1, 256], strides = [1, 1]} : vector<8x256xf32> to vector<1x256xf32>
    %445 = vector.extract_strided_slice %443 {offsets = [0, 0], sizes = [7, 256], strides = [1, 1]} : vector<8x256xf32> to vector<7x256xf32>
    %446 = tpu.concatenate %444, %445 in 0 : vector<1x256xf32>, vector<7x256xf32> -> vector<8x256xf32>
    %447 = vector.extract_strided_slice %265 {offsets = [0, 0], sizes = [1, 256], strides = [1, 1]} : vector<8x256xf32> to vector<1x256xf32>
    %448 = vector.extract_strided_slice %266 {offsets = [7, 0], sizes = [1, 256], strides = [1, 1]} : vector<8x256xf32> to vector<1x256xf32>
    %449 = vector.extract_strided_slice %267 {offsets = [6, 0], sizes = [1, 256], strides = [1, 1]} : vector<8x256xf32> to vector<1x256xf32>
    %450 = vector.extract_strided_slice %268 {offsets = [5, 0], sizes = [1, 256], strides = [1, 1]} : vector<8x256xf32> to vector<1x256xf32>
    %451 = vector.extract_strided_slice %269 {offsets = [4, 0], sizes = [1, 256], strides = [1, 1]} : vector<8x256xf32> to vector<1x256xf32>
    %452 = vector.extract_strided_slice %270 {offsets = [3, 0], sizes = [1, 256], strides = [1, 1]} : vector<8x256xf32> to vector<1x256xf32>
    %453 = vector.extract_strided_slice %271 {offsets = [2, 0], sizes = [1, 256], strides = [1, 1]} : vector<8x256xf32> to vector<1x256xf32>
    %454 = vector.extract_strided_slice %272 {offsets = [1, 0], sizes = [1, 256], strides = [1, 1]} : vector<8x256xf32> to vector<1x256xf32>
    %455 = tpu.concatenate %447, %448, %449, %450, %451, %452, %453, %454 in 0 : vector<1x256xf32>, vector<1x256xf32>, vector<1x256xf32>, vector<1x256xf32>, vector<1x256xf32>, vector<1x256xf32>, vector<1x256xf32>, vector<1x256xf32> -> vector<8x256xf32>
    %456 = arith.minimumf %443, %446 : vector<8x256xf32>
    %457 = arith.addf %456, %455 : vector<8x256xf32>
    %c8_i32 = arith.constant 8 : i32
    %458 = vector.broadcast %c8_i32 : i32 to vector<8x1xi32>
    %459 = arith.cmpi sle, %273, %458 : vector<8x1xi32>
    %c1_i32_83 = arith.constant 1 : i32
    %460 = vector.broadcast %c1_i32_83 : i32 to vector<8x1xi32>
    %461 = arith.cmpi sge, %273, %460 : vector<8x1xi32>
    %462 = arith.andi %459, %461 : vector<8x1xi1>
    %cst_84 = arith.constant 0x7F800000 : f32
    %463 = vector.shape_cast %462 : vector<8x1xi1> to vector<8x1xi1>
    %464 = vector.broadcast %463 : vector<8x1xi1> to vector<8x256xi1>
    %465 = vector.broadcast %cst_84 : f32 to vector<8x256xf32>
    %466 = arith.select %464, %457, %465 : vector<8x256xi1>, vector<8x256xf32>
    %467 = vector.extract_strided_slice %466 {offsets = [7, 0], sizes = [1, 256], strides = [1, 1]} : vector<8x256xf32> to vector<1x256xf32>
    %468 = vector.extract_strided_slice %466 {offsets = [0, 0], sizes = [7, 256], strides = [1, 1]} : vector<8x256xf32> to vector<7x256xf32>
    %469 = tpu.concatenate %467, %468 in 0 : vector<1x256xf32>, vector<7x256xf32> -> vector<8x256xf32>
    %470 = vector.extract_strided_slice %265 {offsets = [1, 0], sizes = [1, 256], strides = [1, 1]} : vector<8x256xf32> to vector<1x256xf32>
    %471 = vector.extract_strided_slice %266 {offsets = [0, 0], sizes = [1, 256], strides = [1, 1]} : vector<8x256xf32> to vector<1x256xf32>
    %472 = vector.extract_strided_slice %267 {offsets = [7, 0], sizes = [1, 256], strides = [1, 1]} : vector<8x256xf32> to vector<1x256xf32>
    %473 = vector.extract_strided_slice %268 {offsets = [6, 0], sizes = [1, 256], strides = [1, 1]} : vector<8x256xf32> to vector<1x256xf32>
    %474 = vector.extract_strided_slice %269 {offsets = [5, 0], sizes = [1, 256], strides = [1, 1]} : vector<8x256xf32> to vector<1x256xf32>
    %475 = vector.extract_strided_slice %270 {offsets = [4, 0], sizes = [1, 256], strides = [1, 1]} : vector<8x256xf32> to vector<1x256xf32>
    %476 = vector.extract_strided_slice %271 {offsets = [3, 0], sizes = [1, 256], strides = [1, 1]} : vector<8x256xf32> to vector<1x256xf32>
    %477 = vector.extract_strided_slice %272 {offsets = [2, 0], sizes = [1, 256], strides = [1, 1]} : vector<8x256xf32> to vector<1x256xf32>
    %478 = tpu.concatenate %470, %471, %472, %473, %474, %475, %476, %477 in 0 : vector<1x256xf32>, vector<1x256xf32>, vector<1x256xf32>, vector<1x256xf32>, vector<1x256xf32>, vector<1x256xf32>, vector<1x256xf32>, vector<1x256xf32> -> vector<8x256xf32>
    %479 = arith.minimumf %466, %469 : vector<8x256xf32>
    %480 = arith.addf %479, %478 : vector<8x256xf32>
    %c9_i32 = arith.constant 9 : i32
    %481 = vector.broadcast %c9_i32 : i32 to vector<8x1xi32>
    %482 = arith.cmpi sle, %273, %481 : vector<8x1xi32>
    %c2_i32_85 = arith.constant 2 : i32
    %483 = vector.broadcast %c2_i32_85 : i32 to vector<8x1xi32>
    %484 = arith.cmpi sge, %273, %483 : vector<8x1xi32>
    %485 = arith.andi %482, %484 : vector<8x1xi1>
    %cst_86 = arith.constant 0x7F800000 : f32
    %486 = vector.shape_cast %485 : vector<8x1xi1> to vector<8x1xi1>
    %487 = vector.broadcast %486 : vector<8x1xi1> to vector<8x256xi1>
    %488 = vector.broadcast %cst_86 : f32 to vector<8x256xf32>
    %489 = arith.select %487, %480, %488 : vector<8x256xi1>, vector<8x256xf32>
    %490 = vector.extract_strided_slice %489 {offsets = [7, 0], sizes = [1, 256], strides = [1, 1]} : vector<8x256xf32> to vector<1x256xf32>
    %491 = vector.extract_strided_slice %489 {offsets = [0, 0], sizes = [7, 256], strides = [1, 1]} : vector<8x256xf32> to vector<7x256xf32>
    %492 = tpu.concatenate %490, %491 in 0 : vector<1x256xf32>, vector<7x256xf32> -> vector<8x256xf32>
    %493 = vector.extract_strided_slice %265 {offsets = [2, 0], sizes = [1, 256], strides = [1, 1]} : vector<8x256xf32> to vector<1x256xf32>
    %494 = vector.extract_strided_slice %266 {offsets = [1, 0], sizes = [1, 256], strides = [1, 1]} : vector<8x256xf32> to vector<1x256xf32>
    %495 = vector.extract_strided_slice %267 {offsets = [0, 0], sizes = [1, 256], strides = [1, 1]} : vector<8x256xf32> to vector<1x256xf32>
    %496 = vector.extract_strided_slice %268 {offsets = [7, 0], sizes = [1, 256], strides = [1, 1]} : vector<8x256xf32> to vector<1x256xf32>
    %497 = vector.extract_strided_slice %269 {offsets = [6, 0], sizes = [1, 256], strides = [1, 1]} : vector<8x256xf32> to vector<1x256xf32>
    %498 = vector.extract_strided_slice %270 {offsets = [5, 0], sizes = [1, 256], strides = [1, 1]} : vector<8x256xf32> to vector<1x256xf32>
    %499 = vector.extract_strided_slice %271 {offsets = [4, 0], sizes = [1, 256], strides = [1, 1]} : vector<8x256xf32> to vector<1x256xf32>
    %500 = vector.extract_strided_slice %272 {offsets = [3, 0], sizes = [1, 256], strides = [1, 1]} : vector<8x256xf32> to vector<1x256xf32>
    %501 = tpu.concatenate %493, %494, %495, %496, %497, %498, %499, %500 in 0 : vector<1x256xf32>, vector<1x256xf32>, vector<1x256xf32>, vector<1x256xf32>, vector<1x256xf32>, vector<1x256xf32>, vector<1x256xf32>, vector<1x256xf32> -> vector<8x256xf32>
    %502 = arith.minimumf %489, %492 : vector<8x256xf32>
    %503 = arith.addf %502, %501 : vector<8x256xf32>
    %c10_i32 = arith.constant 10 : i32
    %504 = vector.broadcast %c10_i32 : i32 to vector<8x1xi32>
    %505 = arith.cmpi sle, %273, %504 : vector<8x1xi32>
    %c3_i32_87 = arith.constant 3 : i32
    %506 = vector.broadcast %c3_i32_87 : i32 to vector<8x1xi32>
    %507 = arith.cmpi sge, %273, %506 : vector<8x1xi32>
    %508 = arith.andi %505, %507 : vector<8x1xi1>
    %cst_88 = arith.constant 0x7F800000 : f32
    %509 = vector.shape_cast %508 : vector<8x1xi1> to vector<8x1xi1>
    %510 = vector.broadcast %509 : vector<8x1xi1> to vector<8x256xi1>
    %511 = vector.broadcast %cst_88 : f32 to vector<8x256xf32>
    %512 = arith.select %510, %503, %511 : vector<8x256xi1>, vector<8x256xf32>
    %513 = vector.extract_strided_slice %512 {offsets = [7, 0], sizes = [1, 256], strides = [1, 1]} : vector<8x256xf32> to vector<1x256xf32>
    %514 = vector.extract_strided_slice %512 {offsets = [0, 0], sizes = [7, 256], strides = [1, 1]} : vector<8x256xf32> to vector<7x256xf32>
    %515 = tpu.concatenate %513, %514 in 0 : vector<1x256xf32>, vector<7x256xf32> -> vector<8x256xf32>
    %516 = vector.extract_strided_slice %265 {offsets = [3, 0], sizes = [1, 256], strides = [1, 1]} : vector<8x256xf32> to vector<1x256xf32>
    %517 = vector.extract_strided_slice %266 {offsets = [2, 0], sizes = [1, 256], strides = [1, 1]} : vector<8x256xf32> to vector<1x256xf32>
    %518 = vector.extract_strided_slice %267 {offsets = [1, 0], sizes = [1, 256], strides = [1, 1]} : vector<8x256xf32> to vector<1x256xf32>
    %519 = vector.extract_strided_slice %268 {offsets = [0, 0], sizes = [1, 256], strides = [1, 1]} : vector<8x256xf32> to vector<1x256xf32>
    %520 = vector.extract_strided_slice %269 {offsets = [7, 0], sizes = [1, 256], strides = [1, 1]} : vector<8x256xf32> to vector<1x256xf32>
    %521 = vector.extract_strided_slice %270 {offsets = [6, 0], sizes = [1, 256], strides = [1, 1]} : vector<8x256xf32> to vector<1x256xf32>
    %522 = vector.extract_strided_slice %271 {offsets = [5, 0], sizes = [1, 256], strides = [1, 1]} : vector<8x256xf32> to vector<1x256xf32>
    %523 = vector.extract_strided_slice %272 {offsets = [4, 0], sizes = [1, 256], strides = [1, 1]} : vector<8x256xf32> to vector<1x256xf32>
    %524 = tpu.concatenate %516, %517, %518, %519, %520, %521, %522, %523 in 0 : vector<1x256xf32>, vector<1x256xf32>, vector<1x256xf32>, vector<1x256xf32>, vector<1x256xf32>, vector<1x256xf32>, vector<1x256xf32>, vector<1x256xf32> -> vector<8x256xf32>
    %525 = arith.minimumf %512, %515 : vector<8x256xf32>
    %526 = arith.addf %525, %524 : vector<8x256xf32>
    %c11_i32 = arith.constant 11 : i32
    %527 = vector.broadcast %c11_i32 : i32 to vector<8x1xi32>
    %528 = arith.cmpi sle, %273, %527 : vector<8x1xi32>
    %c4_i32_89 = arith.constant 4 : i32
    %529 = vector.broadcast %c4_i32_89 : i32 to vector<8x1xi32>
    %530 = arith.cmpi sge, %273, %529 : vector<8x1xi32>
    %531 = arith.andi %528, %530 : vector<8x1xi1>
    %cst_90 = arith.constant 0x7F800000 : f32
    %532 = vector.shape_cast %531 : vector<8x1xi1> to vector<8x1xi1>
    %533 = vector.broadcast %532 : vector<8x1xi1> to vector<8x256xi1>
    %534 = vector.broadcast %cst_90 : f32 to vector<8x256xf32>
    %535 = arith.select %533, %526, %534 : vector<8x256xi1>, vector<8x256xf32>
    %536 = vector.extract_strided_slice %535 {offsets = [7, 0], sizes = [1, 256], strides = [1, 1]} : vector<8x256xf32> to vector<1x256xf32>
    %537 = vector.extract_strided_slice %535 {offsets = [0, 0], sizes = [7, 256], strides = [1, 1]} : vector<8x256xf32> to vector<7x256xf32>
    %538 = tpu.concatenate %536, %537 in 0 : vector<1x256xf32>, vector<7x256xf32> -> vector<8x256xf32>
    %539 = vector.extract_strided_slice %265 {offsets = [4, 0], sizes = [1, 256], strides = [1, 1]} : vector<8x256xf32> to vector<1x256xf32>
    %540 = vector.extract_strided_slice %266 {offsets = [3, 0], sizes = [1, 256], strides = [1, 1]} : vector<8x256xf32> to vector<1x256xf32>
    %541 = vector.extract_strided_slice %267 {offsets = [2, 0], sizes = [1, 256], strides = [1, 1]} : vector<8x256xf32> to vector<1x256xf32>
    %542 = vector.extract_strided_slice %268 {offsets = [1, 0], sizes = [1, 256], strides = [1, 1]} : vector<8x256xf32> to vector<1x256xf32>
    %543 = vector.extract_strided_slice %269 {offsets = [0, 0], sizes = [1, 256], strides = [1, 1]} : vector<8x256xf32> to vector<1x256xf32>
    %544 = vector.extract_strided_slice %270 {offsets = [7, 0], sizes = [1, 256], strides = [1, 1]} : vector<8x256xf32> to vector<1x256xf32>
    %545 = vector.extract_strided_slice %271 {offsets = [6, 0], sizes = [1, 256], strides = [1, 1]} : vector<8x256xf32> to vector<1x256xf32>
    %546 = vector.extract_strided_slice %272 {offsets = [5, 0], sizes = [1, 256], strides = [1, 1]} : vector<8x256xf32> to vector<1x256xf32>
    %547 = tpu.concatenate %539, %540, %541, %542, %543, %544, %545, %546 in 0 : vector<1x256xf32>, vector<1x256xf32>, vector<1x256xf32>, vector<1x256xf32>, vector<1x256xf32>, vector<1x256xf32>, vector<1x256xf32>, vector<1x256xf32> -> vector<8x256xf32>
    %548 = arith.minimumf %535, %538 : vector<8x256xf32>
    %549 = arith.addf %548, %547 : vector<8x256xf32>
    %c12_i32 = arith.constant 12 : i32
    %550 = vector.broadcast %c12_i32 : i32 to vector<8x1xi32>
    %551 = arith.cmpi sle, %273, %550 : vector<8x1xi32>
    %c5_i32_91 = arith.constant 5 : i32
    %552 = vector.broadcast %c5_i32_91 : i32 to vector<8x1xi32>
    %553 = arith.cmpi sge, %273, %552 : vector<8x1xi32>
    %554 = arith.andi %551, %553 : vector<8x1xi1>
    %cst_92 = arith.constant 0x7F800000 : f32
    %555 = vector.shape_cast %554 : vector<8x1xi1> to vector<8x1xi1>
    %556 = vector.broadcast %555 : vector<8x1xi1> to vector<8x256xi1>
    %557 = vector.broadcast %cst_92 : f32 to vector<8x256xf32>
    %558 = arith.select %556, %549, %557 : vector<8x256xi1>, vector<8x256xf32>
    %559 = vector.extract_strided_slice %558 {offsets = [7, 0], sizes = [1, 256], strides = [1, 1]} : vector<8x256xf32> to vector<1x256xf32>
    %560 = vector.extract_strided_slice %558 {offsets = [0, 0], sizes = [7, 256], strides = [1, 1]} : vector<8x256xf32> to vector<7x256xf32>
    %561 = tpu.concatenate %559, %560 in 0 : vector<1x256xf32>, vector<7x256xf32> -> vector<8x256xf32>
    %562 = vector.extract_strided_slice %265 {offsets = [5, 0], sizes = [1, 256], strides = [1, 1]} : vector<8x256xf32> to vector<1x256xf32>
    %563 = vector.extract_strided_slice %266 {offsets = [4, 0], sizes = [1, 256], strides = [1, 1]} : vector<8x256xf32> to vector<1x256xf32>
    %564 = vector.extract_strided_slice %267 {offsets = [3, 0], sizes = [1, 256], strides = [1, 1]} : vector<8x256xf32> to vector<1x256xf32>
    %565 = vector.extract_strided_slice %268 {offsets = [2, 0], sizes = [1, 256], strides = [1, 1]} : vector<8x256xf32> to vector<1x256xf32>
    %566 = vector.extract_strided_slice %269 {offsets = [1, 0], sizes = [1, 256], strides = [1, 1]} : vector<8x256xf32> to vector<1x256xf32>
    %567 = vector.extract_strided_slice %270 {offsets = [0, 0], sizes = [1, 256], strides = [1, 1]} : vector<8x256xf32> to vector<1x256xf32>
    %568 = vector.extract_strided_slice %271 {offsets = [7, 0], sizes = [1, 256], strides = [1, 1]} : vector<8x256xf32> to vector<1x256xf32>
    %569 = vector.extract_strided_slice %272 {offsets = [6, 0], sizes = [1, 256], strides = [1, 1]} : vector<8x256xf32> to vector<1x256xf32>
    %570 = tpu.concatenate %562, %563, %564, %565, %566, %567, %568, %569 in 0 : vector<1x256xf32>, vector<1x256xf32>, vector<1x256xf32>, vector<1x256xf32>, vector<1x256xf32>, vector<1x256xf32>, vector<1x256xf32>, vector<1x256xf32> -> vector<8x256xf32>
    %571 = arith.minimumf %558, %561 : vector<8x256xf32>
    %572 = arith.addf %571, %570 : vector<8x256xf32>
    %c13_i32 = arith.constant 13 : i32
    %573 = vector.broadcast %c13_i32 : i32 to vector<8x1xi32>
    %574 = arith.cmpi sle, %273, %573 : vector<8x1xi32>
    %c6_i32_93 = arith.constant 6 : i32
    %575 = vector.broadcast %c6_i32_93 : i32 to vector<8x1xi32>
    %576 = arith.cmpi sge, %273, %575 : vector<8x1xi32>
    %577 = arith.andi %574, %576 : vector<8x1xi1>
    %cst_94 = arith.constant 0x7F800000 : f32
    %578 = vector.shape_cast %577 : vector<8x1xi1> to vector<8x1xi1>
    %579 = vector.broadcast %578 : vector<8x1xi1> to vector<8x256xi1>
    %580 = vector.broadcast %cst_94 : f32 to vector<8x256xf32>
    %581 = arith.select %579, %572, %580 : vector<8x256xi1>, vector<8x256xf32>
    %582 = vector.extract_strided_slice %581 {offsets = [7, 0], sizes = [1, 256], strides = [1, 1]} : vector<8x256xf32> to vector<1x256xf32>
    %583 = vector.extract_strided_slice %581 {offsets = [0, 0], sizes = [7, 256], strides = [1, 1]} : vector<8x256xf32> to vector<7x256xf32>
    %584 = tpu.concatenate %582, %583 in 0 : vector<1x256xf32>, vector<7x256xf32> -> vector<8x256xf32>
    %585 = vector.extract_strided_slice %265 {offsets = [6, 0], sizes = [1, 256], strides = [1, 1]} : vector<8x256xf32> to vector<1x256xf32>
    %586 = vector.extract_strided_slice %266 {offsets = [5, 0], sizes = [1, 256], strides = [1, 1]} : vector<8x256xf32> to vector<1x256xf32>
    %587 = vector.extract_strided_slice %267 {offsets = [4, 0], sizes = [1, 256], strides = [1, 1]} : vector<8x256xf32> to vector<1x256xf32>
    %588 = vector.extract_strided_slice %268 {offsets = [3, 0], sizes = [1, 256], strides = [1, 1]} : vector<8x256xf32> to vector<1x256xf32>
    %589 = vector.extract_strided_slice %269 {offsets = [2, 0], sizes = [1, 256], strides = [1, 1]} : vector<8x256xf32> to vector<1x256xf32>
    %590 = vector.extract_strided_slice %270 {offsets = [1, 0], sizes = [1, 256], strides = [1, 1]} : vector<8x256xf32> to vector<1x256xf32>
    %591 = vector.extract_strided_slice %271 {offsets = [0, 0], sizes = [1, 256], strides = [1, 1]} : vector<8x256xf32> to vector<1x256xf32>
    %592 = vector.extract_strided_slice %272 {offsets = [7, 0], sizes = [1, 256], strides = [1, 1]} : vector<8x256xf32> to vector<1x256xf32>
    %593 = tpu.concatenate %585, %586, %587, %588, %589, %590, %591, %592 in 0 : vector<1x256xf32>, vector<1x256xf32>, vector<1x256xf32>, vector<1x256xf32>, vector<1x256xf32>, vector<1x256xf32>, vector<1x256xf32>, vector<1x256xf32> -> vector<8x256xf32>
    %594 = arith.minimumf %581, %584 : vector<8x256xf32>
    %595 = arith.addf %594, %593 : vector<8x256xf32>
    %c14_i32 = arith.constant 14 : i32
    %596 = vector.broadcast %c14_i32 : i32 to vector<8x1xi32>
    %597 = arith.cmpi sle, %273, %596 : vector<8x1xi32>
    %c7_i32_95 = arith.constant 7 : i32
    %598 = vector.broadcast %c7_i32_95 : i32 to vector<8x1xi32>
    %599 = arith.cmpi sge, %273, %598 : vector<8x1xi32>
    %600 = arith.andi %597, %599 : vector<8x1xi1>
    %cst_96 = arith.constant 0x7F800000 : f32
    %601 = vector.shape_cast %600 : vector<8x1xi1> to vector<8x1xi1>
    %602 = vector.broadcast %601 : vector<8x1xi1> to vector<8x256xi1>
    %603 = vector.broadcast %cst_96 : f32 to vector<8x256xf32>
    %604 = arith.select %602, %595, %603 : vector<8x256xi1>, vector<8x256xf32>
    %605 = vector.extract_strided_slice %604 {offsets = [7, 0], sizes = [1, 256], strides = [1, 1]} : vector<8x256xf32> to vector<1x256xf32>
    %606 = vector.extract_strided_slice %605 {offsets = [0, 0], sizes = [1, 128], strides = [1, 1]} : vector<1x256xf32> to vector<1x128xf32>
    %c0_97 = arith.constant 0 : index
    %c0_98 = arith.constant 0 : index
    %607 = vector.load %arg4[%c0_97, %c0_98] : memref<2x128xf32, #tpu.memory_space<vmem>>, vector<1x128xf32>
    tpu.vector_store %arg4[%c0_97, %c0_98], %606 {strides = array<i32>} : memref<2x128xf32, #tpu.memory_space<vmem>>, vector<1x128xf32>,
    %608 = vector.extract_strided_slice %605 {offsets = [0, 128], sizes = [1, 128], strides = [1, 1]} : vector<1x256xf32> to vector<1x128xf32>
    %c1 = arith.constant 1 : index
    %c0_99 = arith.constant 0 : index
    %609 = vector.load %arg4[%c1, %c0_99] : memref<2x128xf32, #tpu.memory_space<vmem>>, vector<1x128xf32>
    tpu.vector_store %arg4[%c1, %c0_99], %608 {strides = array<i32>} : memref<2x128xf32, #tpu.memory_space<vmem>>, vector<1x128xf32>,
    return
  }
  func.func @transform_0(%arg0: i32) -> (i32, i32, i32) {
    %c0_i32 = arith.constant 0 : i32
    %c0_i32_0 = arith.constant 0 : i32
    %c0_i32_1 = arith.constant 0 : i32
    return %c0_i32, %c0_i32_0, %arg0 : i32, i32, i32
  }
  func.func @transform_1(%arg0: i32) -> (i32, i32, i32) {
    %c0_i32 = arith.constant 0 : i32
    %c0_i32_0 = arith.constant 0 : i32
    %c0_i32_1 = arith.constant 0 : i32
    return %c0_i32, %c0_i32_0, %arg0 : i32, i32, i32
  }
  func.func @transform_2(%arg0: i32) -> (i32, i32, i32) {
    %c0_i32 = arith.constant 0 : i32
    %c0_i32_0 = arith.constant 0 : i32
    %c0_i32_1 = arith.constant 0 : i32
    return %c0_i32, %c0_i32_0, %arg0 : i32, i32, i32
  }
  func.func @transform_3(%arg0: i32) -> (i32, i32) {
    %c0_i32 = arith.constant 0 : i32
    %c0_i32_0 = arith.constant 0 : i32
    return %c0_i32, %arg0 : i32, i32
  }
}

</mosaic_0001>

<llo_original>
// kernel: triplet_loss_aligned_reid.2
$region0: #{triplet_loss_aligned_reid.2}
  #allocation0 [shape = 'u32[]', space=smem, size = 0x4, offset = 0x4, fixed_abs, tag = 'smem constant byte address 0x4 - core index']
  #allocation1 [shape = 'u32[144,128]{1,0:T(1,128)}', space=vmem, size = 0x12000, scoped, tag = 'internal scratch']
  %s0 = inlined_call_operand.vmem [shape: bf16[128,32], index: 0, kind: input, shape index: {}]
  %s1 = inlined_call_operand.vmem [shape: bf16[32,128], index: 1, kind: input, shape index: {}]
  %s2 = inlined_call_operand.vmem [shape: f32[128,1], index: 2, kind: input, shape index: {}]
  %s3 = inlined_call_operand.vmem [shape: f32[1,128], index: 3, kind: input, shape index: {}]
  %s4 = inlined_call_operand.vmem [shape: s32[128,1], index: 4, kind: input, shape index: {}]
  %s5 = inlined_call_operand.vmem [shape: s32[1,128], index: 5, kind: input, shape index: {}]
  %s6 = inlined_call_operand.vmem [shape: f32[128,1], index: 6, kind: output, shape index: {0}]
  %s7 = inlined_call_operand.vmem [shape: f32[128,1], index: 7, kind: output, shape index: {1}]
  %s8 = inlined_call_operand.vmem [shape: s32[128,1], index: 8, kind: output, shape index: {2}]
  %s9 = inlined_call_operand.vmem [shape: s32[128,1], index: 9, kind: output, shape index: {3}]
  %10 = xla_tuple %s6, %s7, %s8, %s9
  %s11 = sld [smem:[#allocation0]]
  $region62: #{triplet_loss_aligned_reid.2} parent=0
    _
  %s13 = ssub.s32 1, %s11
  %s14 = scalar_select 0, %s13, %s11
  // Predicated region
  $region2: #{triplet_loss_aligned_reid.2} parent=0 // pred_check
    _
  $region3: #{triplet_loss_aligned_reid.2} parent=0 // pred_check_branch
    %16 = sbr.rel (0) target = $region5
  $region4: #{triplet_loss_aligned_reid.2} parent=0 // pred_region
    _
  $region5: #{triplet_loss_aligned_reid.2} parent=0 // pred_fallthru
    _
  // Predicated region
  $region6: #{triplet_loss_aligned_reid.2} parent=0 // pred_check
    _
  $region7: #{triplet_loss_aligned_reid.2} parent=0 // pred_check_branch
    %18 = sbr.rel (0) target = $region9
  $region8: #{triplet_loss_aligned_reid.2} parent=0 // pred_region
    _
  $region9: #{triplet_loss_aligned_reid.2} parent=0 // pred_fallthru
    _
  // Predicated region
  $region10: #{triplet_loss_aligned_reid.2} parent=0 // pred_check
    _
  $region11: #{triplet_loss_aligned_reid.2} parent=0 // pred_check_branch
    %20 = sbr.rel (0) target = $region13
  $region12: #{triplet_loss_aligned_reid.2} parent=0 // pred_region
    _
  $region13: #{triplet_loss_aligned_reid.2} parent=0 // pred_fallthru
    _
  // Predicated region
  $region14: #{triplet_loss_aligned_reid.2} parent=0 // pred_check
    _
  $region15: #{triplet_loss_aligned_reid.2} parent=0 // pred_check_branch
    %22 = sbr.rel (0) target = $region17
  $region16: #{triplet_loss_aligned_reid.2} parent=0 // pred_region
    _
  $region17: #{triplet_loss_aligned_reid.2} parent=0 // pred_fallthru
    _
  // Predicated region
  $region18: #{triplet_loss_aligned_reid.2} parent=0 // pred_check
    _
  $region19: #{triplet_loss_aligned_reid.2} parent=0 // pred_check_branch
    %24 = sbr.rel (0) target = $region21
  $region20: #{triplet_loss_aligned_reid.2} parent=0 // pred_region
    _
  $region21: #{triplet_loss_aligned_reid.2} parent=0 // pred_fallthru
    _
  // Predicated region
  $region22: #{triplet_loss_aligned_reid.2} parent=0 // pred_check
    _
  $region23: #{triplet_loss_aligned_reid.2} parent=0 // pred_check_branch
    %26 = sbr.rel (0) target = $region25
  $region24: #{triplet_loss_aligned_reid.2} parent=0 // pred_region
    _
  $region25: #{triplet_loss_aligned_reid.2} parent=0 // pred_fallthru
    _
  %p28 = scmp.eq.s32.totalorder 0, 0
  // Predicated region
  $region26: #{triplet_loss_aligned_reid.2} parent=0 // pred_check
    %p29 = pneg %p28
  $region27: #{triplet_loss_aligned_reid.2} parent=0 // pred_check_branch
    %31 = sbr.rel (%p29) target = $region29
  $region28: #{triplet_loss_aligned_reid.2} parent=0 // pred_region
    %vm32 = vcmask 7168
    %33 = vst.msk [vmem:[%s6] sm:$0xff] %vm32, -inf
    %34 = vst.msk [vmem:[%s6 + $0x8] sm:$0xff] %vm32, -inf
    %35 = vst.msk [vmem:[%s6 + $0x10] sm:$0xff] %vm32, -inf
    %36 = vst.msk [vmem:[%s6 + $0x18] sm:$0xff] %vm32, -inf
    %37 = vst.msk [vmem:[%s6 + $0x20] sm:$0xff] %vm32, -inf
    %38 = vst.msk [vmem:[%s6 + $0x28] sm:$0xff] %vm32, -inf
    %39 = vst.msk [vmem:[%s6 + $0x30] sm:$0xff] %vm32, -inf
    %40 = vst.msk [vmem:[%s6 + $0x38] sm:$0xff] %vm32, -inf
    %41 = vst.msk [vmem:[%s6 + $0x40] sm:$0xff] %vm32, -inf
    %42 = vst.msk [vmem:[%s6 + $0x48] sm:$0xff] %vm32, -inf
    %43 = vst.msk [vmem:[%s6 + $0x50] sm:$0xff] %vm32, -inf
    %44 = vst.msk [vmem:[%s6 + $0x58] sm:$0xff] %vm32, -inf
    %45 = vst.msk [vmem:[%s6 + $0x60] sm:$0xff] %vm32, -inf
    %46 = vst.msk [vmem:[%s6 + $0x68] sm:$0xff] %vm32, -inf
    %47 = vst.msk [vmem:[%s6 + $0x70] sm:$0xff] %vm32, -inf
    %48 = vst.msk [vmem:[%s6 + $0x78] sm:$0xff] %vm32, -inf
    %49 = vst.msk [vmem:[%s7] sm:$0xff] %vm32, inf
    %50 = vst.msk [vmem:[%s7 + $0x8] sm:$0xff] %vm32, inf
    %51 = vst.msk [vmem:[%s7 + $0x10] sm:$0xff] %vm32, inf
    %52 = vst.msk [vmem:[%s7 + $0x18] sm:$0xff] %vm32, inf
    %53 = vst.msk [vmem:[%s7 + $0x20] sm:$0xff] %vm32, inf
    %54 = vst.msk [vmem:[%s7 + $0x28] sm:$0xff] %vm32, inf
    %55 = vst.msk [vmem:[%s7 + $0x30] sm:$0xff] %vm32, inf
    %56 = vst.msk [vmem:[%s7 + $0x38] sm:$0xff] %vm32, inf
    %57 = vst.msk [vmem:[%s7 + $0x40] sm:$0xff] %vm32, inf
    %58 = vst.msk [vmem:[%s7 + $0x48] sm:$0xff] %vm32, inf
    %59 = vst.msk [vmem:[%s7 + $0x50] sm:$0xff] %vm32, inf
    %60 = vst.msk [vmem:[%s7 + $0x58] sm:$0xff] %vm32, inf
    %61 = vst.msk [vmem:[%s7 + $0x60] sm:$0xff] %vm32, inf
    %62 = vst.msk [vmem:[%s7 + $0x68] sm:$0xff] %vm32, inf
    %63 = vst.msk [vmem:[%s7 + $0x70] sm:$0xff] %vm32, inf
    %64 = vst.msk [vmem:[%s7 + $0x78] sm:$0xff] %vm32, inf
    %65 = vst.msk [vmem:[%s8] sm:$0xff] %vm32, 0
    %66 = vst.msk [vmem:[%s8 + $0x8] sm:$0xff] %vm32, 0
    %67 = vst.msk [vmem:[%s8 + $0x10] sm:$0xff] %vm32, 0
    %68 = vst.msk [vmem:[%s8 + $0x18] sm:$0xff] %vm32, 0
    %69 = vst.msk [vmem:[%s8 + $0x20] sm:$0xff] %vm32, 0
    %70 = vst.msk [vmem:[%s8 + $0x28] sm:$0xff] %vm32, 0
    %71 = vst.msk [vmem:[%s8 + $0x30] sm:$0xff] %vm32, 0
    %72 = vst.msk [vmem:[%s8 + $0x38] sm:$0xff] %vm32, 0
    %73 = vst.msk [vmem:[%s8 + $0x40] sm:$0xff] %vm32, 0
    %74 = vst.msk [vmem:[%s8 + $0x48] sm:$0xff] %vm32, 0
    %75 = vst.msk [vmem:[%s8 + $0x50] sm:$0xff] %vm32, 0
    %76 = vst.msk [vmem:[%s8 + $0x58] sm:$0xff] %vm32, 0
    %77 = vst.msk [vmem:[%s8 + $0x60] sm:$0xff] %vm32, 0
    %78 = vst.msk [vmem:[%s8 + $0x68] sm:$0xff] %vm32, 0
    %79 = vst.msk [vmem:[%s8 + $0x70] sm:$0xff] %vm32, 0
    %80 = vst.msk [vmem:[%s8 + $0x78] sm:$0xff] %vm32, 0
    %81 = vst.msk [vmem:[%s9] sm:$0xff] %vm32, 0
    %82 = vst.msk [vmem:[%s9 + $0x8] sm:$0xff] %vm32, 0
    %83 = vst.msk [vmem:[%s9 + $0x10] sm:$0xff] %vm32, 0
    %84 = vst.msk [vmem:[%s9 + $0x18] sm:$0xff] %vm32, 0
    %85 = vst.msk [vmem:[%s9 + $0x20] sm:$0xff] %vm32, 0
    %86 = vst.msk [vmem:[%s9 + $0x28] sm:$0xff] %vm32, 0
    %87 = vst.msk [vmem:[%s9 + $0x30] sm:$0xff] %vm32, 0
    %88 = vst.msk [vmem:[%s9 + $0x38] sm:$0xff] %vm32, 0
    %89 = vst.msk [vmem:[%s9 + $0x40] sm:$0xff] %vm32, 0
    %90 = vst.msk [vmem:[%s9 + $0x48] sm:$0xff] %vm32, 0
    %91 = vst.msk [vmem:[%s9 + $0x50] sm:$0xff] %vm32, 0
    %92 = vst.msk [vmem:[%s9 + $0x58] sm:$0xff] %vm32, 0
    %93 = vst.msk [vmem:[%s9 + $0x60] sm:$0xff] %vm32, 0
    %94 = vst.msk [vmem:[%s9 + $0x68] sm:$0xff] %vm32, 0
    %95 = vst.msk [vmem:[%s9 + $0x70] sm:$0xff] %vm32, 0
    %96 = vst.msk [vmem:[%s9 + $0x78] sm:$0xff] %vm32, 0
  $region29: #{triplet_loss_aligned_reid.2} parent=0 // pred_fallthru
    _
  %v97 = vld [vmem:[%s0] sm:$0xf]
  %v98 = vld [vmem:[%s0 + $0x4] sm:$0xf]
  %v99 = vld [vmem:[%s0 + $0x8] sm:$0xf]
  %v100 = vld [vmem:[%s0 + $0xc] sm:$0xf]
  %v101 = vld [vmem:[%s0 + $0x10] sm:$0xf]
  %v102 = vld [vmem:[%s0 + $0x14] sm:$0xf]
  %v103 = vld [vmem:[%s0 + $0x18] sm:$0xf]
  %v104 = vld [vmem:[%s0 + $0x1c] sm:$0xf]
  %v105 = vld [vmem:[%s0 + $0x20] sm:$0xf]
  %v106 = vld [vmem:[%s0 + $0x24] sm:$0xf]
  %v107 = vld [vmem:[%s0 + $0x28] sm:$0xf]
  %v108 = vld [vmem:[%s0 + $0x2c] sm:$0xf]
  %v109 = vld [vmem:[%s0 + $0x30] sm:$0xf]
  %v110 = vld [vmem:[%s0 + $0x34] sm:$0xf]
  %v111 = vld [vmem:[%s0 + $0x38] sm:$0xf]
  %v112 = vld [vmem:[%s0 + $0x3c] sm:$0xf]
  %v113 = vld [vmem:[%s1] sm:$0xf]
  %v114 = vld [vmem:[%s1 + $0x4] sm:$0xf]
  %v115 = vld [vmem:[%s1 + $0x8] sm:$0xf]
  %v116 = vld [vmem:[%s1 + $0xc] sm:$0xf]
  %v133 = vunpack.c.l.b16 %v97
  %v134 = vunpack.c.l.b16 %v98
  %v135 = vunpack.c.l.b16 %v99
  %v136 = vunpack.c.l.b16 %v100
  %v137 = vunpack.c.l.b16 %v101
  %v138 = vunpack.c.l.b16 %v102
  %v139 = vunpack.c.l.b16 %v103
  %v140 = vunpack.c.l.b16 %v104
  %v141 = vunpack.c.l.b16 %v105
  %v142 = vunpack.c.l.b16 %v106
  %v143 = vunpack.c.l.b16 %v107
  %v144 = vunpack.c.l.b16 %v108
  %v145 = vunpack.c.l.b16 %v109
  %v146 = vunpack.c.l.b16 %v110
  %v147 = vunpack.c.l.b16 %v111
  %v148 = vunpack.c.l.b16 %v112
  %v149 = vpack.c.b16 %v134, %v133
  %v150 = vpack.c.b16 %v136, %v135
  %v151 = vpack.c.b16 %v138, %v137
  %v152 = vpack.c.b16 %v140, %v139
  %v153 = vpack.c.b16 %v142, %v141
  %v154 = vpack.c.b16 %v144, %v143
  %v155 = vpack.c.b16 %v146, %v145
  %v156 = vpack.c.b16 %v148, %v147
  %v161 = vunpack.c.l.b16 %v113
  %v162 = vunpack.c.l.b16 %v114
  %v163 = vunpack.c.l.b16 %v115
  %v164 = vunpack.c.l.b16 %v116
  %v165 = vpack.c.b16 %v162, %v161
  %v166 = vpack.c.b16 %v164, %v163
  %vm169 = vcmask 261120
  %v171 = vsel %vm169, %v149, 0
  %v174 = vsel %vm169, %v150, 0
  %v177 = vsel %vm169, %v151, 0
  %v180 = vsel %vm169, %v152, 0
  %v183 = vsel %vm169, %v153, 0
  %v186 = vsel %vm169, %v154, 0
  %v189 = vsel %vm169, %v155, 0
  %v192 = vsel %vm169, %v156, 0
  %194 = vmatprep.subr.bf16.mxu0 0
  %195 = vmatpush1.bf16.msra.mxu0 %v165
  %196 = vmatprep.subr.bf16.mxu0 0
  %197 = vmatpush1.bf16.msra.mxu0 %v166
  %198 = vmatprep.subr.bf16.mxu0 0
  %199 = vmatpush1.bf16.msra.mxu0 0
  %200 = vmatprep.subr.bf16.mxu0 0
  %201 = vmatpush1.bf16.msra.mxu0 0
  %202 = vmatprep.subr.bf16.mxu0 0
  %203 = vmatpush1.bf16.msra.mxu0 0
  %204 = vmatprep.subr.bf16.mxu0 0
  %205 = vmatpush1.bf16.msra.mxu0 0
  %206 = vmatprep.subr.bf16.mxu0 0
  %207 = vmatpush1.bf16.msra.mxu0 0
  %208 = vmatprep.subr.bf16.mxu0 0
  %209 = vmatpush1.bf16.msra.mxu0 0
  %210 = vmatprep.subr.bf16.mxu0 0
  %211 = vmatpush1.bf16.msra.mxu0 0
  %212 = vmatprep.subr.bf16.mxu0 0
  %213 = vmatpush1.bf16.msra.mxu0 0
  %214 = vmatprep.subr.bf16.mxu0 0
  %215 = vmatpush1.bf16.msra.mxu0 0
  %216 = vmatprep.subr.bf16.mxu0 0
  %217 = vmatpush1.bf16.msra.mxu0 0
  %218 = vmatprep.subr.bf16.mxu0 0
  %219 = vmatpush1.bf16.msra.mxu0 0
  %220 = vmatprep.subr.bf16.mxu0 0
  %221 = vmatpush1.bf16.msra.mxu0 0
  %222 = vmatprep.subr.bf16.mxu0 0
  %223 = vmatpush1.bf16.msra.mxu0 0
  %224 = vmatprep.subr.bf16.mxu0 0
  %225 = vmatpush1.bf16.msra.mxu0 0
  %226 = vmatprep.mubr.bf16.mxu0 0
  %227 = vmatmul.mubr.bf16.gmra.mrb[0].mxu0 %v171
  %v228 = vpop.f32.mrb[0].mxu0
  %v229 = vadd.f32 0.0, %v228
  %v230 = vpop.f32.mrb[0].mxu0
  %v231 = vpop.f32.mrb[0].mxu0
  %v232 = vadd.f32 0.0, %v231
  %v233 = vpop.f32.mrb[0].mxu0
  %234 = vmatprep.mubr.bf16.mxu0 0
  %235 = vmatmul.mubr.bf16.gmra.mrb[0].mxu0 %v174
  %v236 = vpop.f32.mrb[0].mxu0
  %v237 = vadd.f32 0.0, %v236
  %v238 = vpop.f32.mrb[0].mxu0
  %v239 = vpop.f32.mrb[0].mxu0
  %v240 = vadd.f32 0.0, %v239
  %v241 = vpop.f32.mrb[0].mxu0
  %242 = vmatprep.mubr.bf16.mxu0 0
  %243 = vmatmul.mubr.bf16.gmra.mrb[0].mxu0 %v177
  %v244 = vpop.f32.mrb[0].mxu0
  %v245 = vadd.f32 0.0, %v244
  %v246 = vpop.f32.mrb[0].mxu0
  %v247 = vpop.f32.mrb[0].mxu0
  %v248 = vadd.f32 0.0, %v247
  %v249 = vpop.f32.mrb[0].mxu0
  %250 = vmatprep.mubr.bf16.mxu0 0
  %251 = vmatmul.mubr.bf16.gmra.mrb[0].mxu0 %v180
  %v252 = vpop.f32.mrb[0].mxu0
  %v253 = vadd.f32 0.0, %v252
  %v254 = vpop.f32.mrb[0].mxu0
  %v255 = vpop.f32.mrb[0].mxu0
  %v256 = vadd.f32 0.0, %v255
  %v257 = vpop.f32.mrb[0].mxu0
  %258 = vmatprep.mubr.bf16.mxu0 0
  %259 = vmatmul.mubr.bf16.gmra.mrb[0].mxu0 %v183
  %v260 = vpop.f32.mrb[0].mxu0
  %v261 = vadd.f32 0.0, %v260
  %v262 = vpop.f32.mrb[0].mxu0
  %v263 = vpop.f32.mrb[0].mxu0
  %v264 = vadd.f32 0.0, %v263
  %v265 = vpop.f32.mrb[0].mxu0
  %266 = vmatprep.mubr.bf16.mxu0 0
  %267 = vmatmul.mubr.bf16.gmra.mrb[0].mxu0 %v186
  %v268 = vpop.f32.mrb[0].mxu0
  %v269 = vadd.f32 0.0, %v268
  %v270 = vpop.f32.mrb[0].mxu0
  %v271 = vpop.f32.mrb[0].mxu0
  %v272 = vadd.f32 0.0, %v271
  %v273 = vpop.f32.mrb[0].mxu0
  %274 = vmatprep.mubr.bf16.mxu0 0
  %275 = vmatmul.mubr.bf16.gmra.mrb[0].mxu0 %v189
  %v276 = vpop.f32.mrb[0].mxu0
  %v277 = vadd.f32 0.0, %v276
  %v278 = vpop.f32.mrb[0].mxu0
  %v279 = vpop.f32.mrb[0].mxu0
  %v280 = vadd.f32 0.0, %v279
  %v281 = vpop.f32.mrb[0].mxu0
  %282 = vmatprep.mubr.bf16.mxu0 0
  %283 = vmatmul.mubr.bf16.gmra.mrb[0].mxu0 %v192
  %v284 = vpop.f32.mrb[0].mxu0
  %v285 = vadd.f32 0.0, %v284
  %v286 = vpop.f32.mrb[0].mxu0
  %v287 = vpop.f32.mrb[0].mxu0
  %v288 = vadd.f32 0.0, %v287
  %v289 = vpop.f32.mrb[0].mxu0
  %290 = vdwg.mxu0
  %v291 = vld [vmem:[%s2] sm:$0xff]
  %v292 = vld [vmem:[%s2 + $0x8] sm:$0xff]
  %v293 = vld [vmem:[%s2 + $0x10] sm:$0xff]
  %v294 = vld [vmem:[%s2 + $0x18] sm:$0xff]
  %v295 = vld [vmem:[%s2 + $0x20] sm:$0xff]
  %v296 = vld [vmem:[%s2 + $0x28] sm:$0xff]
  %v297 = vld [vmem:[%s2 + $0x30] sm:$0xff]
  %v298 = vld [vmem:[%s2 + $0x38] sm:$0xff]
  %v299 = vld [vmem:[%s2 + $0x40] sm:$0xff]
  %v300 = vld [vmem:[%s2 + $0x48] sm:$0xff]
  %v301 = vld [vmem:[%s2 + $0x50] sm:$0xff]
  %v302 = vld [vmem:[%s2 + $0x58] sm:$0xff]
  %v303 = vld [vmem:[%s2 + $0x60] sm:$0xff]
  %v304 = vld [vmem:[%s2 + $0x68] sm:$0xff]
  %v305 = vld [vmem:[%s2 + $0x70] sm:$0xff]
  %v306 = vld [vmem:[%s2 + $0x78] sm:$0xff]
  %v307 = vld [vmem:[%s3] sm:$0x1]
  %309 = vset.pattern.permute.xlu0 0
  %310 = vperm.xlu0 %309, %v291
  %v311 = vpop.permute.xlu0 %310
  %314 = vset.pattern.permute.xlu0 0
  %315 = vperm.xlu0 %314, %v292
  %v316 = vpop.permute.xlu0 %315
  %319 = vset.pattern.permute.xlu0 0
  %320 = vperm.xlu0 %319, %v293
  %v321 = vpop.permute.xlu0 %320
  %324 = vset.pattern.permute.xlu0 0
  %325 = vperm.xlu0 %324, %v294
  %v326 = vpop.permute.xlu0 %325
  %329 = vset.pattern.permute.xlu0 0
  %330 = vperm.xlu0 %329, %v295
  %v331 = vpop.permute.xlu0 %330
  %334 = vset.pattern.permute.xlu0 0
  %335 = vperm.xlu0 %334, %v296
  %v336 = vpop.permute.xlu0 %335
  %339 = vset.pattern.permute.xlu0 0
  %340 = vperm.xlu0 %339, %v297
  %v341 = vpop.permute.xlu0 %340
  %344 = vset.pattern.permute.xlu0 0
  %345 = vperm.xlu0 %344, %v298
  %v346 = vpop.permute.xlu0 %345
  %349 = vset.pattern.permute.xlu0 0
  %350 = vperm.xlu0 %349, %v299
  %v351 = vpop.permute.xlu0 %350
  %354 = vset.pattern.permute.xlu0 0
  %355 = vperm.xlu0 %354, %v300
  %v356 = vpop.permute.xlu0 %355
  %359 = vset.pattern.permute.xlu0 0
  %360 = vperm.xlu0 %359, %v301
  %v361 = vpop.permute.xlu0 %360
  %364 = vset.pattern.permute.xlu0 0
  %365 = vperm.xlu0 %364, %v302
  %v366 = vpop.permute.xlu0 %365
  %369 = vset.pattern.permute.xlu0 0
  %370 = vperm.xlu0 %369, %v303
  %v371 = vpop.permute.xlu0 %370
  %374 = vset.pattern.permute.xlu0 0
  %375 = vperm.xlu0 %374, %v304
  %v376 = vpop.permute.xlu0 %375
  %379 = vset.pattern.permute.xlu0 0
  %380 = vperm.xlu0 %379, %v305
  %v381 = vpop.permute.xlu0 %380
  %384 = vset.pattern.permute.xlu0 0
  %385 = vperm.xlu0 %384, %v306
  %v386 = vpop.permute.xlu0 %385
  %v389 = vlaneseq
  %v390 = vshrl.u32 %v389, 7
  %v391 = vsub.s32 0, %v390
  %v392 = vrot.slane %v307, %v391
  %v394 = vadd.f32 %v311, %v392
  %v395 = vadd.f32 %v316, %v392
  %v396 = vadd.f32 %v321, %v392
  %v397 = vadd.f32 %v326, %v392
  %v398 = vadd.f32 %v331, %v392
  %v399 = vadd.f32 %v336, %v392
  %v400 = vadd.f32 %v341, %v392
  %v401 = vadd.f32 %v346, %v392
  %v402 = vadd.f32 %v351, %v392
  %v403 = vadd.f32 %v356, %v392
  %v404 = vadd.f32 %v361, %v392
  %v405 = vadd.f32 %v366, %v392
  %v406 = vadd.f32 %v371, %v392
  %v407 = vadd.f32 %v376, %v392
  %v408 = vadd.f32 %v381, %v392
  %v409 = vadd.f32 %v386, %v392
  %v410 = vmul.f32 %v229, 2.0
  %v411 = vmul.f32 %v232, 2.0
  %v412 = vmul.f32 %v237, 2.0
  %v413 = vmul.f32 %v240, 2.0
  %v414 = vmul.f32 %v245, 2.0
  %v415 = vmul.f32 %v248, 2.0
  %v416 = vmul.f32 %v253, 2.0
  %v417 = vmul.f32 %v256, 2.0
  %v418 = vmul.f32 %v261, 2.0
  %v419 = vmul.f32 %v264, 2.0
  %v420 = vmul.f32 %v269, 2.0
  %v421 = vmul.f32 %v272, 2.0
  %v422 = vmul.f32 %v277, 2.0
  %v423 = vmul.f32 %v280, 2.0
  %v424 = vmul.f32 %v285, 2.0
  %v425 = vmul.f32 %v288, 2.0
  %v426 = vsub.f32 %v394, %v410
  %v427 = vsub.f32 %v395, %v411
  %v428 = vsub.f32 %v396, %v412
  %v429 = vsub.f32 %v397, %v413
  %v430 = vsub.f32 %v398, %v414
  %v431 = vsub.f32 %v399, %v415
  %v432 = vsub.f32 %v400, %v416
  %v433 = vsub.f32 %v401, %v417
  %v434 = vsub.f32 %v402, %v418
  %v435 = vsub.f32 %v403, %v419
  %v436 = vsub.f32 %v404, %v420
  %v437 = vsub.f32 %v405, %v421
  %v438 = vsub.f32 %v406, %v422
  %v439 = vsub.f32 %v407, %v423
  %v440 = vsub.f32 %v408, %v424
  %v441 = vsub.f32 %v409, %v425
  %v442 = vmax.f32 %v426, 1e-12
  %v443 = vmax.f32 %v427, 1e-12
  %v444 = vmax.f32 %v428, 1e-12
  %v445 = vmax.f32 %v429, 1e-12
  %v446 = vmax.f32 %v430, 1e-12
  %v447 = vmax.f32 %v431, 1e-12
  %v448 = vmax.f32 %v432, 1e-12
  %v449 = vmax.f32 %v433, 1e-12
  %v450 = vmax.f32 %v434, 1e-12
  %v451 = vmax.f32 %v435, 1e-12
  %v452 = vmax.f32 %v436, 1e-12
  %v453 = vmax.f32 %v437, 1e-12
  %v454 = vmax.f32 %v438, 1e-12
  %v455 = vmax.f32 %v439, 1e-12
  %v456 = vmax.f32 %v440, 1e-12
  %v457 = vmax.f32 %v441, 1e-12
  %v458 = vrsqrt.pop %v442
  %v459 = vmul.f32 %v442, %v458
  %vm460 = vcmp.eq.f32.partialorder %v442, inf
  %v461 = vsel %vm460, %v442, %v459
  %vm462 = vcmp.eq.f32.partialorder %v442, 0.0
  %v463 = vand.u32 %v442, 2147483648
  %v464 = vsel %vm462, %v463, %v461
  %v465 = vrsqrt.pop %v443
  %v466 = vmul.f32 %v443, %v465
  %vm467 = vcmp.eq.f32.partialorder %v443, inf
  %v468 = vsel %vm467, %v443, %v466
  %vm469 = vcmp.eq.f32.partialorder %v443, 0.0
  %v470 = vand.u32 %v443, 2147483648
  %v471 = vsel %vm469, %v470, %v468
  %v472 = vrsqrt.pop %v444
  %v473 = vmul.f32 %v444, %v472
  %vm474 = vcmp.eq.f32.partialorder %v444, inf
  %v475 = vsel %vm474, %v444, %v473
  %vm476 = vcmp.eq.f32.partialorder %v444, 0.0
  %v477 = vand.u32 %v444, 2147483648
  %v478 = vsel %vm476, %v477, %v475
  %v479 = vrsqrt.pop %v445
  %v480 = vmul.f32 %v445, %v479
  %vm481 = vcmp.eq.f32.partialorder %v445, inf
  %v482 = vsel %vm481, %v445, %v480
  %vm483 = vcmp.eq.f32.partialorder %v445, 0.0
  %v484 = vand.u32 %v445, 2147483648
  %v485 = vsel %vm483, %v484, %v482
  %v486 = vrsqrt.pop %v446
  %v487 = vmul.f32 %v446, %v486
  %vm488 = vcmp.eq.f32.partialorder %v446, inf
  %v489 = vsel %vm488, %v446, %v487
  %vm490 = vcmp.eq.f32.partialorder %v446, 0.0
  %v491 = vand.u32 %v446, 2147483648
  %v492 = vsel %vm490, %v491, %v489
  %v493 = vrsqrt.pop %v447
  %v494 = vmul.f32 %v447, %v493
  %vm495 = vcmp.eq.f32.partialorder %v447, inf
  %v496 = vsel %vm495, %v447, %v494
  %vm497 = vcmp.eq.f32.partialorder %v447, 0.0
  %v498 = vand.u32 %v447, 2147483648
  %v499 = vsel %vm497, %v498, %v496
  %v500 = vrsqrt.pop %v448
  %v501 = vmul.f32 %v448, %v500
  %vm502 = vcmp.eq.f32.partialorder %v448, inf
  %v503 = vsel %vm502, %v448, %v501
  %vm504 = vcmp.eq.f32.partialorder %v448, 0.0
  %v505 = vand.u32 %v448, 2147483648
  %v506 = vsel %vm504, %v505, %v503
  %v507 = vrsqrt.pop %v449
  %v508 = vmul.f32 %v449, %v507
  %vm509 = vcmp.eq.f32.partialorder %v449, inf
  %v510 = vsel %vm509, %v449, %v508
  %vm511 = vcmp.eq.f32.partialorder %v449, 0.0
  %v512 = vand.u32 %v449, 2147483648
  %v513 = vsel %vm511, %v512, %v510
  %v514 = vrsqrt.pop %v450
  %v515 = vmul.f32 %v450, %v514
  %vm516 = vcmp.eq.f32.partialorder %v450, inf
  %v517 = vsel %vm516, %v450, %v515
  %vm518 = vcmp.eq.f32.partialorder %v450, 0.0
  %v519 = vand.u32 %v450, 2147483648
  %v520 = vsel %vm518, %v519, %v517
  %v521 = vrsqrt.pop %v451
  %v522 = vmul.f32 %v451, %v521
  %vm523 = vcmp.eq.f32.partialorder %v451, inf
  %v524 = vsel %vm523, %v451, %v522
  %vm525 = vcmp.eq.f32.partialorder %v451, 0.0
  %v526 = vand.u32 %v451, 2147483648
  %v527 = vsel %vm525, %v526, %v524
  %v528 = vrsqrt.pop %v452
  %v529 = vmul.f32 %v452, %v528
  %vm530 = vcmp.eq.f32.partialorder %v452, inf
  %v531 = vsel %vm530, %v452, %v529
  %vm532 = vcmp.eq.f32.partialorder %v452, 0.0
  %v533 = vand.u32 %v452, 2147483648
  %v534 = vsel %vm532, %v533, %v531
  %v535 = vrsqrt.pop %v453
  %v536 = vmul.f32 %v453, %v535
  %vm537 = vcmp.eq.f32.partialorder %v453, inf
  %v538 = vsel %vm537, %v453, %v536
  %vm539 = vcmp.eq.f32.partialorder %v453, 0.0
  %v540 = vand.u32 %v453, 2147483648
  %v541 = vsel %vm539, %v540, %v538
  %v542 = vrsqrt.pop %v454
  %v543 = vmul.f32 %v454, %v542
  %vm544 = vcmp.eq.f32.partialorder %v454, inf
  %v545 = vsel %vm544, %v454, %v543
  %vm546 = vcmp.eq.f32.partialorder %v454, 0.0
  %v547 = vand.u32 %v454, 2147483648
  %v548 = vsel %vm546, %v547, %v545
  %v549 = vrsqrt.pop %v455
  %v550 = vmul.f32 %v455, %v549
  %vm551 = vcmp.eq.f32.partialorder %v455, inf
  %v552 = vsel %vm551, %v455, %v550
  %vm553 = vcmp.eq.f32.partialorder %v455, 0.0
  %v554 = vand.u32 %v455, 2147483648
  %v555 = vsel %vm553, %v554, %v552
  %v556 = vrsqrt.pop %v456
  %v557 = vmul.f32 %v456, %v556
  %vm558 = vcmp.eq.f32.partialorder %v456, inf
  %v559 = vsel %vm558, %v456, %v557
  %vm560 = vcmp.eq.f32.partialorder %v456, 0.0
  %v561 = vand.u32 %v456, 2147483648
  %v562 = vsel %vm560, %v561, %v559
  %v563 = vrsqrt.pop %v457
  %v564 = vmul.f32 %v457, %v563
  %vm565 = vcmp.eq.f32.partialorder %v457, inf
  %v566 = vsel %vm565, %v457, %v564
  %vm567 = vcmp.eq.f32.partialorder %v457, 0.0
  %v568 = vand.u32 %v457, 2147483648
  %v569 = vsel %vm567, %v568, %v566
  %v570 = vld [vmem:[%s4] sm:$0xff]
  %v571 = vld [vmem:[%s4 + $0x8] sm:$0xff]
  %v572 = vld [vmem:[%s4 + $0x10] sm:$0xff]
  %v573 = vld [vmem:[%s4 + $0x18] sm:$0xff]
  %v574 = vld [vmem:[%s4 + $0x20] sm:$0xff]
  %v575 = vld [vmem:[%s4 + $0x28] sm:$0xff]
  %v576 = vld [vmem:[%s4 + $0x30] sm:$0xff]
  %v577 = vld [vmem:[%s4 + $0x38] sm:$0xff]
  %v578 = vld [vmem:[%s4 + $0x40] sm:$0xff]
  %v579 = vld [vmem:[%s4 + $0x48] sm:$0xff]
  %v580 = vld [vmem:[%s4 + $0x50] sm:$0xff]
  %v581 = vld [vmem:[%s4 + $0x58] sm:$0xff]
  %v582 = vld [vmem:[%s4 + $0x60] sm:$0xff]
  %v583 = vld [vmem:[%s4 + $0x68] sm:$0xff]
  %v584 = vld [vmem:[%s4 + $0x70] sm:$0xff]
  %v585 = vld [vmem:[%s4 + $0x78] sm:$0xff]
  %v586 = vld [vmem:[%s5] sm:$0x1]
  %587 = vset.pattern.permute.xlu0 0
  %588 = vperm.xlu0 %587, %v570
  %v589 = vpop.permute.xlu0 %588
  %590 = vset.pattern.permute.xlu0 0
  %591 = vperm.xlu0 %590, %v571
  %v592 = vpop.permute.xlu0 %591
  %593 = vset.pattern.permute.xlu0 0
  %594 = vperm.xlu0 %593, %v572
  %v595 = vpop.permute.xlu0 %594
  %596 = vset.pattern.permute.xlu0 0
  %597 = vperm.xlu0 %596, %v573
  %v598 = vpop.permute.xlu0 %597
  %599 = vset.pattern.permute.xlu0 0
  %600 = vperm.xlu0 %599, %v574
  %v601 = vpop.permute.xlu0 %600
  %602 = vset.pattern.permute.xlu0 0
  %603 = vperm.xlu0 %602, %v575
  %v604 = vpop.permute.xlu0 %603
  %605 = vset.pattern.permute.xlu0 0
  %606 = vperm.xlu0 %605, %v576
  %v607 = vpop.permute.xlu0 %606
  %608 = vset.pattern.permute.xlu0 0
  %609 = vperm.xlu0 %608, %v577
  %v610 = vpop.permute.xlu0 %609
  %611 = vset.pattern.permute.xlu0 0
  %612 = vperm.xlu0 %611, %v578
  %v613 = vpop.permute.xlu0 %612
  %614 = vset.pattern.permute.xlu0 0
  %615 = vperm.xlu0 %614, %v579
  %v616 = vpop.permute.xlu0 %615
  %617 = vset.pattern.permute.xlu0 0
  %618 = vperm.xlu0 %617, %v580
  %v619 = vpop.permute.xlu0 %618
  %620 = vset.pattern.permute.xlu0 0
  %621 = vperm.xlu0 %620, %v581
  %v622 = vpop.permute.xlu0 %621
  %623 = vset.pattern.permute.xlu0 0
  %624 = vperm.xlu0 %623, %v582
  %v625 = vpop.permute.xlu0 %624
  %626 = vset.pattern.permute.xlu0 0
  %627 = vperm.xlu0 %626, %v583
  %v628 = vpop.permute.xlu0 %627
  %629 = vset.pattern.permute.xlu0 0
  %630 = vperm.xlu0 %629, %v584
  %v631 = vpop.permute.xlu0 %630
  %632 = vset.pattern.permute.xlu0 0
  %633 = vperm.xlu0 %632, %v585
  %v634 = vpop.permute.xlu0 %633
  %v635 = vlaneseq
  %v636 = vshrl.u32 %v635, 7
  %v637 = vsub.s32 0, %v636
  %v638 = vrot.slane %v586, %v637
  %vm639 = vcmp.eq.s32.totalorder %v589, %v638
  %vm640 = vcmp.eq.s32.totalorder %v592, %v638
  %vm641 = vcmp.eq.s32.totalorder %v595, %v638
  %vm642 = vcmp.eq.s32.totalorder %v598, %v638
  %vm643 = vcmp.eq.s32.totalorder %v601, %v638
  %vm644 = vcmp.eq.s32.totalorder %v604, %v638
  %vm645 = vcmp.eq.s32.totalorder %v607, %v638
  %vm646 = vcmp.eq.s32.totalorder %v610, %v638
  %vm647 = vcmp.eq.s32.totalorder %v613, %v638
  %vm648 = vcmp.eq.s32.totalorder %v616, %v638
  %vm649 = vcmp.eq.s32.totalorder %v619, %v638
  %vm650 = vcmp.eq.s32.totalorder %v622, %v638
  %vm651 = vcmp.eq.s32.totalorder %v625, %v638
  %vm652 = vcmp.eq.s32.totalorder %v628, %v638
  %vm653 = vcmp.eq.s32.totalorder %v631, %v638
  %vm654 = vcmp.eq.s32.totalorder %v634, %v638
  %vm655 = vcmp.ne.s32.totalorder %v589, %v638
  %vm656 = vcmp.ne.s32.totalorder %v592, %v638
  %vm657 = vcmp.ne.s32.totalorder %v595, %v638
  %vm658 = vcmp.ne.s32.totalorder %v598, %v638
  %vm659 = vcmp.ne.s32.totalorder %v601, %v638
  %vm660 = vcmp.ne.s32.totalorder %v604, %v638
  %vm661 = vcmp.ne.s32.totalorder %v607, %v638
  %vm662 = vcmp.ne.s32.totalorder %v610, %v638
  %vm663 = vcmp.ne.s32.totalorder %v613, %v638
  %vm664 = vcmp.ne.s32.totalorder %v616, %v638
  %vm665 = vcmp.ne.s32.totalorder %v619, %v638
  %vm666 = vcmp.ne.s32.totalorder %v622, %v638
  %vm667 = vcmp.ne.s32.totalorder %v625, %v638
  %vm668 = vcmp.ne.s32.totalorder %v628, %v638
  %vm669 = vcmp.ne.s32.totalorder %v631, %v638
  %vm670 = vcmp.ne.s32.totalorder %v634, %v638
  %vm671 = vcmp.ge.s32.totalorder %v586, 0
  %v672 = vsel %vm671, 1, 0
  %v673 = vlaneseq
  %v674 = vshrl.u32 %v673, 7
  %v675 = vsub.s32 0, %v674
  %v676 = vrot.slane %v672, %v675
  %vm677 = vcmp.eq.s32.totalorder %v676, 1
  %vm678 = vmand %vm655, %vm677
  %vm679 = vmand %vm656, %vm677
  %vm680 = vmand %vm657, %vm677
  %vm681 = vmand %vm658, %vm677
  %vm682 = vmand %vm659, %vm677
  %vm683 = vmand %vm660, %vm677
  %vm684 = vmand %vm661, %vm677
  %vm685 = vmand %vm662, %vm677
  %vm686 = vmand %vm663, %vm677
  %vm687 = vmand %vm664, %vm677
  %vm688 = vmand %vm665, %vm677
  %vm689 = vmand %vm666, %vm677
  %vm690 = vmand %vm667, %vm677
  %vm691 = vmand %vm668, %vm677
  %vm692 = vmand %vm669, %vm677
  %vm693 = vmand %vm670, %vm677
  %v694 = vsel %vm639, %v464, -inf
  %v695 = vsel %vm640, %v471, -inf
  %v696 = vsel %vm641, %v478, -inf
  %v697 = vsel %vm642, %v485, -inf
  %v698 = vsel %vm643, %v492, -inf
  %v699 = vsel %vm644, %v499, -inf
  %v700 = vsel %vm645, %v506, -inf
  %v701 = vsel %vm646, %v513, -inf
  %v702 = vsel %vm647, %v520, -inf
  %v703 = vsel %vm648, %v527, -inf
  %v704 = vsel %vm649, %v534, -inf
  %v705 = vsel %vm650, %v541, -inf
  %v706 = vsel %vm651, %v548, -inf
  %v707 = vsel %vm652, %v555, -inf
  %v708 = vsel %vm653, %v562, -inf
  %v709 = vsel %vm654, %v569, -inf
  %v710 = vsel %vm678, %v464, inf
  %v711 = vsel %vm679, %v471, inf
  %v712 = vsel %vm680, %v478, inf
  %v713 = vsel %vm681, %v485, inf
  %v714 = vsel %vm682, %v492, inf
  %v715 = vsel %vm683, %v499, inf
  %v716 = vsel %vm684, %v506, inf
  %v717 = vsel %vm685, %v513, inf
  %v718 = vsel %vm686, %v520, inf
  %v719 = vsel %vm687, %v527, inf
  %v720 = vsel %vm688, %v534, inf
  %v721 = vsel %vm689, %v541, inf
  %v722 = vsel %vm690, %v548, inf
  %v723 = vsel %vm691, %v555, inf
  %v724 = vsel %vm692, %v562, inf
  %v725 = vsel %vm693, %v569, inf
  %726 = vmax.xlane.f32.xlu0 %v694
  %v727 = vpop.xlane.xlu0 %726
  %728 = vmax.xlane.f32.xlu0 %v695
  %v729 = vpop.xlane.xlu0 %728
  %730 = vmax.xlane.f32.xlu0 %v696
  %v731 = vpop.xlane.xlu0 %730
  %732 = vmax.xlane.f32.xlu0 %v697
  %v733 = vpop.xlane.xlu0 %732
  %734 = vmax.xlane.f32.xlu0 %v698
  %v735 = vpop.xlane.xlu0 %734
  %736 = vmax.xlane.f32.xlu0 %v699
  %v737 = vpop.xlane.xlu0 %736
  %738 = vmax.xlane.f32.xlu0 %v700
  %v739 = vpop.xlane.xlu0 %738
  %740 = vmax.xlane.f32.xlu0 %v701
  %v741 = vpop.xlane.xlu0 %740
  %742 = vmax.xlane.f32.xlu0 %v702
  %v743 = vpop.xlane.xlu0 %742
  %744 = vmax.xlane.f32.xlu0 %v703
  %v745 = vpop.xlane.xlu0 %744
  %746 = vmax.xlane.f32.xlu0 %v704
  %v747 = vpop.xlane.xlu0 %746
  %748 = vmax.xlane.f32.xlu0 %v705
  %v749 = vpop.xlane.xlu0 %748
  %750 = vmax.xlane.f32.xlu0 %v706
  %v751 = vpop.xlane.xlu0 %750
  %752 = vmax.xlane.f32.xlu0 %v707
  %v753 = vpop.xlane.xlu0 %752
  %754 = vmax.xlane.f32.xlu0 %v708
  %v755 = vpop.xlane.xlu0 %754
  %756 = vmax.xlane.f32.xlu0 %v709
  %v757 = vpop.xlane.xlu0 %756
  %758 = vmin.xlane.f32.xlu0 %v710
  %v759 = vpop.xlane.xlu0 %758
  %760 = vmin.xlane.f32.xlu0 %v711
  %v761 = vpop.xlane.xlu0 %760
  %762 = vmin.xlane.f32.xlu0 %v712
  %v763 = vpop.xlane.xlu0 %762
  %764 = vmin.xlane.f32.xlu0 %v713
  %v765 = vpop.xlane.xlu0 %764
  %766 = vmin.xlane.f32.xlu0 %v714
  %v767 = vpop.xlane.xlu0 %766
  %768 = vmin.xlane.f32.xlu0 %v715
  %v769 = vpop.xlane.xlu0 %768
  %770 = vmin.xlane.f32.xlu0 %v716
  %v771 = vpop.xlane.xlu0 %770
  %772 = vmin.xlane.f32.xlu0 %v717
  %v773 = vpop.xlane.xlu0 %772
  %774 = vmin.xlane.f32.xlu0 %v718
  %v775 = vpop.xlane.xlu0 %774
  %776 = vmin.xlane.f32.xlu0 %v719
  %v777 = vpop.xlane.xlu0 %776
  %778 = vmin.xlane.f32.xlu0 %v720
  %v779 = vpop.xlane.xlu0 %778
  %780 = vmin.xlane.f32.xlu0 %v721
  %v781 = vpop.xlane.xlu0 %780
  %782 = vmin.xlane.f32.xlu0 %v722
  %v783 = vpop.xlane.xlu0 %782
  %784 = vmin.xlane.f32.xlu0 %v723
  %v785 = vpop.xlane.xlu0 %784
  %786 = vmin.xlane.f32.xlu0 %v724
  %v787 = vpop.xlane.xlu0 %786
  %788 = vmin.xlane.f32.xlu0 %v725
  %v789 = vpop.xlane.xlu0 %788
  %v790 = vlaneseq
  %v791 = vand.u32 %v790, 127
  %s792 = smul.u32 0, 128
  %v793 = vstv %s792
  %v794 = vadd.s32 %v791, %v793
  %vm795 = vcmp.eq.f32.partialorder %v694, %v727
  %vm796 = vcmp.eq.f32.partialorder %v695, %v729
  %vm797 = vcmp.eq.f32.partialorder %v696, %v731
  %vm798 = vcmp.eq.f32.partialorder %v697, %v733
  %vm799 = vcmp.eq.f32.partialorder %v698, %v735
  %vm800 = vcmp.eq.f32.partialorder %v699, %v737
  %vm801 = vcmp.eq.f32.partialorder %v700, %v739
  %vm802 = vcmp.eq.f32.partialorder %v701, %v741
  %vm803 = vcmp.eq.f32.partialorder %v702, %v743
  %vm804 = vcmp.eq.f32.partialorder %v703, %v745
  %vm805 = vcmp.eq.f32.partialorder %v704, %v747
  %vm806 = vcmp.eq.f32.partialorder %v705, %v749
  %vm807 = vcmp.eq.f32.partialorder %v706, %v751
  %vm808 = vcmp.eq.f32.partialorder %v707, %v753
  %vm809 = vcmp.eq.f32.partialorder %v708, %v755
  %vm810 = vcmp.eq.f32.partialorder %v709, %v757
  %v811 = vsel %vm795, %v794, 1073741824
  %v812 = vsel %vm796, %v794, 1073741824
  %v813 = vsel %vm797, %v794, 1073741824
  %v814 = vsel %vm798, %v794, 1073741824
  %v815 = vsel %vm799, %v794, 1073741824
  %v816 = vsel %vm800, %v794, 1073741824
  %v817 = vsel %vm801, %v794, 1073741824
  %v818 = vsel %vm802, %v794, 1073741824
  %v819 = vsel %vm803, %v794, 1073741824
  %v820 = vsel %vm804, %v794, 1073741824
  %v821 = vsel %vm805, %v794, 1073741824
  %v822 = vsel %vm806, %v794, 1073741824
  %v823 = vsel %vm807, %v794, 1073741824
  %v824 = vsel %vm808, %v794, 1073741824
  %v825 = vsel %vm809, %v794, 1073741824
  %v826 = vsel %vm810, %v794, 1073741824
  %v827 = vand.u32 %v811, 65535
  %v828 = vshra.s32 %v811, 16
  %v829 = vcvt.s32.f32 %v827
  %v830 = vcvt.s32.f32 %v828
  %831 = vmin.xlane.f32.xlu0 %v830
  %v832 = vpop.xlane.xlu0 %831
  %vm833 = vcmp.eq.f32.partialorder %v830, %v832
  %v834 = vsel %vm833, %v829, inf
  %835 = vmin.xlane.f32.xlu0 %v834
  %v836 = vpop.xlane.xlu0 %835
  %v837 = vcvt.f32.s32 %v836
  %v838 = vcvt.f32.s32 %v832
  %v839 = vshll.u32 %v838, 16
  %v840 = vadd.s32 %v839, %v837
  %v841 = vand.u32 %v812, 65535
  %v842 = vshra.s32 %v812, 16
  %v843 = vcvt.s32.f32 %v841
  %v844 = vcvt.s32.f32 %v842
  %845 = vmin.xlane.f32.xlu0 %v844
  %v846 = vpop.xlane.xlu0 %845
  %vm847 = vcmp.eq.f32.partialorder %v844, %v846
  %v848 = vsel %vm847, %v843, inf
  %849 = vmin.xlane.f32.xlu0 %v848
  %v850 = vpop.xlane.xlu0 %849
  %v851 = vcvt.f32.s32 %v850
  %v852 = vcvt.f32.s32 %v846
  %v853 = vshll.u32 %v852, 16
  %v854 = vadd.s32 %v853, %v851
  %v855 = vand.u32 %v813, 65535
  %v856 = vshra.s32 %v813, 16
  %v857 = vcvt.s32.f32 %v855
  %v858 = vcvt.s32.f32 %v856
  %859 = vmin.xlane.f32.xlu0 %v858
  %v860 = vpop.xlane.xlu0 %859
  %vm861 = vcmp.eq.f32.partialorder %v858, %v860
  %v862 = vsel %vm861, %v857, inf
  %863 = vmin.xlane.f32.xlu0 %v862
  %v864 = vpop.xlane.xlu0 %863
  %v865 = vcvt.f32.s32 %v864
  %v866 = vcvt.f32.s32 %v860
  %v867 = vshll.u32 %v866, 16
  %v868 = vadd.s32 %v867, %v865
  %v869 = vand.u32 %v814, 65535
  %v870 = vshra.s32 %v814, 16
  %v871 = vcvt.s32.f32 %v869
  %v872 = vcvt.s32.f32 %v870
  %873 = vmin.xlane.f32.xlu0 %v872
  %v874 = vpop.xlane.xlu0 %873
  %vm875 = vcmp.eq.f32.partialorder %v872, %v874
  %v876 = vsel %vm875, %v871, inf
  %877 = vmin.xlane.f32.xlu0 %v876
  %v878 = vpop.xlane.xlu0 %877
  %v879 = vcvt.f32.s32 %v878
  %v880 = vcvt.f32.s32 %v874
  %v881 = vshll.u32 %v880, 16
  %v882 = vadd.s32 %v881, %v879
  %v883 = vand.u32 %v815, 65535
  %v884 = vshra.s32 %v815, 16
  %v885 = vcvt.s32.f32 %v883
  %v886 = vcvt.s32.f32 %v884
  %887 = vmin.xlane.f32.xlu0 %v886
  %v888 = vpop.xlane.xlu0 %887
  %vm889 = vcmp.eq.f32.partialorder %v886, %v888
  %v890 = vsel %vm889, %v885, inf
  %891 = vmin.xlane.f32.xlu0 %v890
  %v892 = vpop.xlane.xlu0 %891
  %v893 = vcvt.f32.s32 %v892
  %v894 = vcvt.f32.s32 %v888
  %v895 = vshll.u32 %v894, 16
  %v896 = vadd.s32 %v895, %v893
  %v897 = vand.u32 %v816, 65535
  %v898 = vshra.s32 %v816, 16
  %v899 = vcvt.s32.f32 %v897
  %v900 = vcvt.s32.f32 %v898
  %901 = vmin.xlane.f32.xlu0 %v900
  %v902 = vpop.xlane.xlu0 %901
  %vm903 = vcmp.eq.f32.partialorder %v900, %v902
  %v904 = vsel %vm903, %v899, inf
  %905 = vmin.xlane.f32.xlu0 %v904
  %v906 = vpop.xlane.xlu0 %905
  %v907 = vcvt.f32.s32 %v906
  %v908 = vcvt.f32.s32 %v902
  %v909 = vshll.u32 %v908, 16
  %v910 = vadd.s32 %v909, %v907
  %v911 = vand.u32 %v817, 65535
  %v912 = vshra.s32 %v817, 16
  %v913 = vcvt.s32.f32 %v911
  %v914 = vcvt.s32.f32 %v912
  %915 = vmin.xlane.f32.xlu0 %v914
  %v916 = vpop.xlane.xlu0 %915
  %vm917 = vcmp.eq.f32.partialorder %v914, %v916
  %v918 = vsel %vm917, %v913, inf
  %919 = vmin.xlane.f32.xlu0 %v918
  %v920 = vpop.xlane.xlu0 %919
  %v921 = vcvt.f32.s32 %v920
  %v922 = vcvt.f32.s32 %v916
  %v923 = vshll.u32 %v922, 16
  %v924 = vadd.s32 %v923, %v921
  %v925 = vand.u32 %v818, 65535
  %v926 = vshra.s32 %v818, 16
  %v927 = vcvt.s32.f32 %v925
  %v928 = vcvt.s32.f32 %v926
  %929 = vmin.xlane.f32.xlu0 %v928
  %v930 = vpop.xlane.xlu0 %929
  %vm931 = vcmp.eq.f32.partialorder %v928, %v930
  %v932 = vsel %vm931, %v927, inf
  %933 = vmin.xlane.f32.xlu0 %v932
  %v934 = vpop.xlane.xlu0 %933
  %v935 = vcvt.f32.s32 %v934
  %v936 = vcvt.f32.s32 %v930
  %v937 = vshll.u32 %v936, 16
  %v938 = vadd.s32 %v937, %v935
  %v939 = vand.u32 %v819, 65535
  %v940 = vshra.s32 %v819, 16
  %v941 = vcvt.s32.f32 %v939
  %v942 = vcvt.s32.f32 %v940
  %943 = vmin.xlane.f32.xlu0 %v942
  %v944 = vpop.xlane.xlu0 %943
  %vm945 = vcmp.eq.f32.partialorder %v942, %v944
  %v946 = vsel %vm945, %v941, inf
  %947 = vmin.xlane.f32.xlu0 %v946
  %v948 = vpop.xlane.xlu0 %947
  %v949 = vcvt.f32.s32 %v948
  %v950 = vcvt.f32.s32 %v944
  %v951 = vshll.u32 %v950, 16
  %v952 = vadd.s32 %v951, %v949
  %v953 = vand.u32 %v820, 65535
  %v954 = vshra.s32 %v820, 16
  %v955 = vcvt.s32.f32 %v953
  %v956 = vcvt.s32.f32 %v954
  %957 = vmin.xlane.f32.xlu0 %v956
  %v958 = vpop.xlane.xlu0 %957
  %vm959 = vcmp.eq.f32.partialorder %v956, %v958
  %v960 = vsel %vm959, %v955, inf
  %961 = vmin.xlane.f32.xlu0 %v960
  %v962 = vpop.xlane.xlu0 %961
  %v963 = vcvt.f32.s32 %v962
  %v964 = vcvt.f32.s32 %v958
  %v965 = vshll.u32 %v964, 16
  %v966 = vadd.s32 %v965, %v963
  %v967 = vand.u32 %v821, 65535
  %v968 = vshra.s32 %v821, 16
  %v969 = vcvt.s32.f32 %v967
  %v970 = vcvt.s32.f32 %v968
  %971 = vmin.xlane.f32.xlu0 %v970
  %v972 = vpop.xlane.xlu0 %971
  %vm973 = vcmp.eq.f32.partialorder %v970, %v972
  %v974 = vsel %vm973, %v969, inf
  %975 = vmin.xlane.f32.xlu0 %v974
  %v976 = vpop.xlane.xlu0 %975
  %v977 = vcvt.f32.s32 %v976
  %v978 = vcvt.f32.s32 %v972
  %v979 = vshll.u32 %v978, 16
  %v980 = vadd.s32 %v979, %v977
  %v981 = vand.u32 %v822, 65535
  %v982 = vshra.s32 %v822, 16
  %v983 = vcvt.s32.f32 %v981
  %v984 = vcvt.s32.f32 %v982
  %985 = vmin.xlane.f32.xlu0 %v984
  %v986 = vpop.xlane.xlu0 %985
  %vm987 = vcmp.eq.f32.partialorder %v984, %v986
  %v988 = vsel %vm987, %v983, inf
  %989 = vmin.xlane.f32.xlu0 %v988
  %v990 = vpop.xlane.xlu0 %989
  %v991 = vcvt.f32.s32 %v990
  %v992 = vcvt.f32.s32 %v986
  %v993 = vshll.u32 %v992, 16
  %v994 = vadd.s32 %v993, %v991
  %v995 = vand.u32 %v823, 65535
  %v996 = vshra.s32 %v823, 16
  %v997 = vcvt.s32.f32 %v995
  %v998 = vcvt.s32.f32 %v996
  %999 = vmin.xlane.f32.xlu0 %v998
  %v1000 = vpop.xlane.xlu0 %999
  %vm1001 = vcmp.eq.f32.partialorder %v998, %v1000
  %v1002 = vsel %vm1001, %v997, inf
  %1003 = vmin.xlane.f32.xlu0 %v1002
  %v1004 = vpop.xlane.xlu0 %1003
  %v1005 = vcvt.f32.s32 %v1004
  %v1006 = vcvt.f32.s32 %v1000
  %v1007 = vshll.u32 %v1006, 16
  %v1008 = vadd.s32 %v1007, %v1005
  %v1009 = vand.u32 %v824, 65535
  %v1010 = vshra.s32 %v824, 16
  %v1011 = vcvt.s32.f32 %v1009
  %v1012 = vcvt.s32.f32 %v1010
  %1013 = vmin.xlane.f32.xlu0 %v1012
  %v1014 = vpop.xlane.xlu0 %1013
  %vm1015 = vcmp.eq.f32.partialorder %v1012, %v1014
  %v1016 = vsel %vm1015, %v1011, inf
  %1017 = vmin.xlane.f32.xlu0 %v1016
  %v1018 = vpop.xlane.xlu0 %1017
  %v1019 = vcvt.f32.s32 %v1018
  %v1020 = vcvt.f32.s32 %v1014
  %v1021 = vshll.u32 %v1020, 16
  %v1022 = vadd.s32 %v1021, %v1019
  %v1023 = vand.u32 %v825, 65535
  %v1024 = vshra.s32 %v825, 16
  %v1025 = vcvt.s32.f32 %v1023
  %v1026 = vcvt.s32.f32 %v1024
  %1027 = vmin.xlane.f32.xlu0 %v1026
  %v1028 = vpop.xlane.xlu0 %1027
  %vm1029 = vcmp.eq.f32.partialorder %v1026, %v1028
  %v1030 = vsel %vm1029, %v1025, inf
  %1031 = vmin.xlane.f32.xlu0 %v1030
  %v1032 = vpop.xlane.xlu0 %1031
  %v1033 = vcvt.f32.s32 %v1032
  %v1034 = vcvt.f32.s32 %v1028
  %v1035 = vshll.u32 %v1034, 16
  %v1036 = vadd.s32 %v1035, %v1033
  %v1037 = vand.u32 %v826, 65535
  %v1038 = vshra.s32 %v826, 16
  %v1039 = vcvt.s32.f32 %v1037
  %v1040 = vcvt.s32.f32 %v1038
  %1041 = vmin.xlane.f32.xlu0 %v1040
  %v1042 = vpop.xlane.xlu0 %1041
  %vm1043 = vcmp.eq.f32.partialorder %v1040, %v1042
  %v1044 = vsel %vm1043, %v1039, inf
  %1045 = vmin.xlane.f32.xlu0 %v1044
  %v1046 = vpop.xlane.xlu0 %1045
  %v1047 = vcvt.f32.s32 %v1046
  %v1048 = vcvt.f32.s32 %v1042
  %v1049 = vshll.u32 %v1048, 16
  %v1050 = vadd.s32 %v1049, %v1047
  %vm1051 = vcmp.eq.f32.partialorder %v710, %v759
  %vm1052 = vcmp.eq.f32.partialorder %v711, %v761
  %vm1053 = vcmp.eq.f32.partialorder %v712, %v763
  %vm1054 = vcmp.eq.f32.partialorder %v713, %v765
  %vm1055 = vcmp.eq.f32.partialorder %v714, %v767
  %vm1056 = vcmp.eq.f32.partialorder %v715, %v769
  %vm1057 = vcmp.eq.f32.partialorder %v716, %v771
  %vm1058 = vcmp.eq.f32.partialorder %v717, %v773
  %vm1059 = vcmp.eq.f32.partialorder %v718, %v775
  %vm1060 = vcmp.eq.f32.partialorder %v719, %v777
  %vm1061 = vcmp.eq.f32.partialorder %v720, %v779
  %vm1062 = vcmp.eq.f32.partialorder %v721, %v781
  %vm1063 = vcmp.eq.f32.partialorder %v722, %v783
  %vm1064 = vcmp.eq.f32.partialorder %v723, %v785
  %vm1065 = vcmp.eq.f32.partialorder %v724, %v787
  %vm1066 = vcmp.eq.f32.partialorder %v725, %v789
  %v1067 = vsel %vm1051, %v794, 1073741824
  %v1068 = vsel %vm1052, %v794, 1073741824
  %v1069 = vsel %vm1053, %v794, 1073741824
  %v1070 = vsel %vm1054, %v794, 1073741824
  %v1071 = vsel %vm1055, %v794, 1073741824
  %v1072 = vsel %vm1056, %v794, 1073741824
  %v1073 = vsel %vm1057, %v794, 1073741824
  %v1074 = vsel %vm1058, %v794, 1073741824
  %v1075 = vsel %vm1059, %v794, 1073741824
  %v1076 = vsel %vm1060, %v794, 1073741824
  %v1077 = vsel %vm1061, %v794, 1073741824
  %v1078 = vsel %vm1062, %v794, 1073741824
  %v1079 = vsel %vm1063, %v794, 1073741824
  %v1080 = vsel %vm1064, %v794, 1073741824
  %v1081 = vsel %vm1065, %v794, 1073741824
  %v1082 = vsel %vm1066, %v794, 1073741824
  %v1083 = vand.u32 %v1067, 65535
  %v1084 = vshra.s32 %v1067, 16
  %v1085 = vcvt.s32.f32 %v1083
  %v1086 = vcvt.s32.f32 %v1084
  %1087 = vmin.xlane.f32.xlu0 %v1086
  %v1088 = vpop.xlane.xlu0 %1087
  %vm1089 = vcmp.eq.f32.partialorder %v1086, %v1088
  %v1090 = vsel %vm1089, %v1085, inf
  %1091 = vmin.xlane.f32.xlu0 %v1090
  %v1092 = vpop.xlane.xlu0 %1091
  %v1093 = vcvt.f32.s32 %v1092
  %v1094 = vcvt.f32.s32 %v1088
  %v1095 = vshll.u32 %v1094, 16
  %v1096 = vadd.s32 %v1095, %v1093
  %v1097 = vand.u32 %v1068, 65535
  %v1098 = vshra.s32 %v1068, 16
  %v1099 = vcvt.s32.f32 %v1097
  %v1100 = vcvt.s32.f32 %v1098
  %1101 = vmin.xlane.f32.xlu0 %v1100
  %v1102 = vpop.xlane.xlu0 %1101
  %vm1103 = vcmp.eq.f32.partialorder %v1100, %v1102
  %v1104 = vsel %vm1103, %v1099, inf
  %1105 = vmin.xlane.f32.xlu0 %v1104
  %v1106 = vpop.xlane.xlu0 %1105
  %v1107 = vcvt.f32.s32 %v1106
  %v1108 = vcvt.f32.s32 %v1102
  %v1109 = vshll.u32 %v1108, 16
  %v1110 = vadd.s32 %v1109, %v1107
  %v1111 = vand.u32 %v1069, 65535
  %v1112 = vshra.s32 %v1069, 16
  %v1113 = vcvt.s32.f32 %v1111
  %v1114 = vcvt.s32.f32 %v1112
  %1115 = vmin.xlane.f32.xlu0 %v1114
  %v1116 = vpop.xlane.xlu0 %1115
  %vm1117 = vcmp.eq.f32.partialorder %v1114, %v1116
  %v1118 = vsel %vm1117, %v1113, inf
  %1119 = vmin.xlane.f32.xlu0 %v1118
  %v1120 = vpop.xlane.xlu0 %1119
  %v1121 = vcvt.f32.s32 %v1120
  %v1122 = vcvt.f32.s32 %v1116
  %v1123 = vshll.u32 %v1122, 16
  %v1124 = vadd.s32 %v1123, %v1121
  %v1125 = vand.u32 %v1070, 65535
  %v1126 = vshra.s32 %v1070, 16
  %v1127 = vcvt.s32.f32 %v1125
  %v1128 = vcvt.s32.f32 %v1126
  %1129 = vmin.xlane.f32.xlu0 %v1128
  %v1130 = vpop.xlane.xlu0 %1129
  %vm1131 = vcmp.eq.f32.partialorder %v1128, %v1130
  %v1132 = vsel %vm1131, %v1127, inf
  %1133 = vmin.xlane.f32.xlu0 %v1132
  %v1134 = vpop.xlane.xlu0 %1133
  %v1135 = vcvt.f32.s32 %v1134
  %v1136 = vcvt.f32.s32 %v1130
  %v1137 = vshll.u32 %v1136, 16
  %v1138 = vadd.s32 %v1137, %v1135
  %v1139 = vand.u32 %v1071, 65535
  %v1140 = vshra.s32 %v1071, 16
  %v1141 = vcvt.s32.f32 %v1139
  %v1142 = vcvt.s32.f32 %v1140
  %1143 = vmin.xlane.f32.xlu0 %v1142
  %v1144 = vpop.xlane.xlu0 %1143
  %vm1145 = vcmp.eq.f32.partialorder %v1142, %v1144
  %v1146 = vsel %vm1145, %v1141, inf
  %1147 = vmin.xlane.f32.xlu0 %v1146
  %v1148 = vpop.xlane.xlu0 %1147
  %v1149 = vcvt.f32.s32 %v1148
  %v1150 = vcvt.f32.s32 %v1144
  %v1151 = vshll.u32 %v1150, 16
  %v1152 = vadd.s32 %v1151, %v1149
  %v1153 = vand.u32 %v1072, 65535
  %v1154 = vshra.s32 %v1072, 16
  %v1155 = vcvt.s32.f32 %v1153
  %v1156 = vcvt.s32.f32 %v1154
  %1157 = vmin.xlane.f32.xlu0 %v1156
  %v1158 = vpop.xlane.xlu0 %1157
  %vm1159 = vcmp.eq.f32.partialorder %v1156, %v1158
  %v1160 = vsel %vm1159, %v1155, inf
  %1161 = vmin.xlane.f32.xlu0 %v1160
  %v1162 = vpop.xlane.xlu0 %1161
  %v1163 = vcvt.f32.s32 %v1162
  %v1164 = vcvt.f32.s32 %v1158
  %v1165 = vshll.u32 %v1164, 16
  %v1166 = vadd.s32 %v1165, %v1163
  %v1167 = vand.u32 %v1073, 65535
  %v1168 = vshra.s32 %v1073, 16
  %v1169 = vcvt.s32.f32 %v1167
  %v1170 = vcvt.s32.f32 %v1168
  %1171 = vmin.xlane.f32.xlu0 %v1170
  %v1172 = vpop.xlane.xlu0 %1171
  %vm1173 = vcmp.eq.f32.partialorder %v1170, %v1172
  %v1174 = vsel %vm1173, %v1169, inf
  %1175 = vmin.xlane.f32.xlu0 %v1174
  %v1176 = vpop.xlane.xlu0 %1175
  %v1177 = vcvt.f32.s32 %v1176
  %v1178 = vcvt.f32.s32 %v1172
  %v1179 = vshll.u32 %v1178, 16
  %v1180 = vadd.s32 %v1179, %v1177
  %v1181 = vand.u32 %v1074, 65535
  %v1182 = vshra.s32 %v1074, 16
  %v1183 = vcvt.s32.f32 %v1181
  %v1184 = vcvt.s32.f32 %v1182
  %1185 = vmin.xlane.f32.xlu0 %v1184
  %v1186 = vpop.xlane.xlu0 %1185
  %vm1187 = vcmp.eq.f32.partialorder %v1184, %v1186
  %v1188 = vsel %vm1187, %v1183, inf
  %1189 = vmin.xlane.f32.xlu0 %v1188
  %v1190 = vpop.xlane.xlu0 %1189
  %v1191 = vcvt.f32.s32 %v1190
  %v1192 = vcvt.f32.s32 %v1186
  %v1193 = vshll.u32 %v1192, 16
  %v1194 = vadd.s32 %v1193, %v1191
  %v1195 = vand.u32 %v1075, 65535
  %v1196 = vshra.s32 %v1075, 16
  %v1197 = vcvt.s32.f32 %v1195
  %v1198 = vcvt.s32.f32 %v1196
  %1199 = vmin.xlane.f32.xlu0 %v1198
  %v1200 = vpop.xlane.xlu0 %1199
  %vm1201 = vcmp.eq.f32.partialorder %v1198, %v1200
  %v1202 = vsel %vm1201, %v1197, inf
  %1203 = vmin.xlane.f32.xlu0 %v1202
  %v1204 = vpop.xlane.xlu0 %1203
  %v1205 = vcvt.f32.s32 %v1204
  %v1206 = vcvt.f32.s32 %v1200
  %v1207 = vshll.u32 %v1206, 16
  %v1208 = vadd.s32 %v1207, %v1205
  %v1209 = vand.u32 %v1076, 65535
  %v1210 = vshra.s32 %v1076, 16
  %v1211 = vcvt.s32.f32 %v1209
  %v1212 = vcvt.s32.f32 %v1210
  %1213 = vmin.xlane.f32.xlu0 %v1212
  %v1214 = vpop.xlane.xlu0 %1213
  %vm1215 = vcmp.eq.f32.partialorder %v1212, %v1214
  %v1216 = vsel %vm1215, %v1211, inf
  %1217 = vmin.xlane.f32.xlu0 %v1216
  %v1218 = vpop.xlane.xlu0 %1217
  %v1219 = vcvt.f32.s32 %v1218
  %v1220 = vcvt.f32.s32 %v1214
  %v1221 = vshll.u32 %v1220, 16
  %v1222 = vadd.s32 %v1221, %v1219
  %v1223 = vand.u32 %v1077, 65535
  %v1224 = vshra.s32 %v1077, 16
  %v1225 = vcvt.s32.f32 %v1223
  %v1226 = vcvt.s32.f32 %v1224
  %1227 = vmin.xlane.f32.xlu0 %v1226
  %v1228 = vpop.xlane.xlu0 %1227
  %vm1229 = vcmp.eq.f32.partialorder %v1226, %v1228
  %v1230 = vsel %vm1229, %v1225, inf
  %1231 = vmin.xlane.f32.xlu0 %v1230
  %v1232 = vpop.xlane.xlu0 %1231
  %v1233 = vcvt.f32.s32 %v1232
  %v1234 = vcvt.f32.s32 %v1228
  %v1235 = vshll.u32 %v1234, 16
  %v1236 = vadd.s32 %v1235, %v1233
  %v1237 = vand.u32 %v1078, 65535
  %v1238 = vshra.s32 %v1078, 16
  %v1239 = vcvt.s32.f32 %v1237
  %v1240 = vcvt.s32.f32 %v1238
  %1241 = vmin.xlane.f32.xlu0 %v1240
  %v1242 = vpop.xlane.xlu0 %1241
  %vm1243 = vcmp.eq.f32.partialorder %v1240, %v1242
  %v1244 = vsel %vm1243, %v1239, inf
  %1245 = vmin.xlane.f32.xlu0 %v1244
  %v1246 = vpop.xlane.xlu0 %1245
  %v1247 = vcvt.f32.s32 %v1246
  %v1248 = vcvt.f32.s32 %v1242
  %v1249 = vshll.u32 %v1248, 16
  %v1250 = vadd.s32 %v1249, %v1247
  %v1251 = vand.u32 %v1079, 65535
  %v1252 = vshra.s32 %v1079, 16
  %v1253 = vcvt.s32.f32 %v1251
  %v1254 = vcvt.s32.f32 %v1252
  %1255 = vmin.xlane.f32.xlu0 %v1254
  %v1256 = vpop.xlane.xlu0 %1255
  %vm1257 = vcmp.eq.f32.partialorder %v1254, %v1256
  %v1258 = vsel %vm1257, %v1253, inf
  %1259 = vmin.xlane.f32.xlu0 %v1258
  %v1260 = vpop.xlane.xlu0 %1259
  %v1261 = vcvt.f32.s32 %v1260
  %v1262 = vcvt.f32.s32 %v1256
  %v1263 = vshll.u32 %v1262, 16
  %v1264 = vadd.s32 %v1263, %v1261
  %v1265 = vand.u32 %v1080, 65535
  %v1266 = vshra.s32 %v1080, 16
  %v1267 = vcvt.s32.f32 %v1265
  %v1268 = vcvt.s32.f32 %v1266
  %1269 = vmin.xlane.f32.xlu0 %v1268
  %v1270 = vpop.xlane.xlu0 %1269
  %vm1271 = vcmp.eq.f32.partialorder %v1268, %v1270
  %v1272 = vsel %vm1271, %v1267, inf
  %1273 = vmin.xlane.f32.xlu0 %v1272
  %v1274 = vpop.xlane.xlu0 %1273
  %v1275 = vcvt.f32.s32 %v1274
  %v1276 = vcvt.f32.s32 %v1270
  %v1277 = vshll.u32 %v1276, 16
  %v1278 = vadd.s32 %v1277, %v1275
  %v1279 = vand.u32 %v1081, 65535
  %v1280 = vshra.s32 %v1081, 16
  %v1281 = vcvt.s32.f32 %v1279
  %v1282 = vcvt.s32.f32 %v1280
  %1283 = vmin.xlane.f32.xlu0 %v1282
  %v1284 = vpop.xlane.xlu0 %1283
  %vm1285 = vcmp.eq.f32.partialorder %v1282, %v1284
  %v1286 = vsel %vm1285, %v1281, inf
  %1287 = vmin.xlane.f32.xlu0 %v1286
  %v1288 = vpop.xlane.xlu0 %1287
  %v1289 = vcvt.f32.s32 %v1288
  %v1290 = vcvt.f32.s32 %v1284
  %v1291 = vshll.u32 %v1290, 16
  %v1292 = vadd.s32 %v1291, %v1289
  %v1293 = vand.u32 %v1082, 65535
  %v1294 = vshra.s32 %v1082, 16
  %v1295 = vcvt.s32.f32 %v1293
  %v1296 = vcvt.s32.f32 %v1294
  %1297 = vmin.xlane.f32.xlu0 %v1296
  %v1298 = vpop.xlane.xlu0 %1297
  %vm1299 = vcmp.eq.f32.partialorder %v1296, %v1298
  %v1300 = vsel %vm1299, %v1295, inf
  %1301 = vmin.xlane.f32.xlu0 %v1300
  %v1302 = vpop.xlane.xlu0 %1301
  %v1303 = vcvt.f32.s32 %v1302
  %v1304 = vcvt.f32.s32 %v1298
  %v1305 = vshll.u32 %v1304, 16
  %v1306 = vadd.s32 %v1305, %v1303
  %v1307 = vld [vmem:[%s6] sm:$0xff]
  %v1308 = vld [vmem:[%s6 + $0x8] sm:$0xff]
  %v1309 = vld [vmem:[%s6 + $0x10] sm:$0xff]
  %v1310 = vld [vmem:[%s6 + $0x18] sm:$0xff]
  %v1311 = vld [vmem:[%s6 + $0x20] sm:$0xff]
  %v1312 = vld [vmem:[%s6 + $0x28] sm:$0xff]
  %v1313 = vld [vmem:[%s6 + $0x30] sm:$0xff]
  %v1314 = vld [vmem:[%s6 + $0x38] sm:$0xff]
  %v1315 = vld [vmem:[%s6 + $0x40] sm:$0xff]
  %v1316 = vld [vmem:[%s6 + $0x48] sm:$0xff]
  %v1317 = vld [vmem:[%s6 + $0x50] sm:$0xff]
  %v1318 = vld [vmem:[%s6 + $0x58] sm:$0xff]
  %v1319 = vld [vmem:[%s6 + $0x60] sm:$0xff]
  %v1320 = vld [vmem:[%s6 + $0x68] sm:$0xff]
  %v1321 = vld [vmem:[%s6 + $0x70] sm:$0xff]
  %v1322 = vld [vmem:[%s6 + $0x78] sm:$0xff]
  %vm1323 = vcmp.gt.f32.partialorder %v727, %v1307
  %vm1324 = vcmp.gt.f32.partialorder %v729, %v1308
  %vm1325 = vcmp.gt.f32.partialorder %v731, %v1309
  %vm1326 = vcmp.gt.f32.partialorder %v733, %v1310
  %vm1327 = vcmp.gt.f32.partialorder %v735, %v1311
  %vm1328 = vcmp.gt.f32.partialorder %v737, %v1312
  %vm1329 = vcmp.gt.f32.partialorder %v739, %v1313
  %vm1330 = vcmp.gt.f32.partialorder %v741, %v1314
  %vm1331 = vcmp.gt.f32.partialorder %v743, %v1315
  %vm1332 = vcmp.gt.f32.partialorder %v745, %v1316
  %vm1333 = vcmp.gt.f32.partialorder %v747, %v1317
  %vm1334 = vcmp.gt.f32.partialorder %v749, %v1318
  %vm1335 = vcmp.gt.f32.partialorder %v751, %v1319
  %vm1336 = vcmp.gt.f32.partialorder %v753, %v1320
  %vm1337 = vcmp.gt.f32.partialorder %v755, %v1321
  %vm1338 = vcmp.gt.f32.partialorder %v757, %v1322
  %v1339 = vld [vmem:[%s8] sm:$0xff]
  %v1340 = vld [vmem:[%s8 + $0x8] sm:$0xff]
  %v1341 = vld [vmem:[%s8 + $0x10] sm:$0xff]
  %v1342 = vld [vmem:[%s8 + $0x18] sm:$0xff]
  %v1343 = vld [vmem:[%s8 + $0x20] sm:$0xff]
  %v1344 = vld [vmem:[%s8 + $0x28] sm:$0xff]
  %v1345 = vld [vmem:[%s8 + $0x30] sm:$0xff]
  %v1346 = vld [vmem:[%s8 + $0x38] sm:$0xff]
  %v1347 = vld [vmem:[%s8 + $0x40] sm:$0xff]
  %v1348 = vld [vmem:[%s8 + $0x48] sm:$0xff]
  %v1349 = vld [vmem:[%s8 + $0x50] sm:$0xff]
  %v1350 = vld [vmem:[%s8 + $0x58] sm:$0xff]
  %v1351 = vld [vmem:[%s8 + $0x60] sm:$0xff]
  %v1352 = vld [vmem:[%s8 + $0x68] sm:$0xff]
  %v1353 = vld [vmem:[%s8 + $0x70] sm:$0xff]
  %v1354 = vld [vmem:[%s8 + $0x78] sm:$0xff]
  %v1355 = vsel %vm1323, %v840, %v1339
  %v1356 = vsel %vm1324, %v854, %v1340
  %v1357 = vsel %vm1325, %v868, %v1341
  %v1358 = vsel %vm1326, %v882, %v1342
  %v1359 = vsel %vm1327, %v896, %v1343
  %v1360 = vsel %vm1328, %v910, %v1344
  %v1361 = vsel %vm1329, %v924, %v1345
  %v1362 = vsel %vm1330, %v938, %v1346
  %v1363 = vsel %vm1331, %v952, %v1347
  %v1364 = vsel %vm1332, %v966, %v1348
  %v1365 = vsel %vm1333, %v980, %v1349
  %v1366 = vsel %vm1334, %v994, %v1350
  %v1367 = vsel %vm1335, %v1008, %v1351
  %v1368 = vsel %vm1336, %v1022, %v1352
  %v1369 = vsel %vm1337, %v1036, %v1353
  %v1370 = vsel %vm1338, %v1050, %v1354
  %vm1371 = vcmask 7168
  %1372 = vst.msk [vmem:[%s8] sm:$0xff] %vm1371, %v1355
  %1373 = vst.msk [vmem:[%s8 + $0x8] sm:$0xff] %vm1371, %v1356
  %1374 = vst.msk [vmem:[%s8 + $0x10] sm:$0xff] %vm1371, %v1357
  %1375 = vst.msk [vmem:[%s8 + $0x18] sm:$0xff] %vm1371, %v1358
  %1376 = vst.msk [vmem:[%s8 + $0x20] sm:$0xff] %vm1371, %v1359
  %1377 = vst.msk [vmem:[%s8 + $0x28] sm:$0xff] %vm1371, %v1360
  %1378 = vst.msk [vmem:[%s8 + $0x30] sm:$0xff] %vm1371, %v1361
  %1379 = vst.msk [vmem:[%s8 + $0x38] sm:$0xff] %vm1371, %v1362
  %1380 = vst.msk [vmem:[%s8 + $0x40] sm:$0xff] %vm1371, %v1363
  %1381 = vst.msk [vmem:[%s8 + $0x48] sm:$0xff] %vm1371, %v1364
  %1382 = vst.msk [vmem:[%s8 + $0x50] sm:$0xff] %vm1371, %v1365
  %1383 = vst.msk [vmem:[%s8 + $0x58] sm:$0xff] %vm1371, %v1366
  %1384 = vst.msk [vmem:[%s8 + $0x60] sm:$0xff] %vm1371, %v1367
  %1385 = vst.msk [vmem:[%s8 + $0x68] sm:$0xff] %vm1371, %v1368
  %1386 = vst.msk [vmem:[%s8 + $0x70] sm:$0xff] %vm1371, %v1369
  %1387 = vst.msk [vmem:[%s8 + $0x78] sm:$0xff] %vm1371, %v1370
  %v1388 = vld [vmem:[%s6] sm:$0xff]
  %v1389 = vld [vmem:[%s6 + $0x8] sm:$0xff]
  %v1390 = vld [vmem:[%s6 + $0x10] sm:$0xff]
  %v1391 = vld [vmem:[%s6 + $0x18] sm:$0xff]
  %v1392 = vld [vmem:[%s6 + $0x20] sm:$0xff]
  %v1393 = vld [vmem:[%s6 + $0x28] sm:$0xff]
  %v1394 = vld [vmem:[%s6 + $0x30] sm:$0xff]
  %v1395 = vld [vmem:[%s6 + $0x38] sm:$0xff]
  %v1396 = vld [vmem:[%s6 + $0x40] sm:$0xff]
  %v1397 = vld [vmem:[%s6 + $0x48] sm:$0xff]
  %v1398 = vld [vmem:[%s6 + $0x50] sm:$0xff]
  %v1399 = vld [vmem:[%s6 + $0x58] sm:$0xff]
  %v1400 = vld [vmem:[%s6 + $0x60] sm:$0xff]
  %v1401 = vld [vmem:[%s6 + $0x68] sm:$0xff]
  %v1402 = vld [vmem:[%s6 + $0x70] sm:$0xff]
  %v1403 = vld [vmem:[%s6 + $0x78] sm:$0xff]
  %v1404 = vsel %vm1323, %v727, %v1388
  %v1405 = vsel %vm1324, %v729, %v1389
  %v1406 = vsel %vm1325, %v731, %v1390
  %v1407 = vsel %vm1326, %v733, %v1391
  %v1408 = vsel %vm1327, %v735, %v1392
  %v1409 = vsel %vm1328, %v737, %v1393
  %v1410 = vsel %vm1329, %v739, %v1394
  %v1411 = vsel %vm1330, %v741, %v1395
  %v1412 = vsel %vm1331, %v743, %v1396
  %v1413 = vsel %vm1332, %v745, %v1397
  %v1414 = vsel %vm1333, %v747, %v1398
  %v1415 = vsel %vm1334, %v749, %v1399
  %v1416 = vsel %vm1335, %v751, %v1400
  %v1417 = vsel %vm1336, %v753, %v1401
  %v1418 = vsel %vm1337, %v755, %v1402
  %v1419 = vsel %vm1338, %v757, %v1403
  %1420 = vst.msk [vmem:[%s6] sm:$0xff] %vm1371, %v1404
  %1421 = vst.msk [vmem:[%s6 + $0x8] sm:$0xff] %vm1371, %v1405
  %1422 = vst.msk [vmem:[%s6 + $0x10] sm:$0xff] %vm1371, %v1406
  %1423 = vst.msk [vmem:[%s6 + $0x18] sm:$0xff] %vm1371, %v1407
  %1424 = vst.msk [vmem:[%s6 + $0x20] sm:$0xff] %vm1371, %v1408
  %1425 = vst.msk [vmem:[%s6 + $0x28] sm:$0xff] %vm1371, %v1409
  %1426 = vst.msk [vmem:[%s6 + $0x30] sm:$0xff] %vm1371, %v1410
  %1427 = vst.msk [vmem:[%s6 + $0x38] sm:$0xff] %vm1371, %v1411
  %1428 = vst.msk [vmem:[%s6 + $0x40] sm:$0xff] %vm1371, %v1412
  %1429 = vst.msk [vmem:[%s6 + $0x48] sm:$0xff] %vm1371, %v1413
  %1430 = vst.msk [vmem:[%s6 + $0x50] sm:$0xff] %vm1371, %v1414
  %1431 = vst.msk [vmem:[%s6 + $0x58] sm:$0xff] %vm1371, %v1415
  %1432 = vst.msk [vmem:[%s6 + $0x60] sm:$0xff] %vm1371, %v1416
  %1433 = vst.msk [vmem:[%s6 + $0x68] sm:$0xff] %vm1371, %v1417
  %1434 = vst.msk [vmem:[%s6 + $0x70] sm:$0xff] %vm1371, %v1418
  %1435 = vst.msk [vmem:[%s6 + $0x78] sm:$0xff] %vm1371, %v1419
  %v1436 = vld [vmem:[%s7] sm:$0xff]
  %v1437 = vld [vmem:[%s7 + $0x8] sm:$0xff]
  %v1438 = vld [vmem:[%s7 + $0x10] sm:$0xff]
  %v1439 = vld [vmem:[%s7 + $0x18] sm:$0xff]
  %v1440 = vld [vmem:[%s7 + $0x20] sm:$0xff]
  %v1441 = vld [vmem:[%s7 + $0x28] sm:$0xff]
  %v1442 = vld [vmem:[%s7 + $0x30] sm:$0xff]
  %v1443 = vld [vmem:[%s7 + $0x38] sm:$0xff]
  %v1444 = vld [vmem:[%s7 + $0x40] sm:$0xff]
  %v1445 = vld [vmem:[%s7 + $0x48] sm:$0xff]
  %v1446 = vld [vmem:[%s7 + $0x50] sm:$0xff]
  %v1447 = vld [vmem:[%s7 + $0x58] sm:$0xff]
  %v1448 = vld [vmem:[%s7 + $0x60] sm:$0xff]
  %v1449 = vld [vmem:[%s7 + $0x68] sm:$0xff]
  %v1450 = vld [vmem:[%s7 + $0x70] sm:$0xff]
  %v1451 = vld [vmem:[%s7 + $0x78] sm:$0xff]
  %vm1452 = vcmp.lt.f32.partialorder %v759, %v1436
  %vm1453 = vcmp.lt.f32.partialorder %v761, %v1437
  %vm1454 = vcmp.lt.f32.partialorder %v763, %v1438
  %vm1455 = vcmp.lt.f32.partialorder %v765, %v1439
  %vm1456 = vcmp.lt.f32.partialorder %v767, %v1440
  %vm1457 = vcmp.lt.f32.partialorder %v769, %v1441
  %vm1458 = vcmp.lt.f32.partialorder %v771, %v1442
  %vm1459 = vcmp.lt.f32.partialorder %v773, %v1443
  %vm1460 = vcmp.lt.f32.partialorder %v775, %v1444
  %vm1461 = vcmp.lt.f32.partialorder %v777, %v1445
  %vm1462 = vcmp.lt.f32.partialorder %v779, %v1446
  %vm1463 = vcmp.lt.f32.partialorder %v781, %v1447
  %vm1464 = vcmp.lt.f32.partialorder %v783, %v1448
  %vm1465 = vcmp.lt.f32.partialorder %v785, %v1449
  %vm1466 = vcmp.lt.f32.partialorder %v787, %v1450
  %vm1467 = vcmp.lt.f32.partialorder %v789, %v1451
  %v1468 = vld [vmem:[%s9] sm:$0xff]
  %v1469 = vld [vmem:[%s9 + $0x8] sm:$0xff]
  %v1470 = vld [vmem:[%s9 + $0x10] sm:$0xff]
  %v1471 = vld [vmem:[%s9 + $0x18] sm:$0xff]
  %v1472 = vld [vmem:[%s9 + $0x20] sm:$0xff]
  %v1473 = vld [vmem:[%s9 + $0x28] sm:$0xff]
  %v1474 = vld [vmem:[%s9 + $0x30] sm:$0xff]
  %v1475 = vld [vmem:[%s9 + $0x38] sm:$0xff]
  %v1476 = vld [vmem:[%s9 + $0x40] sm:$0xff]
  %v1477 = vld [vmem:[%s9 + $0x48] sm:$0xff]
  %v1478 = vld [vmem:[%s9 + $0x50] sm:$0xff]
  %v1479 = vld [vmem:[%s9 + $0x58] sm:$0xff]
  %v1480 = vld [vmem:[%s9 + $0x60] sm:$0xff]
  %v1481 = vld [vmem:[%s9 + $0x68] sm:$0xff]
  %v1482 = vld [vmem:[%s9 + $0x70] sm:$0xff]
  %v1483 = vld [vmem:[%s9 + $0x78] sm:$0xff]
  %v1484 = vsel %vm1452, %v1096, %v1468
  %v1485 = vsel %vm1453, %v1110, %v1469
  %v1486 = vsel %vm1454, %v1124, %v1470
  %v1487 = vsel %vm1455, %v1138, %v1471
  %v1488 = vsel %vm1456, %v1152, %v1472
  %v1489 = vsel %vm1457, %v1166, %v1473
  %v1490 = vsel %vm1458, %v1180, %v1474
  %v1491 = vsel %vm1459, %v1194, %v1475
  %v1492 = vsel %vm1460, %v1208, %v1476
  %v1493 = vsel %vm1461, %v1222, %v1477
  %v1494 = vsel %vm1462, %v1236, %v1478
  %v1495 = vsel %vm1463, %v1250, %v1479
  %v1496 = vsel %vm1464, %v1264, %v1480
  %v1497 = vsel %vm1465, %v1278, %v1481
  %v1498 = vsel %vm1466, %v1292, %v1482
  %v1499 = vsel %vm1467, %v1306, %v1483
  %1500 = vst.msk [vmem:[%s9] sm:$0xff] %vm1371, %v1484
  %1501 = vst.msk [vmem:[%s9 + $0x8] sm:$0xff] %vm1371, %v1485
  %1502 = vst.msk [vmem:[%s9 + $0x10] sm:$0xff] %vm1371, %v1486
  %1503 = vst.msk [vmem:[%s9 + $0x18] sm:$0xff] %vm1371, %v1487
  %1504 = vst.msk [vmem:[%s9 + $0x20] sm:$0xff] %vm1371, %v1488
  %1505 = vst.msk [vmem:[%s9 + $0x28] sm:$0xff] %vm1371, %v1489
  %1506 = vst.msk [vmem:[%s9 + $0x30] sm:$0xff] %vm1371, %v1490
  %1507 = vst.msk [vmem:[%s9 + $0x38] sm:$0xff] %vm1371, %v1491
  %1508 = vst.msk [vmem:[%s9 + $0x40] sm:$0xff] %vm1371, %v1492
  %1509 = vst.msk [vmem:[%s9 + $0x48] sm:$0xff] %vm1371, %v1493
  %1510 = vst.msk [vmem:[%s9 + $0x50] sm:$0xff] %vm1371, %v1494
  %1511 = vst.msk [vmem:[%s9 + $0x58] sm:$0xff] %vm1371, %v1495
  %1512 = vst.msk [vmem:[%s9 + $0x60] sm:$0xff] %vm1371, %v1496
  %1513 = vst.msk [vmem:[%s9 + $0x68] sm:$0xff] %vm1371, %v1497
  %1514 = vst.msk [vmem:[%s9 + $0x70] sm:$0xff] %vm1371, %v1498
  %1515 = vst.msk [vmem:[%s9 + $0x78] sm:$0xff] %vm1371, %v1499
  %v1516 = vld [vmem:[%s7] sm:$0xff]
  %v1517 = vld [vmem:[%s7 + $0x8] sm:$0xff]
  %v1518 = vld [vmem:[%s7 + $0x10] sm:$0xff]
  %v1519 = vld [vmem:[%s7 + $0x18] sm:$0xff]
  %v1520 = vld [vmem:[%s7 + $0x20] sm:$0xff]
  %v1521 = vld [vmem:[%s7 + $0x28] sm:$0xff]
  %v1522 = vld [vmem:[%s7 + $0x30] sm:$0xff]
  %v1523 = vld [vmem:[%s7 + $0x38] sm:$0xff]
  %v1524 = vld [vmem:[%s7 + $0x40] sm:$0xff]
  %v1525 = vld [vmem:[%s7 + $0x48] sm:$0xff]
  %v1526 = vld [vmem:[%s7 + $0x50] sm:$0xff]
  %v1527 = vld [vmem:[%s7 + $0x58] sm:$0xff]
  %v1528 = vld [vmem:[%s7 + $0x60] sm:$0xff]
  %v1529 = vld [vmem:[%s7 + $0x68] sm:$0xff]
  %v1530 = vld [vmem:[%s7 + $0x70] sm:$0xff]
  %v1531 = vld [vmem:[%s7 + $0x78] sm:$0xff]
  %v1532 = vsel %vm1452, %v759, %v1516
  %v1533 = vsel %vm1453, %v761, %v1517
  %v1534 = vsel %vm1454, %v763, %v1518
  %v1535 = vsel %vm1455, %v765, %v1519
  %v1536 = vsel %vm1456, %v767, %v1520
  %v1537 = vsel %vm1457, %v769, %v1521
  %v1538 = vsel %vm1458, %v771, %v1522
  %v1539 = vsel %vm1459, %v773, %v1523
  %v1540 = vsel %vm1460, %v775, %v1524
  %v1541 = vsel %vm1461, %v777, %v1525
  %v1542 = vsel %vm1462, %v779, %v1526
  %v1543 = vsel %vm1463, %v781, %v1527
  %v1544 = vsel %vm1464, %v783, %v1528
  %v1545 = vsel %vm1465, %v785, %v1529
  %v1546 = vsel %vm1466, %v787, %v1530
  %v1547 = vsel %vm1467, %v789, %v1531
  %1548 = vst.msk [vmem:[%s7] sm:$0xff] %vm1371, %v1532
  %1549 = vst.msk [vmem:[%s7 + $0x8] sm:$0xff] %vm1371, %v1533
  %1550 = vst.msk [vmem:[%s7 + $0x10] sm:$0xff] %vm1371, %v1534
  %1551 = vst.msk [vmem:[%s7 + $0x18] sm:$0xff] %vm1371, %v1535
  %1552 = vst.msk [vmem:[%s7 + $0x20] sm:$0xff] %vm1371, %v1536
  %1553 = vst.msk [vmem:[%s7 + $0x28] sm:$0xff] %vm1371, %v1537
  %1554 = vst.msk [vmem:[%s7 + $0x30] sm:$0xff] %vm1371, %v1538
  %1555 = vst.msk [vmem:[%s7 + $0x38] sm:$0xff] %vm1371, %v1539
  %1556 = vst.msk [vmem:[%s7 + $0x40] sm:$0xff] %vm1371, %v1540
  %1557 = vst.msk [vmem:[%s7 + $0x48] sm:$0xff] %vm1371, %v1541
  %1558 = vst.msk [vmem:[%s7 + $0x50] sm:$0xff] %vm1371, %v1542
  %1559 = vst.msk [vmem:[%s7 + $0x58] sm:$0xff] %vm1371, %v1543
  %1560 = vst.msk [vmem:[%s7 + $0x60] sm:$0xff] %vm1371, %v1544
  %1561 = vst.msk [vmem:[%s7 + $0x68] sm:$0xff] %vm1371, %v1545
  %1562 = vst.msk [vmem:[%s7 + $0x70] sm:$0xff] %vm1371, %v1546
  %1563 = vst.msk [vmem:[%s7 + $0x78] sm:$0xff] %vm1371, %v1547
  // Predicated region
  $region30: #{triplet_loss_aligned_reid.2} parent=0 // pred_check
    _
  $region31: #{triplet_loss_aligned_reid.2} parent=0 // pred_check_branch
    %1565 = sbr.rel (0) target = $region33
  $region32: #{triplet_loss_aligned_reid.2} parent=0 // pred_region
    _
  $region33: #{triplet_loss_aligned_reid.2} parent=0 // pred_fallthru
    _
  // Predicated region
  $region34: #{triplet_loss_aligned_reid.2} parent=0 // pred_check
    _
  $region35: #{triplet_loss_aligned_reid.2} parent=0 // pred_check_branch
    %1567 = sbr.rel (0) target = $region37
  $region36: #{triplet_loss_aligned_reid.2} parent=0 // pred_region
    _
  $region37: #{triplet_loss_aligned_reid.2} parent=0 // pred_fallthru
    _
  // Predicated region
  $region38: #{triplet_loss_aligned_reid.2} parent=0 // pred_check
    _
  $region39: #{triplet_loss_aligned_reid.2} parent=0 // pred_check_branch
    %1569 = sbr.rel (0) target = $region41
  $region40: #{triplet_loss_aligned_reid.2} parent=0 // pred_region
    _
  $region41: #{triplet_loss_aligned_reid.2} parent=0 // pred_fallthru
    _
  // Predicated region
  $region42: #{triplet_loss_aligned_reid.2} parent=0 // pred_check
    _
  $region43: #{triplet_loss_aligned_reid.2} parent=0 // pred_check_branch
    %1571 = sbr.rel (0) target = $region45
  $region44: #{triplet_loss_aligned_reid.2} parent=0 // pred_region
    _
  $region45: #{triplet_loss_aligned_reid.2} parent=0 // pred_fallthru
    _
  // Predicated region
  $region46: #{triplet_loss_aligned_reid.2} parent=0 // pred_check
    _
  $region47: #{triplet_loss_aligned_reid.2} parent=0 // pred_check_branch
    %1573 = sbr.rel (0) target = $region49
  $region48: #{triplet_loss_aligned_reid.2} parent=0 // pred_region
    _
  $region49: #{triplet_loss_aligned_reid.2} parent=0 // pred_fallthru
    _
  // Predicated region
  $region50: #{triplet_loss_aligned_reid.2} parent=0 // pred_check
    _
  $region51: #{triplet_loss_aligned_reid.2} parent=0 // pred_check_branch
    %1575 = sbr.rel (0) target = $region53
  $region52: #{triplet_loss_aligned_reid.2} parent=0 // pred_region
    _
  $region53: #{triplet_loss_aligned_reid.2} parent=0 // pred_fallthru
    _
  // Predicated region
  $region54: #{triplet_loss_aligned_reid.2} parent=0 // pred_check
    _
  $region55: #{triplet_loss_aligned_reid.2} parent=0 // pred_check_branch
    %1577 = sbr.rel (0) target = $region57
  $region56: #{triplet_loss_aligned_reid.2} parent=0 // pred_region
    _
  $region57: #{triplet_loss_aligned_reid.2} parent=0 // pred_fallthru
    _
  // Predicated region
  $region58: #{triplet_loss_aligned_reid.2} parent=0 // pred_check
    _
  $region59: #{triplet_loss_aligned_reid.2} parent=0 // pred_check_branch
    %1579 = sbr.rel (0) target = $region61
  $region60: #{triplet_loss_aligned_reid.2} parent=0 // pred_region
    _
  $region61: #{triplet_loss_aligned_reid.2} parent=0 // pred_fallthru
    _

// kernel: triplet_loss_aligned_reid.3
$region0: #{triplet_loss_aligned_reid.3}
  #allocation0 [shape = 'u32[]', space=smem, size = 0x4, offset = 0x4, fixed_abs, tag = 'smem constant byte address 0x4 - core index']
  #allocation1 [shape = 'u32[144,128]{1,0:T(1,128)}', space=vmem, size = 0x12000, scoped, tag = 'internal scratch']
  %s0 = inlined_call_operand.vmem [shape: f32[8,32,128], index: 0, kind: input, shape index: {}]
  %s1 = inlined_call_operand.vmem [shape: f32[8,32,128], index: 1, kind: input, shape index: {}]
  %s2 = inlined_call_operand.vmem [shape: f32[8,32,128], index: 2, kind: input, shape index: {}]
  %s3 = inlined_call_operand.vmem [shape: f32[2,128], index: 3, kind: output, shape index: {}]
  %s4 = sld [smem:[#allocation0]]
  $region22: #{triplet_loss_aligned_reid.3} parent=0
    _
  %s6 = ssub.s32 1, %s4
  %s7 = scalar_select 0, %s6, %s4
  // Predicated region
  $region2: #{triplet_loss_aligned_reid.3} parent=0 // pred_check
    _
  $region3: #{triplet_loss_aligned_reid.3} parent=0 // pred_check_branch
    %9 = sbr.rel (0) target = $region5
  $region4: #{triplet_loss_aligned_reid.3} parent=0 // pred_region
    _
  $region5: #{triplet_loss_aligned_reid.3} parent=0 // pred_fallthru
    _
  // Predicated region
  $region6: #{triplet_loss_aligned_reid.3} parent=0 // pred_check
    _
  $region7: #{triplet_loss_aligned_reid.3} parent=0 // pred_check_branch
    %11 = sbr.rel (0) target = $region9
  $region8: #{triplet_loss_aligned_reid.3} parent=0 // pred_region
    _
  $region9: #{triplet_loss_aligned_reid.3} parent=0 // pred_fallthru
    _
  // Predicated region
  $region10: #{triplet_loss_aligned_reid.3} parent=0 // pred_check
    _
  $region11: #{triplet_loss_aligned_reid.3} parent=0 // pred_check_branch
    %13 = sbr.rel (0) target = $region13
  $region12: #{triplet_loss_aligned_reid.3} parent=0 // pred_region
    _
  $region13: #{triplet_loss_aligned_reid.3} parent=0 // pred_fallthru
    _
  %v14 = vld [vmem:[%s0] sm:$0xff]
  %v15 = vld [vmem:[%s0 + $0x8] sm:$0xff]
  %v16 = vld [vmem:[%s0 + $0x10] sm:$0xff]
  %v17 = vld [vmem:[%s0 + $0x18] sm:$0xff]
  %v18 = vld [vmem:[%s0 + $0x20] sm:$0xff]
  %v19 = vld [vmem:[%s0 + $0x28] sm:$0xff]
  %v20 = vld [vmem:[%s0 + $0x30] sm:$0xff]
  %v21 = vld [vmem:[%s0 + $0x38] sm:$0xff]
  %v22 = vld [vmem:[%s0 + $0x40] sm:$0xff]
  %v23 = vld [vmem:[%s0 + $0x48] sm:$0xff]
  %v24 = vld [vmem:[%s0 + $0x50] sm:$0xff]
  %v25 = vld [vmem:[%s0 + $0x58] sm:$0xff]
  %v26 = vld [vmem:[%s0 + $0x60] sm:$0xff]
  %v27 = vld [vmem:[%s0 + $0x68] sm:$0xff]
  %v28 = vld [vmem:[%s0 + $0x70] sm:$0xff]
  %v29 = vld [vmem:[%s0 + $0x78] sm:$0xff]
  %v30 = vld [vmem:[%s0 + $0x80] sm:$0xff]
  %v31 = vld [vmem:[%s0 + $0x88] sm:$0xff]
  %v32 = vld [vmem:[%s0 + $0x90] sm:$0xff]
  %v33 = vld [vmem:[%s0 + $0x98] sm:$0xff]
  %v34 = vld [vmem:[%s0 + $0xa0] sm:$0xff]
  %v35 = vld [vmem:[%s0 + $0xa8] sm:$0xff]
  %v36 = vld [vmem:[%s0 + $0xb0] sm:$0xff]
  %v37 = vld [vmem:[%s0 + $0xb8] sm:$0xff]
  %v38 = vld [vmem:[%s0 + $0xc0] sm:$0xff]
  %v39 = vld [vmem:[%s0 + $0xc8] sm:$0xff]
  %v40 = vld [vmem:[%s0 + $0xd0] sm:$0xff]
  %v41 = vld [vmem:[%s0 + $0xd8] sm:$0xff]
  %v42 = vld [vmem:[%s0 + $0xe0] sm:$0xff]
  %v43 = vld [vmem:[%s0 + $0xe8] sm:$0xff]
  %v44 = vld [vmem:[%s0 + $0xf0] sm:$0xff]
  %v45 = vld [vmem:[%s0 + $0xf8] sm:$0xff]
  %v46 = vmul.f32 %v14, %v14
  %v47 = vmul.f32 %v15, %v15
  %v48 = vmul.f32 %v16, %v16
  %v49 = vmul.f32 %v17, %v17
  %v50 = vmul.f32 %v18, %v18
  %v51 = vmul.f32 %v19, %v19
  %v52 = vmul.f32 %v20, %v20
  %v53 = vmul.f32 %v21, %v21
  %v54 = vmul.f32 %v22, %v22
  %v55 = vmul.f32 %v23, %v23
  %v56 = vmul.f32 %v24, %v24
  %v57 = vmul.f32 %v25, %v25
  %v58 = vmul.f32 %v26, %v26
  %v59 = vmul.f32 %v27, %v27
  %v60 = vmul.f32 %v28, %v28
  %v61 = vmul.f32 %v29, %v29
  %v62 = vmul.f32 %v30, %v30
  %v63 = vmul.f32 %v31, %v31
  %v64 = vmul.f32 %v32, %v32
  %v65 = vmul.f32 %v33, %v33
  %v66 = vmul.f32 %v34, %v34
  %v67 = vmul.f32 %v35, %v35
  %v68 = vmul.f32 %v36, %v36
  %v69 = vmul.f32 %v37, %v37
  %v70 = vmul.f32 %v38, %v38
  %v71 = vmul.f32 %v39, %v39
  %v72 = vmul.f32 %v40, %v40
  %v73 = vmul.f32 %v41, %v41
  %v74 = vmul.f32 %v42, %v42
  %v75 = vmul.f32 %v43, %v43
  %v76 = vmul.f32 %v44, %v44
  %v77 = vmul.f32 %v45, %v45
  %v78 = vadd.f32 %v46, %v47
  %v79 = vadd.f32 %v78, %v48
  %v80 = vadd.f32 %v79, %v49
  %v81 = vrot.slane %v80, 4
  %v82 = vadd.f32 %v80, %v81
  %v83 = vrot.slane %v82, 2
  %v84 = vadd.f32 %v82, %v83
  %v85 = vrot.slane %v84, 1
  %v86 = vadd.f32 %v84, %v85
  %v87 = vadd.f32 %v50, %v51
  %v88 = vadd.f32 %v87, %v52
  %v89 = vadd.f32 %v88, %v53
  %v90 = vrot.slane %v89, 4
  %v91 = vadd.f32 %v89, %v90
  %v92 = vrot.slane %v91, 2
  %v93 = vadd.f32 %v91, %v92
  %v94 = vrot.slane %v93, 1
  %v95 = vadd.f32 %v93, %v94
  %v96 = vadd.f32 %v54, %v55
  %v97 = vadd.f32 %v96, %v56
  %v98 = vadd.f32 %v97, %v57
  %v99 = vrot.slane %v98, 4
  %v100 = vadd.f32 %v98, %v99
  %v101 = vrot.slane %v100, 2
  %v102 = vadd.f32 %v100, %v101
  %v103 = vrot.slane %v102, 1
  %v104 = vadd.f32 %v102, %v103
  %v105 = vadd.f32 %v58, %v59
  %v106 = vadd.f32 %v105, %v60
  %v107 = vadd.f32 %v106, %v61
  %v108 = vrot.slane %v107, 4
  %v109 = vadd.f32 %v107, %v108
  %v110 = vrot.slane %v109, 2
  %v111 = vadd.f32 %v109, %v110
  %v112 = vrot.slane %v111, 1
  %v113 = vadd.f32 %v111, %v112
  %v114 = vadd.f32 %v62, %v63
  %v115 = vadd.f32 %v114, %v64
  %v116 = vadd.f32 %v115, %v65
  %v117 = vrot.slane %v116, 4
  %v118 = vadd.f32 %v116, %v117
  %v119 = vrot.slane %v118, 2
  %v120 = vadd.f32 %v118, %v119
  %v121 = vrot.slane %v120, 1
  %v122 = vadd.f32 %v120, %v121
  %v123 = vadd.f32 %v66, %v67
  %v124 = vadd.f32 %v123, %v68
  %v125 = vadd.f32 %v124, %v69
  %v126 = vrot.slane %v125, 4
  %v127 = vadd.f32 %v125, %v126
  %v128 = vrot.slane %v127, 2
  %v129 = vadd.f32 %v127, %v128
  %v130 = vrot.slane %v129, 1
  %v131 = vadd.f32 %v129, %v130
  %v132 = vadd.f32 %v70, %v71
  %v133 = vadd.f32 %v132, %v72
  %v134 = vadd.f32 %v133, %v73
  %v135 = vrot.slane %v134, 4
  %v136 = vadd.f32 %v134, %v135
  %v137 = vrot.slane %v136, 2
  %v138 = vadd.f32 %v136, %v137
  %v139 = vrot.slane %v138, 1
  %v140 = vadd.f32 %v138, %v139
  %v141 = vadd.f32 %v74, %v75
  %v142 = vadd.f32 %v141, %v76
  %v143 = vadd.f32 %v142, %v77
  %v144 = vrot.slane %v143, 4
  %v145 = vadd.f32 %v143, %v144
  %v146 = vrot.slane %v145, 2
  %v147 = vadd.f32 %v145, %v146
  %v148 = vrot.slane %v147, 1
  %v149 = vadd.f32 %v147, %v148
  %v150 = vld [vmem:[%s1] sm:$0xff]
  %v151 = vld [vmem:[%s1 + $0x8] sm:$0xff]
  %v152 = vld [vmem:[%s1 + $0x10] sm:$0xff]
  %v153 = vld [vmem:[%s1 + $0x18] sm:$0xff]
  %v154 = vld [vmem:[%s1 + $0x20] sm:$0xff]
  %v155 = vld [vmem:[%s1 + $0x28] sm:$0xff]
  %v156 = vld [vmem:[%s1 + $0x30] sm:$0xff]
  %v157 = vld [vmem:[%s1 + $0x38] sm:$0xff]
  %v158 = vld [vmem:[%s1 + $0x40] sm:$0xff]
  %v159 = vld [vmem:[%s1 + $0x48] sm:$0xff]
  %v160 = vld [vmem:[%s1 + $0x50] sm:$0xff]
  %v161 = vld [vmem:[%s1 + $0x58] sm:$0xff]
  %v162 = vld [vmem:[%s1 + $0x60] sm:$0xff]
  %v163 = vld [vmem:[%s1 + $0x68] sm:$0xff]
  %v164 = vld [vmem:[%s1 + $0x70] sm:$0xff]
  %v165 = vld [vmem:[%s1 + $0x78] sm:$0xff]
  %v166 = vld [vmem:[%s1 + $0x80] sm:$0xff]
  %v167 = vld [vmem:[%s1 + $0x88] sm:$0xff]
  %v168 = vld [vmem:[%s1 + $0x90] sm:$0xff]
  %v169 = vld [vmem:[%s1 + $0x98] sm:$0xff]
  %v170 = vld [vmem:[%s1 + $0xa0] sm:$0xff]
  %v171 = vld [vmem:[%s1 + $0xa8] sm:$0xff]
  %v172 = vld [vmem:[%s1 + $0xb0] sm:$0xff]
  %v173 = vld [vmem:[%s1 + $0xb8] sm:$0xff]
  %v174 = vld [vmem:[%s1 + $0xc0] sm:$0xff]
  %v175 = vld [vmem:[%s1 + $0xc8] sm:$0xff]
  %v176 = vld [vmem:[%s1 + $0xd0] sm:$0xff]
  %v177 = vld [vmem:[%s1 + $0xd8] sm:$0xff]
  %v178 = vld [vmem:[%s1 + $0xe0] sm:$0xff]
  %v179 = vld [vmem:[%s1 + $0xe8] sm:$0xff]
  %v180 = vld [vmem:[%s1 + $0xf0] sm:$0xff]
  %v181 = vld [vmem:[%s1 + $0xf8] sm:$0xff]
  %v182 = vmul.f32 %v150, %v150
  %v183 = vmul.f32 %v151, %v151
  %v184 = vmul.f32 %v152, %v152
  %v185 = vmul.f32 %v153, %v153
  %v186 = vmul.f32 %v154, %v154
  %v187 = vmul.f32 %v155, %v155
  %v188 = vmul.f32 %v156, %v156
  %v189 = vmul.f32 %v157, %v157
  %v190 = vmul.f32 %v158, %v158
  %v191 = vmul.f32 %v159, %v159
  %v192 = vmul.f32 %v160, %v160
  %v193 = vmul.f32 %v161, %v161
  %v194 = vmul.f32 %v162, %v162
  %v195 = vmul.f32 %v163, %v163
  %v196 = vmul.f32 %v164, %v164
  %v197 = vmul.f32 %v165, %v165
  %v198 = vmul.f32 %v166, %v166
  %v199 = vmul.f32 %v167, %v167
  %v200 = vmul.f32 %v168, %v168
  %v201 = vmul.f32 %v169, %v169
  %v202 = vmul.f32 %v170, %v170
  %v203 = vmul.f32 %v171, %v171
  %v204 = vmul.f32 %v172, %v172
  %v205 = vmul.f32 %v173, %v173
  %v206 = vmul.f32 %v174, %v174
  %v207 = vmul.f32 %v175, %v175
  %v208 = vmul.f32 %v176, %v176
  %v209 = vmul.f32 %v177, %v177
  %v210 = vmul.f32 %v178, %v178
  %v211 = vmul.f32 %v179, %v179
  %v212 = vmul.f32 %v180, %v180
  %v213 = vmul.f32 %v181, %v181
  %v214 = vadd.f32 %v182, %v183
  %v215 = vadd.f32 %v214, %v184
  %v216 = vadd.f32 %v215, %v185
  %v217 = vrot.slane %v216, 4
  %v218 = vadd.f32 %v216, %v217
  %v219 = vrot.slane %v218, 2
  %v220 = vadd.f32 %v218, %v219
  %v221 = vrot.slane %v220, 1
  %v222 = vadd.f32 %v220, %v221
  %v223 = vadd.f32 %v186, %v187
  %v224 = vadd.f32 %v223, %v188
  %v225 = vadd.f32 %v224, %v189
  %v226 = vrot.slane %v225, 4
  %v227 = vadd.f32 %v225, %v226
  %v228 = vrot.slane %v227, 2
  %v229 = vadd.f32 %v227, %v228
  %v230 = vrot.slane %v229, 1
  %v231 = vadd.f32 %v229, %v230
  %v232 = vadd.f32 %v190, %v191
  %v233 = vadd.f32 %v232, %v192
  %v234 = vadd.f32 %v233, %v193
  %v235 = vrot.slane %v234, 4
  %v236 = vadd.f32 %v234, %v235
  %v237 = vrot.slane %v236, 2
  %v238 = vadd.f32 %v236, %v237
  %v239 = vrot.slane %v238, 1
  %v240 = vadd.f32 %v238, %v239
  %v241 = vadd.f32 %v194, %v195
  %v242 = vadd.f32 %v241, %v196
  %v243 = vadd.f32 %v242, %v197
  %v244 = vrot.slane %v243, 4
  %v245 = vadd.f32 %v243, %v244
  %v246 = vrot.slane %v245, 2
  %v247 = vadd.f32 %v245, %v246
  %v248 = vrot.slane %v247, 1
  %v249 = vadd.f32 %v247, %v248
  %v250 = vadd.f32 %v198, %v199
  %v251 = vadd.f32 %v250, %v200
  %v252 = vadd.f32 %v251, %v201
  %v253 = vrot.slane %v252, 4
  %v254 = vadd.f32 %v252, %v253
  %v255 = vrot.slane %v254, 2
  %v256 = vadd.f32 %v254, %v255
  %v257 = vrot.slane %v256, 1
  %v258 = vadd.f32 %v256, %v257
  %v259 = vadd.f32 %v202, %v203
  %v260 = vadd.f32 %v259, %v204
  %v261 = vadd.f32 %v260, %v205
  %v262 = vrot.slane %v261, 4
  %v263 = vadd.f32 %v261, %v262
  %v264 = vrot.slane %v263, 2
  %v265 = vadd.f32 %v263, %v264
  %v266 = vrot.slane %v265, 1
  %v267 = vadd.f32 %v265, %v266
  %v268 = vadd.f32 %v206, %v207
  %v269 = vadd.f32 %v268, %v208
  %v270 = vadd.f32 %v269, %v209
  %v271 = vrot.slane %v270, 4
  %v272 = vadd.f32 %v270, %v271
  %v273 = vrot.slane %v272, 2
  %v274 = vadd.f32 %v272, %v273
  %v275 = vrot.slane %v274, 1
  %v276 = vadd.f32 %v274, %v275
  %v277 = vadd.f32 %v210, %v211
  %v278 = vadd.f32 %v277, %v212
  %v279 = vadd.f32 %v278, %v213
  %v280 = vrot.slane %v279, 4
  %v281 = vadd.f32 %v279, %v280
  %v282 = vrot.slane %v281, 2
  %v283 = vadd.f32 %v281, %v282
  %v284 = vrot.slane %v283, 1
  %v285 = vadd.f32 %v283, %v284
  %v286 = vmul.f32 %v14, %v150
  %v287 = vmul.f32 %v15, %v151
  %v288 = vmul.f32 %v16, %v152
  %v289 = vmul.f32 %v17, %v153
  %v290 = vmul.f32 %v14, %v154
  %v291 = vmul.f32 %v15, %v155
  %v292 = vmul.f32 %v16, %v156
  %v293 = vmul.f32 %v17, %v157
  %v294 = vmul.f32 %v14, %v158
  %v295 = vmul.f32 %v15, %v159
  %v296 = vmul.f32 %v16, %v160
  %v297 = vmul.f32 %v17, %v161
  %v298 = vmul.f32 %v14, %v162
  %v299 = vmul.f32 %v15, %v163
  %v300 = vmul.f32 %v16, %v164
  %v301 = vmul.f32 %v17, %v165
  %v302 = vmul.f32 %v14, %v166
  %v303 = vmul.f32 %v15, %v167
  %v304 = vmul.f32 %v16, %v168
  %v305 = vmul.f32 %v17, %v169
  %v306 = vmul.f32 %v14, %v170
  %v307 = vmul.f32 %v15, %v171
  %v308 = vmul.f32 %v16, %v172
  %v309 = vmul.f32 %v17, %v173
  %v310 = vmul.f32 %v14, %v174
  %v311 = vmul.f32 %v15, %v175
  %v312 = vmul.f32 %v16, %v176
  %v313 = vmul.f32 %v17, %v177
  %v314 = vmul.f32 %v14, %v178
  %v315 = vmul.f32 %v15, %v179
  %v316 = vmul.f32 %v16, %v180
  %v317 = vmul.f32 %v17, %v181
  %v318 = vadd.f32 %v286, %v287
  %v319 = vadd.f32 %v318, %v288
  %v320 = vadd.f32 %v319, %v289
  %v321 = vrot.slane %v320, 4
  %v322 = vadd.f32 %v320, %v321
  %v323 = vrot.slane %v322, 2
  %v324 = vadd.f32 %v322, %v323
  %v325 = vrot.slane %v324, 1
  %v326 = vadd.f32 %v324, %v325
  %v327 = vadd.f32 %v290, %v291
  %v328 = vadd.f32 %v327, %v292
  %v329 = vadd.f32 %v328, %v293
  %v330 = vrot.slane %v329, 4
  %v331 = vadd.f32 %v329, %v330
  %v332 = vrot.slane %v331, 2
  %v333 = vadd.f32 %v331, %v332
  %v334 = vrot.slane %v333, 1
  %v335 = vadd.f32 %v333, %v334
  %v336 = vadd.f32 %v294, %v295
  %v337 = vadd.f32 %v336, %v296
  %v338 = vadd.f32 %v337, %v297
  %v339 = vrot.slane %v338, 4
  %v340 = vadd.f32 %v338, %v339
  %v341 = vrot.slane %v340, 2
  %v342 = vadd.f32 %v340, %v341
  %v343 = vrot.slane %v342, 1
  %v344 = vadd.f32 %v342, %v343
  %v345 = vadd.f32 %v298, %v299
  %v346 = vadd.f32 %v345, %v300
  %v347 = vadd.f32 %v346, %v301
  %v348 = vrot.slane %v347, 4
  %v349 = vadd.f32 %v347, %v348
  %v350 = vrot.slane %v349, 2
  %v351 = vadd.f32 %v349, %v350
  %v352 = vrot.slane %v351, 1
  %v353 = vadd.f32 %v351, %v352
  %v354 = vadd.f32 %v302, %v303
  %v355 = vadd.f32 %v354, %v304
  %v356 = vadd.f32 %v355, %v305
  %v357 = vrot.slane %v356, 4
  %v358 = vadd.f32 %v356, %v357
  %v359 = vrot.slane %v358, 2
  %v360 = vadd.f32 %v358, %v359
  %v361 = vrot.slane %v360, 1
  %v362 = vadd.f32 %v360, %v361
  %v363 = vadd.f32 %v306, %v307
  %v364 = vadd.f32 %v363, %v308
  %v365 = vadd.f32 %v364, %v309
  %v366 = vrot.slane %v365, 4
  %v367 = vadd.f32 %v365, %v366
  %v368 = vrot.slane %v367, 2
  %v369 = vadd.f32 %v367, %v368
  %v370 = vrot.slane %v369, 1
  %v371 = vadd.f32 %v369, %v370
  %v372 = vadd.f32 %v310, %v311
  %v373 = vadd.f32 %v372, %v312
  %v374 = vadd.f32 %v373, %v313
  %v375 = vrot.slane %v374, 4
  %v376 = vadd.f32 %v374, %v375
  %v377 = vrot.slane %v376, 2
  %v378 = vadd.f32 %v376, %v377
  %v379 = vrot.slane %v378, 1
  %v380 = vadd.f32 %v378, %v379
  %v381 = vadd.f32 %v314, %v315
  %v382 = vadd.f32 %v381, %v316
  %v383 = vadd.f32 %v382, %v317
  %v384 = vrot.slane %v383, 4
  %v385 = vadd.f32 %v383, %v384
  %v386 = vrot.slane %v385, 2
  %v387 = vadd.f32 %v385, %v386
  %v388 = vrot.slane %v387, 1
  %v389 = vadd.f32 %v387, %v388
  %vm398 = vcmask 1041409
  %v399 = vsel %vm398, %v231, %v222
  %vm400 = vcmask 1042434
  %v401 = vsel %vm400, %v240, %v399
  %vm402 = vcmask 1043459
  %v403 = vsel %vm402, %v249, %v401
  %vm404 = vcmask 1044484
  %v405 = vsel %vm404, %v258, %v403
  %vm406 = vcmask 1045509
  %v407 = vsel %vm406, %v267, %v405
  %vm408 = vcmask 1046534
  %v409 = vsel %vm408, %v276, %v407
  %vm410 = vcmask 1047559
  %v411 = vsel %vm410, %v285, %v409
  %v413 = vadd.f32 %v86, %v411
  %v414 = vmul.f32 %v326, 2.0
  %v415 = vmul.f32 %v335, 2.0
  %v416 = vmul.f32 %v344, 2.0
  %v417 = vmul.f32 %v353, 2.0
  %v418 = vmul.f32 %v362, 2.0
  %v419 = vmul.f32 %v371, 2.0
  %v420 = vmul.f32 %v380, 2.0
  %v421 = vmul.f32 %v389, 2.0
  %v430 = vsel %vm398, %v415, %v414
  %v431 = vsel %vm400, %v416, %v430
  %v432 = vsel %vm402, %v417, %v431
  %v433 = vsel %vm404, %v418, %v432
  %v434 = vsel %vm406, %v419, %v433
  %v435 = vsel %vm408, %v420, %v434
  %v436 = vsel %vm410, %v421, %v435
  %v438 = vsub.f32 %v413, %v436
  %v439 = vmax.f32 %v438, 1e-12
  %v440 = vrsqrt.pop %v439
  %v441 = vmul.f32 %v439, %v440
  %vm442 = vcmp.eq.f32.partialorder %v439, inf
  %v443 = vsel %vm442, %v439, %v441
  %vm444 = vcmp.eq.f32.partialorder %v439, 0.0
  %v445 = vand.u32 %v439, 2147483648
  %v446 = vsel %vm444, %v445, %v443
  %v447 = vmul.f32 %v446, 0.5
  %v448 = vtanh.pop %v447
  %v449 = vmul.f32 %v18, %v150
  %v450 = vmul.f32 %v19, %v151
  %v451 = vmul.f32 %v20, %v152
  %v452 = vmul.f32 %v21, %v153
  %v453 = vmul.f32 %v18, %v154
  %v454 = vmul.f32 %v19, %v155
  %v455 = vmul.f32 %v20, %v156
  %v456 = vmul.f32 %v21, %v157
  %v457 = vmul.f32 %v18, %v158
  %v458 = vmul.f32 %v19, %v159
  %v459 = vmul.f32 %v20, %v160
  %v460 = vmul.f32 %v21, %v161
  %v461 = vmul.f32 %v18, %v162
  %v462 = vmul.f32 %v19, %v163
  %v463 = vmul.f32 %v20, %v164
  %v464 = vmul.f32 %v21, %v165
  %v465 = vmul.f32 %v18, %v166
  %v466 = vmul.f32 %v19, %v167
  %v467 = vmul.f32 %v20, %v168
  %v468 = vmul.f32 %v21, %v169
  %v469 = vmul.f32 %v18, %v170
  %v470 = vmul.f32 %v19, %v171
  %v471 = vmul.f32 %v20, %v172
  %v472 = vmul.f32 %v21, %v173
  %v473 = vmul.f32 %v18, %v174
  %v474 = vmul.f32 %v19, %v175
  %v475 = vmul.f32 %v20, %v176
  %v476 = vmul.f32 %v21, %v177
  %v477 = vmul.f32 %v18, %v178
  %v478 = vmul.f32 %v19, %v179
  %v479 = vmul.f32 %v20, %v180
  %v480 = vmul.f32 %v21, %v181
  %v481 = vadd.f32 %v449, %v450
  %v482 = vadd.f32 %v481, %v451
  %v483 = vadd.f32 %v482, %v452
  %v484 = vrot.slane %v483, 4
  %v485 = vadd.f32 %v483, %v484
  %v486 = vrot.slane %v485, 2
  %v487 = vadd.f32 %v485, %v486
  %v488 = vrot.slane %v487, 1
  %v489 = vadd.f32 %v487, %v488
  %v490 = vadd.f32 %v453, %v454
  %v491 = vadd.f32 %v490, %v455
  %v492 = vadd.f32 %v491, %v456
  %v493 = vrot.slane %v492, 4
  %v494 = vadd.f32 %v492, %v493
  %v495 = vrot.slane %v494, 2
  %v496 = vadd.f32 %v494, %v495
  %v497 = vrot.slane %v496, 1
  %v498 = vadd.f32 %v496, %v497
  %v499 = vadd.f32 %v457, %v458
  %v500 = vadd.f32 %v499, %v459
  %v501 = vadd.f32 %v500, %v460
  %v502 = vrot.slane %v501, 4
  %v503 = vadd.f32 %v501, %v502
  %v504 = vrot.slane %v503, 2
  %v505 = vadd.f32 %v503, %v504
  %v506 = vrot.slane %v505, 1
  %v507 = vadd.f32 %v505, %v506
  %v508 = vadd.f32 %v461, %v462
  %v509 = vadd.f32 %v508, %v463
  %v510 = vadd.f32 %v509, %v464
  %v511 = vrot.slane %v510, 4
  %v512 = vadd.f32 %v510, %v511
  %v513 = vrot.slane %v512, 2
  %v514 = vadd.f32 %v512, %v513
  %v515 = vrot.slane %v514, 1
  %v516 = vadd.f32 %v514, %v515
  %v517 = vadd.f32 %v465, %v466
  %v518 = vadd.f32 %v517, %v467
  %v519 = vadd.f32 %v518, %v468
  %v520 = vrot.slane %v519, 4
  %v521 = vadd.f32 %v519, %v520
  %v522 = vrot.slane %v521, 2
  %v523 = vadd.f32 %v521, %v522
  %v524 = vrot.slane %v523, 1
  %v525 = vadd.f32 %v523, %v524
  %v526 = vadd.f32 %v469, %v470
  %v527 = vadd.f32 %v526, %v471
  %v528 = vadd.f32 %v527, %v472
  %v529 = vrot.slane %v528, 4
  %v530 = vadd.f32 %v528, %v529
  %v531 = vrot.slane %v530, 2
  %v532 = vadd.f32 %v530, %v531
  %v533 = vrot.slane %v532, 1
  %v534 = vadd.f32 %v532, %v533
  %v535 = vadd.f32 %v473, %v474
  %v536 = vadd.f32 %v535, %v475
  %v537 = vadd.f32 %v536, %v476
  %v538 = vrot.slane %v537, 4
  %v539 = vadd.f32 %v537, %v538
  %v540 = vrot.slane %v539, 2
  %v541 = vadd.f32 %v539, %v540
  %v542 = vrot.slane %v541, 1
  %v543 = vadd.f32 %v541, %v542
  %v544 = vadd.f32 %v477, %v478
  %v545 = vadd.f32 %v544, %v479
  %v546 = vadd.f32 %v545, %v480
  %v547 = vrot.slane %v546, 4
  %v548 = vadd.f32 %v546, %v547
  %v549 = vrot.slane %v548, 2
  %v550 = vadd.f32 %v548, %v549
  %v551 = vrot.slane %v550, 1
  %v552 = vadd.f32 %v550, %v551
  %v553 = vadd.f32 %v95, %v411
  %v554 = vmul.f32 %v489, 2.0
  %v555 = vmul.f32 %v498, 2.0
  %v556 = vmul.f32 %v507, 2.0
  %v557 = vmul.f32 %v516, 2.0
  %v558 = vmul.f32 %v525, 2.0
  %v559 = vmul.f32 %v534, 2.0
  %v560 = vmul.f32 %v543, 2.0
  %v561 = vmul.f32 %v552, 2.0
  %v570 = vsel %vm398, %v555, %v554
  %v571 = vsel %vm400, %v556, %v570
  %v572 = vsel %vm402, %v557, %v571
  %v573 = vsel %vm404, %v558, %v572
  %v574 = vsel %vm406, %v559, %v573
  %v575 = vsel %vm408, %v560, %v574
  %v576 = vsel %vm410, %v561, %v575
  %v578 = vsub.f32 %v553, %v576
  %v579 = vmax.f32 %v578, 1e-12
  %v580 = vrsqrt.pop %v579
  %v581 = vmul.f32 %v579, %v580
  %vm582 = vcmp.eq.f32.partialorder %v579, inf
  %v583 = vsel %vm582, %v579, %v581
  %vm584 = vcmp.eq.f32.partialorder %v579, 0.0
  %v585 = vand.u32 %v579, 2147483648
  %v586 = vsel %vm584, %v585, %v583
  %v587 = vmul.f32 %v586, 0.5
  %v588 = vtanh.pop %v587
  %v589 = vmul.f32 %v22, %v150
  %v590 = vmul.f32 %v23, %v151
  %v591 = vmul.f32 %v24, %v152
  %v592 = vmul.f32 %v25, %v153
  %v593 = vmul.f32 %v22, %v154
  %v594 = vmul.f32 %v23, %v155
  %v595 = vmul.f32 %v24, %v156
  %v596 = vmul.f32 %v25, %v157
  %v597 = vmul.f32 %v22, %v158
  %v598 = vmul.f32 %v23, %v159
  %v599 = vmul.f32 %v24, %v160
  %v600 = vmul.f32 %v25, %v161
  %v601 = vmul.f32 %v22, %v162
  %v602 = vmul.f32 %v23, %v163
  %v603 = vmul.f32 %v24, %v164
  %v604 = vmul.f32 %v25, %v165
  %v605 = vmul.f32 %v22, %v166
  %v606 = vmul.f32 %v23, %v167
  %v607 = vmul.f32 %v24, %v168
  %v608 = vmul.f32 %v25, %v169
  %v609 = vmul.f32 %v22, %v170
  %v610 = vmul.f32 %v23, %v171
  %v611 = vmul.f32 %v24, %v172
  %v612 = vmul.f32 %v25, %v173
  %v613 = vmul.f32 %v22, %v174
  %v614 = vmul.f32 %v23, %v175
  %v615 = vmul.f32 %v24, %v176
  %v616 = vmul.f32 %v25, %v177
  %v617 = vmul.f32 %v22, %v178
  %v618 = vmul.f32 %v23, %v179
  %v619 = vmul.f32 %v24, %v180
  %v620 = vmul.f32 %v25, %v181
  %v621 = vadd.f32 %v589, %v590
  %v622 = vadd.f32 %v621, %v591
  %v623 = vadd.f32 %v622, %v592
  %v624 = vrot.slane %v623, 4
  %v625 = vadd.f32 %v623, %v624
  %v626 = vrot.slane %v625, 2
  %v627 = vadd.f32 %v625, %v626
  %v628 = vrot.slane %v627, 1
  %v629 = vadd.f32 %v627, %v628
  %v630 = vadd.f32 %v593, %v594
  %v631 = vadd.f32 %v630, %v595
  %v632 = vadd.f32 %v631, %v596
  %v633 = vrot.slane %v632, 4
  %v634 = vadd.f32 %v632, %v633
  %v635 = vrot.slane %v634, 2
  %v636 = vadd.f32 %v634, %v635
  %v637 = vrot.slane %v636, 1
  %v638 = vadd.f32 %v636, %v637
  %v639 = vadd.f32 %v597, %v598
  %v640 = vadd.f32 %v639, %v599
  %v641 = vadd.f32 %v640, %v600
  %v642 = vrot.slane %v641, 4
  %v643 = vadd.f32 %v641, %v642
  %v644 = vrot.slane %v643, 2
  %v645 = vadd.f32 %v643, %v644
  %v646 = vrot.slane %v645, 1
  %v647 = vadd.f32 %v645, %v646
  %v648 = vadd.f32 %v601, %v602
  %v649 = vadd.f32 %v648, %v603
  %v650 = vadd.f32 %v649, %v604
  %v651 = vrot.slane %v650, 4
  %v652 = vadd.f32 %v650, %v651
  %v653 = vrot.slane %v652, 2
  %v654 = vadd.f32 %v652, %v653
  %v655 = vrot.slane %v654, 1
  %v656 = vadd.f32 %v654, %v655
  %v657 = vadd.f32 %v605, %v606
  %v658 = vadd.f32 %v657, %v607
  %v659 = vadd.f32 %v658, %v608
  %v660 = vrot.slane %v659, 4
  %v661 = vadd.f32 %v659, %v660
  %v662 = vrot.slane %v661, 2
  %v663 = vadd.f32 %v661, %v662
  %v664 = vrot.slane %v663, 1
  %v665 = vadd.f32 %v663, %v664
  %v666 = vadd.f32 %v609, %v610
  %v667 = vadd.f32 %v666, %v611
  %v668 = vadd.f32 %v667, %v612
  %v669 = vrot.slane %v668, 4
  %v670 = vadd.f32 %v668, %v669
  %v671 = vrot.slane %v670, 2
  %v672 = vadd.f32 %v670, %v671
  %v673 = vrot.slane %v672, 1
  %v674 = vadd.f32 %v672, %v673
  %v675 = vadd.f32 %v613, %v614
  %v676 = vadd.f32 %v675, %v615
  %v677 = vadd.f32 %v676, %v616
  %v678 = vrot.slane %v677, 4
  %v679 = vadd.f32 %v677, %v678
  %v680 = vrot.slane %v679, 2
  %v681 = vadd.f32 %v679, %v680
  %v682 = vrot.slane %v681, 1
  %v683 = vadd.f32 %v681, %v682
  %v684 = vadd.f32 %v617, %v618
  %v685 = vadd.f32 %v684, %v619
  %v686 = vadd.f32 %v685, %v620
  %v687 = vrot.slane %v686, 4
  %v688 = vadd.f32 %v686, %v687
  %v689 = vrot.slane %v688, 2
  %v690 = vadd.f32 %v688, %v689
  %v691 = vrot.slane %v690, 1
  %v692 = vadd.f32 %v690, %v691
  %v693 = vadd.f32 %v104, %v411
  %v694 = vmul.f32 %v629, 2.0
  %v695 = vmul.f32 %v638, 2.0
  %v696 = vmul.f32 %v647, 2.0
  %v697 = vmul.f32 %v656, 2.0
  %v698 = vmul.f32 %v665, 2.0
  %v699 = vmul.f32 %v674, 2.0
  %v700 = vmul.f32 %v683, 2.0
  %v701 = vmul.f32 %v692, 2.0
  %v710 = vsel %vm398, %v695, %v694
  %v711 = vsel %vm400, %v696, %v710
  %v712 = vsel %vm402, %v697, %v711
  %v713 = vsel %vm404, %v698, %v712
  %v714 = vsel %vm406, %v699, %v713
  %v715 = vsel %vm408, %v700, %v714
  %v716 = vsel %vm410, %v701, %v715
  %v718 = vsub.f32 %v693, %v716
  %v719 = vmax.f32 %v718, 1e-12
  %v720 = vrsqrt.pop %v719
  %v721 = vmul.f32 %v719, %v720
  %vm722 = vcmp.eq.f32.partialorder %v719, inf
  %v723 = vsel %vm722, %v719, %v721
  %vm724 = vcmp.eq.f32.partialorder %v719, 0.0
  %v725 = vand.u32 %v719, 2147483648
  %v726 = vsel %vm724, %v725, %v723
  %v727 = vmul.f32 %v726, 0.5
  %v728 = vtanh.pop %v727
  %v729 = vmul.f32 %v26, %v150
  %v730 = vmul.f32 %v27, %v151
  %v731 = vmul.f32 %v28, %v152
  %v732 = vmul.f32 %v29, %v153
  %v733 = vmul.f32 %v26, %v154
  %v734 = vmul.f32 %v27, %v155
  %v735 = vmul.f32 %v28, %v156
  %v736 = vmul.f32 %v29, %v157
  %v737 = vmul.f32 %v26, %v158
  %v738 = vmul.f32 %v27, %v159
  %v739 = vmul.f32 %v28, %v160
  %v740 = vmul.f32 %v29, %v161
  %v741 = vmul.f32 %v26, %v162
  %v742 = vmul.f32 %v27, %v163
  %v743 = vmul.f32 %v28, %v164
  %v744 = vmul.f32 %v29, %v165
  %v745 = vmul.f32 %v26, %v166
  %v746 = vmul.f32 %v27, %v167
  %v747 = vmul.f32 %v28, %v168
  %v748 = vmul.f32 %v29, %v169
  %v749 = vmul.f32 %v26, %v170
  %v750 = vmul.f32 %v27, %v171
  %v751 = vmul.f32 %v28, %v172
  %v752 = vmul.f32 %v29, %v173
  %v753 = vmul.f32 %v26, %v174
  %v754 = vmul.f32 %v27, %v175
  %v755 = vmul.f32 %v28, %v176
  %v756 = vmul.f32 %v29, %v177
  %v757 = vmul.f32 %v26, %v178
  %v758 = vmul.f32 %v27, %v179
  %v759 = vmul.f32 %v28, %v180
  %v760 = vmul.f32 %v29, %v181
  %v761 = vadd.f32 %v729, %v730
  %v762 = vadd.f32 %v761, %v731
  %v763 = vadd.f32 %v762, %v732
  %v764 = vrot.slane %v763, 4
  %v765 = vadd.f32 %v763, %v764
  %v766 = vrot.slane %v765, 2
  %v767 = vadd.f32 %v765, %v766
  %v768 = vrot.slane %v767, 1
  %v769 = vadd.f32 %v767, %v768
  %v770 = vadd.f32 %v733, %v734
  %v771 = vadd.f32 %v770, %v735
  %v772 = vadd.f32 %v771, %v736
  %v773 = vrot.slane %v772, 4
  %v774 = vadd.f32 %v772, %v773
  %v775 = vrot.slane %v774, 2
  %v776 = vadd.f32 %v774, %v775
  %v777 = vrot.slane %v776, 1
  %v778 = vadd.f32 %v776, %v777
  %v779 = vadd.f32 %v737, %v738
  %v780 = vadd.f32 %v779, %v739
  %v781 = vadd.f32 %v780, %v740
  %v782 = vrot.slane %v781, 4
  %v783 = vadd.f32 %v781, %v782
  %v784 = vrot.slane %v783, 2
  %v785 = vadd.f32 %v783, %v784
  %v786 = vrot.slane %v785, 1
  %v787 = vadd.f32 %v785, %v786
  %v788 = vadd.f32 %v741, %v742
  %v789 = vadd.f32 %v788, %v743
  %v790 = vadd.f32 %v789, %v744
  %v791 = vrot.slane %v790, 4
  %v792 = vadd.f32 %v790, %v791
  %v793 = vrot.slane %v792, 2
  %v794 = vadd.f32 %v792, %v793
  %v795 = vrot.slane %v794, 1
  %v796 = vadd.f32 %v794, %v795
  %v797 = vadd.f32 %v745, %v746
  %v798 = vadd.f32 %v797, %v747
  %v799 = vadd.f32 %v798, %v748
  %v800 = vrot.slane %v799, 4
  %v801 = vadd.f32 %v799, %v800
  %v802 = vrot.slane %v801, 2
  %v803 = vadd.f32 %v801, %v802
  %v804 = vrot.slane %v803, 1
  %v805 = vadd.f32 %v803, %v804
  %v806 = vadd.f32 %v749, %v750
  %v807 = vadd.f32 %v806, %v751
  %v808 = vadd.f32 %v807, %v752
  %v809 = vrot.slane %v808, 4
  %v810 = vadd.f32 %v808, %v809
  %v811 = vrot.slane %v810, 2
  %v812 = vadd.f32 %v810, %v811
  %v813 = vrot.slane %v812, 1
  %v814 = vadd.f32 %v812, %v813
  %v815 = vadd.f32 %v753, %v754
  %v816 = vadd.f32 %v815, %v755
  %v817 = vadd.f32 %v816, %v756
  %v818 = vrot.slane %v817, 4
  %v819 = vadd.f32 %v817, %v818
  %v820 = vrot.slane %v819, 2
  %v821 = vadd.f32 %v819, %v820
  %v822 = vrot.slane %v821, 1
  %v823 = vadd.f32 %v821, %v822
  %v824 = vadd.f32 %v757, %v758
  %v825 = vadd.f32 %v824, %v759
  %v826 = vadd.f32 %v825, %v760
  %v827 = vrot.slane %v826, 4
  %v828 = vadd.f32 %v826, %v827
  %v829 = vrot.slane %v828, 2
  %v830 = vadd.f32 %v828, %v829
  %v831 = vrot.slane %v830, 1
  %v832 = vadd.f32 %v830, %v831
  %v833 = vadd.f32 %v113, %v411
  %v834 = vmul.f32 %v769, 2.0
  %v835 = vmul.f32 %v778, 2.0
  %v836 = vmul.f32 %v787, 2.0
  %v837 = vmul.f32 %v796, 2.0
  %v838 = vmul.f32 %v805, 2.0
  %v839 = vmul.f32 %v814, 2.0
  %v840 = vmul.f32 %v823, 2.0
  %v841 = vmul.f32 %v832, 2.0
  %v850 = vsel %vm398, %v835, %v834
  %v851 = vsel %vm400, %v836, %v850
  %v852 = vsel %vm402, %v837, %v851
  %v853 = vsel %vm404, %v838, %v852
  %v854 = vsel %vm406, %v839, %v853
  %v855 = vsel %vm408, %v840, %v854
  %v856 = vsel %vm410, %v841, %v855
  %v858 = vsub.f32 %v833, %v856
  %v859 = vmax.f32 %v858, 1e-12
  %v860 = vrsqrt.pop %v859
  %v861 = vmul.f32 %v859, %v860
  %vm862 = vcmp.eq.f32.partialorder %v859, inf
  %v863 = vsel %vm862, %v859, %v861
  %vm864 = vcmp.eq.f32.partialorder %v859, 0.0
  %v865 = vand.u32 %v859, 2147483648
  %v866 = vsel %vm864, %v865, %v863
  %v867 = vmul.f32 %v866, 0.5
  %v868 = vtanh.pop %v867
  %v869 = vmul.f32 %v30, %v150
  %v870 = vmul.f32 %v31, %v151
  %v871 = vmul.f32 %v32, %v152
  %v872 = vmul.f32 %v33, %v153
  %v873 = vmul.f32 %v30, %v154
  %v874 = vmul.f32 %v31, %v155
  %v875 = vmul.f32 %v32, %v156
  %v876 = vmul.f32 %v33, %v157
  %v877 = vmul.f32 %v30, %v158
  %v878 = vmul.f32 %v31, %v159
  %v879 = vmul.f32 %v32, %v160
  %v880 = vmul.f32 %v33, %v161
  %v881 = vmul.f32 %v30, %v162
  %v882 = vmul.f32 %v31, %v163
  %v883 = vmul.f32 %v32, %v164
  %v884 = vmul.f32 %v33, %v165
  %v885 = vmul.f32 %v30, %v166
  %v886 = vmul.f32 %v31, %v167
  %v887 = vmul.f32 %v32, %v168
  %v888 = vmul.f32 %v33, %v169
  %v889 = vmul.f32 %v30, %v170
  %v890 = vmul.f32 %v31, %v171
  %v891 = vmul.f32 %v32, %v172
  %v892 = vmul.f32 %v33, %v173
  %v893 = vmul.f32 %v30, %v174
  %v894 = vmul.f32 %v31, %v175
  %v895 = vmul.f32 %v32, %v176
  %v896 = vmul.f32 %v33, %v177
  %v897 = vmul.f32 %v30, %v178
  %v898 = vmul.f32 %v31, %v179
  %v899 = vmul.f32 %v32, %v180
  %v900 = vmul.f32 %v33, %v181
  %v901 = vadd.f32 %v869, %v870
  %v902 = vadd.f32 %v901, %v871
  %v903 = vadd.f32 %v902, %v872
  %v904 = vrot.slane %v903, 4
  %v905 = vadd.f32 %v903, %v904
  %v906 = vrot.slane %v905, 2
  %v907 = vadd.f32 %v905, %v906
  %v908 = vrot.slane %v907, 1
  %v909 = vadd.f32 %v907, %v908
  %v910 = vadd.f32 %v873, %v874
  %v911 = vadd.f32 %v910, %v875
  %v912 = vadd.f32 %v911, %v876
  %v913 = vrot.slane %v912, 4
  %v914 = vadd.f32 %v912, %v913
  %v915 = vrot.slane %v914, 2
  %v916 = vadd.f32 %v914, %v915
  %v917 = vrot.slane %v916, 1
  %v918 = vadd.f32 %v916, %v917
  %v919 = vadd.f32 %v877, %v878
  %v920 = vadd.f32 %v919, %v879
  %v921 = vadd.f32 %v920, %v880
  %v922 = vrot.slane %v921, 4
  %v923 = vadd.f32 %v921, %v922
  %v924 = vrot.slane %v923, 2
  %v925 = vadd.f32 %v923, %v924
  %v926 = vrot.slane %v925, 1
  %v927 = vadd.f32 %v925, %v926
  %v928 = vadd.f32 %v881, %v882
  %v929 = vadd.f32 %v928, %v883
  %v930 = vadd.f32 %v929, %v884
  %v931 = vrot.slane %v930, 4
  %v932 = vadd.f32 %v930, %v931
  %v933 = vrot.slane %v932, 2
  %v934 = vadd.f32 %v932, %v933
  %v935 = vrot.slane %v934, 1
  %v936 = vadd.f32 %v934, %v935
  %v937 = vadd.f32 %v885, %v886
  %v938 = vadd.f32 %v937, %v887
  %v939 = vadd.f32 %v938, %v888
  %v940 = vrot.slane %v939, 4
  %v941 = vadd.f32 %v939, %v940
  %v942 = vrot.slane %v941, 2
  %v943 = vadd.f32 %v941, %v942
  %v944 = vrot.slane %v943, 1
  %v945 = vadd.f32 %v943, %v944
  %v946 = vadd.f32 %v889, %v890
  %v947 = vadd.f32 %v946, %v891
  %v948 = vadd.f32 %v947, %v892
  %v949 = vrot.slane %v948, 4
  %v950 = vadd.f32 %v948, %v949
  %v951 = vrot.slane %v950, 2
  %v952 = vadd.f32 %v950, %v951
  %v953 = vrot.slane %v952, 1
  %v954 = vadd.f32 %v952, %v953
  %v955 = vadd.f32 %v893, %v894
  %v956 = vadd.f32 %v955, %v895
  %v957 = vadd.f32 %v956, %v896
  %v958 = vrot.slane %v957, 4
  %v959 = vadd.f32 %v957, %v958
  %v960 = vrot.slane %v959, 2
  %v961 = vadd.f32 %v959, %v960
  %v962 = vrot.slane %v961, 1
  %v963 = vadd.f32 %v961, %v962
  %v964 = vadd.f32 %v897, %v898
  %v965 = vadd.f32 %v964, %v899
  %v966 = vadd.f32 %v965, %v900
  %v967 = vrot.slane %v966, 4
  %v968 = vadd.f32 %v966, %v967
  %v969 = vrot.slane %v968, 2
  %v970 = vadd.f32 %v968, %v969
  %v971 = vrot.slane %v970, 1
  %v972 = vadd.f32 %v970, %v971
  %v973 = vadd.f32 %v122, %v411
  %v974 = vmul.f32 %v909, 2.0
  %v975 = vmul.f32 %v918, 2.0
  %v976 = vmul.f32 %v927, 2.0
  %v977 = vmul.f32 %v936, 2.0
  %v978 = vmul.f32 %v945, 2.0
  %v979 = vmul.f32 %v954, 2.0
  %v980 = vmul.f32 %v963, 2.0
  %v981 = vmul.f32 %v972, 2.0
  %v990 = vsel %vm398, %v975, %v974
  %v991 = vsel %vm400, %v976, %v990
  %v992 = vsel %vm402, %v977, %v991
  %v993 = vsel %vm404, %v978, %v992
  %v994 = vsel %vm406, %v979, %v993
  %v995 = vsel %vm408, %v980, %v994
  %v996 = vsel %vm410, %v981, %v995
  %v998 = vsub.f32 %v973, %v996
  %v999 = vmax.f32 %v998, 1e-12
  %v1000 = vrsqrt.pop %v999
  %v1001 = vmul.f32 %v999, %v1000
  %vm1002 = vcmp.eq.f32.partialorder %v999, inf
  %v1003 = vsel %vm1002, %v999, %v1001
  %vm1004 = vcmp.eq.f32.partialorder %v999, 0.0
  %v1005 = vand.u32 %v999, 2147483648
  %v1006 = vsel %vm1004, %v1005, %v1003
  %v1007 = vmul.f32 %v1006, 0.5
  %v1008 = vtanh.pop %v1007
  %v1009 = vmul.f32 %v34, %v150
  %v1010 = vmul.f32 %v35, %v151
  %v1011 = vmul.f32 %v36, %v152
  %v1012 = vmul.f32 %v37, %v153
  %v1013 = vmul.f32 %v34, %v154
  %v1014 = vmul.f32 %v35, %v155
  %v1015 = vmul.f32 %v36, %v156
  %v1016 = vmul.f32 %v37, %v157
  %v1017 = vmul.f32 %v34, %v158
  %v1018 = vmul.f32 %v35, %v159
  %v1019 = vmul.f32 %v36, %v160
  %v1020 = vmul.f32 %v37, %v161
  %v1021 = vmul.f32 %v34, %v162
  %v1022 = vmul.f32 %v35, %v163
  %v1023 = vmul.f32 %v36, %v164
  %v1024 = vmul.f32 %v37, %v165
  %v1025 = vmul.f32 %v34, %v166
  %v1026 = vmul.f32 %v35, %v167
  %v1027 = vmul.f32 %v36, %v168
  %v1028 = vmul.f32 %v37, %v169
  %v1029 = vmul.f32 %v34, %v170
  %v1030 = vmul.f32 %v35, %v171
  %v1031 = vmul.f32 %v36, %v172
  %v1032 = vmul.f32 %v37, %v173
  %v1033 = vmul.f32 %v34, %v174
  %v1034 = vmul.f32 %v35, %v175
  %v1035 = vmul.f32 %v36, %v176
  %v1036 = vmul.f32 %v37, %v177
  %v1037 = vmul.f32 %v34, %v178
  %v1038 = vmul.f32 %v35, %v179
  %v1039 = vmul.f32 %v36, %v180
  %v1040 = vmul.f32 %v37, %v181
  %v1041 = vadd.f32 %v1009, %v1010
  %v1042 = vadd.f32 %v1041, %v1011
  %v1043 = vadd.f32 %v1042, %v1012
  %v1044 = vrot.slane %v1043, 4
  %v1045 = vadd.f32 %v1043, %v1044
  %v1046 = vrot.slane %v1045, 2
  %v1047 = vadd.f32 %v1045, %v1046
  %v1048 = vrot.slane %v1047, 1
  %v1049 = vadd.f32 %v1047, %v1048
  %v1050 = vadd.f32 %v1013, %v1014
  %v1051 = vadd.f32 %v1050, %v1015
  %v1052 = vadd.f32 %v1051, %v1016
  %v1053 = vrot.slane %v1052, 4
  %v1054 = vadd.f32 %v1052, %v1053
  %v1055 = vrot.slane %v1054, 2
  %v1056 = vadd.f32 %v1054, %v1055
  %v1057 = vrot.slane %v1056, 1
  %v1058 = vadd.f32 %v1056, %v1057
  %v1059 = vadd.f32 %v1017, %v1018
  %v1060 = vadd.f32 %v1059, %v1019
  %v1061 = vadd.f32 %v1060, %v1020
  %v1062 = vrot.slane %v1061, 4
  %v1063 = vadd.f32 %v1061, %v1062
  %v1064 = vrot.slane %v1063, 2
  %v1065 = vadd.f32 %v1063, %v1064
  %v1066 = vrot.slane %v1065, 1
  %v1067 = vadd.f32 %v1065, %v1066
  %v1068 = vadd.f32 %v1021, %v1022
  %v1069 = vadd.f32 %v1068, %v1023
  %v1070 = vadd.f32 %v1069, %v1024
  %v1071 = vrot.slane %v1070, 4
  %v1072 = vadd.f32 %v1070, %v1071
  %v1073 = vrot.slane %v1072, 2
  %v1074 = vadd.f32 %v1072, %v1073
  %v1075 = vrot.slane %v1074, 1
  %v1076 = vadd.f32 %v1074, %v1075
  %v1077 = vadd.f32 %v1025, %v1026
  %v1078 = vadd.f32 %v1077, %v1027
  %v1079 = vadd.f32 %v1078, %v1028
  %v1080 = vrot.slane %v1079, 4
  %v1081 = vadd.f32 %v1079, %v1080
  %v1082 = vrot.slane %v1081, 2
  %v1083 = vadd.f32 %v1081, %v1082
  %v1084 = vrot.slane %v1083, 1
  %v1085 = vadd.f32 %v1083, %v1084
  %v1086 = vadd.f32 %v1029, %v1030
  %v1087 = vadd.f32 %v1086, %v1031
  %v1088 = vadd.f32 %v1087, %v1032
  %v1089 = vrot.slane %v1088, 4
  %v1090 = vadd.f32 %v1088, %v1089
  %v1091 = vrot.slane %v1090, 2
  %v1092 = vadd.f32 %v1090, %v1091
  %v1093 = vrot.slane %v1092, 1
  %v1094 = vadd.f32 %v1092, %v1093
  %v1095 = vadd.f32 %v1033, %v1034
  %v1096 = vadd.f32 %v1095, %v1035
  %v1097 = vadd.f32 %v1096, %v1036
  %v1098 = vrot.slane %v1097, 4
  %v1099 = vadd.f32 %v1097, %v1098
  %v1100 = vrot.slane %v1099, 2
  %v1101 = vadd.f32 %v1099, %v1100
  %v1102 = vrot.slane %v1101, 1
  %v1103 = vadd.f32 %v1101, %v1102
  %v1104 = vadd.f32 %v1037, %v1038
  %v1105 = vadd.f32 %v1104, %v1039
  %v1106 = vadd.f32 %v1105, %v1040
  %v1107 = vrot.slane %v1106, 4
  %v1108 = vadd.f32 %v1106, %v1107
  %v1109 = vrot.slane %v1108, 2
  %v1110 = vadd.f32 %v1108, %v1109
  %v1111 = vrot.slane %v1110, 1
  %v1112 = vadd.f32 %v1110, %v1111
  %v1113 = vadd.f32 %v131, %v411
  %v1114 = vmul.f32 %v1049, 2.0
  %v1115 = vmul.f32 %v1058, 2.0
  %v1116 = vmul.f32 %v1067, 2.0
  %v1117 = vmul.f32 %v1076, 2.0
  %v1118 = vmul.f32 %v1085, 2.0
  %v1119 = vmul.f32 %v1094, 2.0
  %v1120 = vmul.f32 %v1103, 2.0
  %v1121 = vmul.f32 %v1112, 2.0
  %v1130 = vsel %vm398, %v1115, %v1114
  %v1131 = vsel %vm400, %v1116, %v1130
  %v1132 = vsel %vm402, %v1117, %v1131
  %v1133 = vsel %vm404, %v1118, %v1132
  %v1134 = vsel %vm406, %v1119, %v1133
  %v1135 = vsel %vm408, %v1120, %v1134
  %v1136 = vsel %vm410, %v1121, %v1135
  %v1138 = vsub.f32 %v1113, %v1136
  %v1139 = vmax.f32 %v1138, 1e-12
  %v1140 = vrsqrt.pop %v1139
  %v1141 = vmul.f32 %v1139, %v1140
  %vm1142 = vcmp.eq.f32.partialorder %v1139, inf
  %v1143 = vsel %vm1142, %v1139, %v1141
  %vm1144 = vcmp.eq.f32.partialorder %v1139, 0.0
  %v1145 = vand.u32 %v1139, 2147483648
  %v1146 = vsel %vm1144, %v1145, %v1143
  %v1147 = vmul.f32 %v1146, 0.5
  %v1148 = vtanh.pop %v1147
  %v1149 = vmul.f32 %v38, %v150
  %v1150 = vmul.f32 %v39, %v151
  %v1151 = vmul.f32 %v40, %v152
  %v1152 = vmul.f32 %v41, %v153
  %v1153 = vmul.f32 %v38, %v154
  %v1154 = vmul.f32 %v39, %v155
  %v1155 = vmul.f32 %v40, %v156
  %v1156 = vmul.f32 %v41, %v157
  %v1157 = vmul.f32 %v38, %v158
  %v1158 = vmul.f32 %v39, %v159
  %v1159 = vmul.f32 %v40, %v160
  %v1160 = vmul.f32 %v41, %v161
  %v1161 = vmul.f32 %v38, %v162
  %v1162 = vmul.f32 %v39, %v163
  %v1163 = vmul.f32 %v40, %v164
  %v1164 = vmul.f32 %v41, %v165
  %v1165 = vmul.f32 %v38, %v166
  %v1166 = vmul.f32 %v39, %v167
  %v1167 = vmul.f32 %v40, %v168
  %v1168 = vmul.f32 %v41, %v169
  %v1169 = vmul.f32 %v38, %v170
  %v1170 = vmul.f32 %v39, %v171
  %v1171 = vmul.f32 %v40, %v172
  %v1172 = vmul.f32 %v41, %v173
  %v1173 = vmul.f32 %v38, %v174
  %v1174 = vmul.f32 %v39, %v175
  %v1175 = vmul.f32 %v40, %v176
  %v1176 = vmul.f32 %v41, %v177
  %v1177 = vmul.f32 %v38, %v178
  %v1178 = vmul.f32 %v39, %v179
  %v1179 = vmul.f32 %v40, %v180
  %v1180 = vmul.f32 %v41, %v181
  %v1181 = vadd.f32 %v1149, %v1150
  %v1182 = vadd.f32 %v1181, %v1151
  %v1183 = vadd.f32 %v1182, %v1152
  %v1184 = vrot.slane %v1183, 4
  %v1185 = vadd.f32 %v1183, %v1184
  %v1186 = vrot.slane %v1185, 2
  %v1187 = vadd.f32 %v1185, %v1186
  %v1188 = vrot.slane %v1187, 1
  %v1189 = vadd.f32 %v1187, %v1188
  %v1190 = vadd.f32 %v1153, %v1154
  %v1191 = vadd.f32 %v1190, %v1155
  %v1192 = vadd.f32 %v1191, %v1156
  %v1193 = vrot.slane %v1192, 4
  %v1194 = vadd.f32 %v1192, %v1193
  %v1195 = vrot.slane %v1194, 2
  %v1196 = vadd.f32 %v1194, %v1195
  %v1197 = vrot.slane %v1196, 1
  %v1198 = vadd.f32 %v1196, %v1197
  %v1199 = vadd.f32 %v1157, %v1158
  %v1200 = vadd.f32 %v1199, %v1159
  %v1201 = vadd.f32 %v1200, %v1160
  %v1202 = vrot.slane %v1201, 4
  %v1203 = vadd.f32 %v1201, %v1202
  %v1204 = vrot.slane %v1203, 2
  %v1205 = vadd.f32 %v1203, %v1204
  %v1206 = vrot.slane %v1205, 1
  %v1207 = vadd.f32 %v1205, %v1206
  %v1208 = vadd.f32 %v1161, %v1162
  %v1209 = vadd.f32 %v1208, %v1163
  %v1210 = vadd.f32 %v1209, %v1164
  %v1211 = vrot.slane %v1210, 4
  %v1212 = vadd.f32 %v1210, %v1211
  %v1213 = vrot.slane %v1212, 2
  %v1214 = vadd.f32 %v1212, %v1213
  %v1215 = vrot.slane %v1214, 1
  %v1216 = vadd.f32 %v1214, %v1215
  %v1217 = vadd.f32 %v1165, %v1166
  %v1218 = vadd.f32 %v1217, %v1167
  %v1219 = vadd.f32 %v1218, %v1168
  %v1220 = vrot.slane %v1219, 4
  %v1221 = vadd.f32 %v1219, %v1220
  %v1222 = vrot.slane %v1221, 2
  %v1223 = vadd.f32 %v1221, %v1222
  %v1224 = vrot.slane %v1223, 1
  %v1225 = vadd.f32 %v1223, %v1224
  %v1226 = vadd.f32 %v1169, %v1170
  %v1227 = vadd.f32 %v1226, %v1171
  %v1228 = vadd.f32 %v1227, %v1172
  %v1229 = vrot.slane %v1228, 4
  %v1230 = vadd.f32 %v1228, %v1229
  %v1231 = vrot.slane %v1230, 2
  %v1232 = vadd.f32 %v1230, %v1231
  %v1233 = vrot.slane %v1232, 1
  %v1234 = vadd.f32 %v1232, %v1233
  %v1235 = vadd.f32 %v1173, %v1174
  %v1236 = vadd.f32 %v1235, %v1175
  %v1237 = vadd.f32 %v1236, %v1176
  %v1238 = vrot.slane %v1237, 4
  %v1239 = vadd.f32 %v1237, %v1238
  %v1240 = vrot.slane %v1239, 2
  %v1241 = vadd.f32 %v1239, %v1240
  %v1242 = vrot.slane %v1241, 1
  %v1243 = vadd.f32 %v1241, %v1242
  %v1244 = vadd.f32 %v1177, %v1178
  %v1245 = vadd.f32 %v1244, %v1179
  %v1246 = vadd.f32 %v1245, %v1180
  %v1247 = vrot.slane %v1246, 4
  %v1248 = vadd.f32 %v1246, %v1247
  %v1249 = vrot.slane %v1248, 2
  %v1250 = vadd.f32 %v1248, %v1249
  %v1251 = vrot.slane %v1250, 1
  %v1252 = vadd.f32 %v1250, %v1251
  %v1253 = vadd.f32 %v140, %v411
  %v1254 = vmul.f32 %v1189, 2.0
  %v1255 = vmul.f32 %v1198, 2.0
  %v1256 = vmul.f32 %v1207, 2.0
  %v1257 = vmul.f32 %v1216, 2.0
  %v1258 = vmul.f32 %v1225, 2.0
  %v1259 = vmul.f32 %v1234, 2.0
  %v1260 = vmul.f32 %v1243, 2.0
  %v1261 = vmul.f32 %v1252, 2.0
  %v1270 = vsel %vm398, %v1255, %v1254
  %v1271 = vsel %vm400, %v1256, %v1270
  %v1272 = vsel %vm402, %v1257, %v1271
  %v1273 = vsel %vm404, %v1258, %v1272
  %v1274 = vsel %vm406, %v1259, %v1273
  %v1275 = vsel %vm408, %v1260, %v1274
  %v1276 = vsel %vm410, %v1261, %v1275
  %v1278 = vsub.f32 %v1253, %v1276
  %v1279 = vmax.f32 %v1278, 1e-12
  %v1280 = vrsqrt.pop %v1279
  %v1281 = vmul.f32 %v1279, %v1280
  %vm1282 = vcmp.eq.f32.partialorder %v1279, inf
  %v1283 = vsel %vm1282, %v1279, %v1281
  %vm1284 = vcmp.eq.f32.partialorder %v1279, 0.0
  %v1285 = vand.u32 %v1279, 2147483648
  %v1286 = vsel %vm1284, %v1285, %v1283
  %v1287 = vmul.f32 %v1286, 0.5
  %v1288 = vtanh.pop %v1287
  %v1289 = vmul.f32 %v42, %v150
  %v1290 = vmul.f32 %v43, %v151
  %v1291 = vmul.f32 %v44, %v152
  %v1292 = vmul.f32 %v45, %v153
  %v1293 = vmul.f32 %v42, %v154
  %v1294 = vmul.f32 %v43, %v155
  %v1295 = vmul.f32 %v44, %v156
  %v1296 = vmul.f32 %v45, %v157
  %v1297 = vmul.f32 %v42, %v158
  %v1298 = vmul.f32 %v43, %v159
  %v1299 = vmul.f32 %v44, %v160
  %v1300 = vmul.f32 %v45, %v161
  %v1301 = vmul.f32 %v42, %v162
  %v1302 = vmul.f32 %v43, %v163
  %v1303 = vmul.f32 %v44, %v164
  %v1304 = vmul.f32 %v45, %v165
  %v1305 = vmul.f32 %v42, %v166
  %v1306 = vmul.f32 %v43, %v167
  %v1307 = vmul.f32 %v44, %v168
  %v1308 = vmul.f32 %v45, %v169
  %v1309 = vmul.f32 %v42, %v170
  %v1310 = vmul.f32 %v43, %v171
  %v1311 = vmul.f32 %v44, %v172
  %v1312 = vmul.f32 %v45, %v173
  %v1313 = vmul.f32 %v42, %v174
  %v1314 = vmul.f32 %v43, %v175
  %v1315 = vmul.f32 %v44, %v176
  %v1316 = vmul.f32 %v45, %v177
  %v1317 = vmul.f32 %v42, %v178
  %v1318 = vmul.f32 %v43, %v179
  %v1319 = vmul.f32 %v44, %v180
  %v1320 = vmul.f32 %v45, %v181
  %v1321 = vadd.f32 %v1289, %v1290
  %v1322 = vadd.f32 %v1321, %v1291
  %v1323 = vadd.f32 %v1322, %v1292
  %v1324 = vrot.slane %v1323, 4
  %v1325 = vadd.f32 %v1323, %v1324
  %v1326 = vrot.slane %v1325, 2
  %v1327 = vadd.f32 %v1325, %v1326
  %v1328 = vrot.slane %v1327, 1
  %v1329 = vadd.f32 %v1327, %v1328
  %v1330 = vadd.f32 %v1293, %v1294
  %v1331 = vadd.f32 %v1330, %v1295
  %v1332 = vadd.f32 %v1331, %v1296
  %v1333 = vrot.slane %v1332, 4
  %v1334 = vadd.f32 %v1332, %v1333
  %v1335 = vrot.slane %v1334, 2
  %v1336 = vadd.f32 %v1334, %v1335
  %v1337 = vrot.slane %v1336, 1
  %v1338 = vadd.f32 %v1336, %v1337
  %v1339 = vadd.f32 %v1297, %v1298
  %v1340 = vadd.f32 %v1339, %v1299
  %v1341 = vadd.f32 %v1340, %v1300
  %v1342 = vrot.slane %v1341, 4
  %v1343 = vadd.f32 %v1341, %v1342
  %v1344 = vrot.slane %v1343, 2
  %v1345 = vadd.f32 %v1343, %v1344
  %v1346 = vrot.slane %v1345, 1
  %v1347 = vadd.f32 %v1345, %v1346
  %v1348 = vadd.f32 %v1301, %v1302
  %v1349 = vadd.f32 %v1348, %v1303
  %v1350 = vadd.f32 %v1349, %v1304
  %v1351 = vrot.slane %v1350, 4
  %v1352 = vadd.f32 %v1350, %v1351
  %v1353 = vrot.slane %v1352, 2
  %v1354 = vadd.f32 %v1352, %v1353
  %v1355 = vrot.slane %v1354, 1
  %v1356 = vadd.f32 %v1354, %v1355
  %v1357 = vadd.f32 %v1305, %v1306
  %v1358 = vadd.f32 %v1357, %v1307
  %v1359 = vadd.f32 %v1358, %v1308
  %v1360 = vrot.slane %v1359, 4
  %v1361 = vadd.f32 %v1359, %v1360
  %v1362 = vrot.slane %v1361, 2
  %v1363 = vadd.f32 %v1361, %v1362
  %v1364 = vrot.slane %v1363, 1
  %v1365 = vadd.f32 %v1363, %v1364
  %v1366 = vadd.f32 %v1309, %v1310
  %v1367 = vadd.f32 %v1366, %v1311
  %v1368 = vadd.f32 %v1367, %v1312
  %v1369 = vrot.slane %v1368, 4
  %v1370 = vadd.f32 %v1368, %v1369
  %v1371 = vrot.slane %v1370, 2
  %v1372 = vadd.f32 %v1370, %v1371
  %v1373 = vrot.slane %v1372, 1
  %v1374 = vadd.f32 %v1372, %v1373
  %v1375 = vadd.f32 %v1313, %v1314
  %v1376 = vadd.f32 %v1375, %v1315
  %v1377 = vadd.f32 %v1376, %v1316
  %v1378 = vrot.slane %v1377, 4
  %v1379 = vadd.f32 %v1377, %v1378
  %v1380 = vrot.slane %v1379, 2
  %v1381 = vadd.f32 %v1379, %v1380
  %v1382 = vrot.slane %v1381, 1
  %v1383 = vadd.f32 %v1381, %v1382
  %v1384 = vadd.f32 %v1317, %v1318
  %v1385 = vadd.f32 %v1384, %v1319
  %v1386 = vadd.f32 %v1385, %v1320
  %v1387 = vrot.slane %v1386, 4
  %v1388 = vadd.f32 %v1386, %v1387
  %v1389 = vrot.slane %v1388, 2
  %v1390 = vadd.f32 %v1388, %v1389
  %v1391 = vrot.slane %v1390, 1
  %v1392 = vadd.f32 %v1390, %v1391
  %v1393 = vadd.f32 %v149, %v411
  %v1394 = vmul.f32 %v1329, 2.0
  %v1395 = vmul.f32 %v1338, 2.0
  %v1396 = vmul.f32 %v1347, 2.0
  %v1397 = vmul.f32 %v1356, 2.0
  %v1398 = vmul.f32 %v1365, 2.0
  %v1399 = vmul.f32 %v1374, 2.0
  %v1400 = vmul.f32 %v1383, 2.0
  %v1401 = vmul.f32 %v1392, 2.0
  %v1410 = vsel %vm398, %v1395, %v1394
  %v1411 = vsel %vm400, %v1396, %v1410
  %v1412 = vsel %vm402, %v1397, %v1411
  %v1413 = vsel %vm404, %v1398, %v1412
  %v1414 = vsel %vm406, %v1399, %v1413
  %v1415 = vsel %vm408, %v1400, %v1414
  %v1416 = vsel %vm410, %v1401, %v1415
  %v1418 = vsub.f32 %v1393, %v1416
  %v1419 = vmax.f32 %v1418, 1e-12
  %v1420 = vrsqrt.pop %v1419
  %v1421 = vmul.f32 %v1419, %v1420
  %vm1422 = vcmp.eq.f32.partialorder %v1419, inf
  %v1423 = vsel %vm1422, %v1419, %v1421
  %vm1424 = vcmp.eq.f32.partialorder %v1419, 0.0
  %v1425 = vand.u32 %v1419, 2147483648
  %v1426 = vsel %vm1424, %v1425, %v1423
  %v1427 = vmul.f32 %v1426, 0.5
  %v1428 = vtanh.pop %v1427
  %v1429 = vld [vmem:[%s2] sm:$0xff]
  %v1430 = vld [vmem:[%s2 + $0x8] sm:$0xff]
  %v1431 = vld [vmem:[%s2 + $0x10] sm:$0xff]
  %v1432 = vld [vmem:[%s2 + $0x18] sm:$0xff]
  %v1433 = vld [vmem:[%s2 + $0x20] sm:$0xff]
  %v1434 = vld [vmem:[%s2 + $0x28] sm:$0xff]
  %v1435 = vld [vmem:[%s2 + $0x30] sm:$0xff]
  %v1436 = vld [vmem:[%s2 + $0x38] sm:$0xff]
  %v1437 = vld [vmem:[%s2 + $0x40] sm:$0xff]
  %v1438 = vld [vmem:[%s2 + $0x48] sm:$0xff]
  %v1439 = vld [vmem:[%s2 + $0x50] sm:$0xff]
  %v1440 = vld [vmem:[%s2 + $0x58] sm:$0xff]
  %v1441 = vld [vmem:[%s2 + $0x60] sm:$0xff]
  %v1442 = vld [vmem:[%s2 + $0x68] sm:$0xff]
  %v1443 = vld [vmem:[%s2 + $0x70] sm:$0xff]
  %v1444 = vld [vmem:[%s2 + $0x78] sm:$0xff]
  %v1445 = vld [vmem:[%s2 + $0x80] sm:$0xff]
  %v1446 = vld [vmem:[%s2 + $0x88] sm:$0xff]
  %v1447 = vld [vmem:[%s2 + $0x90] sm:$0xff]
  %v1448 = vld [vmem:[%s2 + $0x98] sm:$0xff]
  %v1449 = vld [vmem:[%s2 + $0xa0] sm:$0xff]
  %v1450 = vld [vmem:[%s2 + $0xa8] sm:$0xff]
  %v1451 = vld [vmem:[%s2 + $0xb0] sm:$0xff]
  %v1452 = vld [vmem:[%s2 + $0xb8] sm:$0xff]
  %v1453 = vld [vmem:[%s2 + $0xc0] sm:$0xff]
  %v1454 = vld [vmem:[%s2 + $0xc8] sm:$0xff]
  %v1455 = vld [vmem:[%s2 + $0xd0] sm:$0xff]
  %v1456 = vld [vmem:[%s2 + $0xd8] sm:$0xff]
  %v1457 = vld [vmem:[%s2 + $0xe0] sm:$0xff]
  %v1458 = vld [vmem:[%s2 + $0xe8] sm:$0xff]
  %v1459 = vld [vmem:[%s2 + $0xf0] sm:$0xff]
  %v1460 = vld [vmem:[%s2 + $0xf8] sm:$0xff]
  %v1461 = vmul.f32 %v1429, %v1429
  %v1462 = vmul.f32 %v1430, %v1430
  %v1463 = vmul.f32 %v1431, %v1431
  %v1464 = vmul.f32 %v1432, %v1432
  %v1465 = vmul.f32 %v1433, %v1433
  %v1466 = vmul.f32 %v1434, %v1434
  %v1467 = vmul.f32 %v1435, %v1435
  %v1468 = vmul.f32 %v1436, %v1436
  %v1469 = vmul.f32 %v1437, %v1437
  %v1470 = vmul.f32 %v1438, %v1438
  %v1471 = vmul.f32 %v1439, %v1439
  %v1472 = vmul.f32 %v1440, %v1440
  %v1473 = vmul.f32 %v1441, %v1441
  %v1474 = vmul.f32 %v1442, %v1442
  %v1475 = vmul.f32 %v1443, %v1443
  %v1476 = vmul.f32 %v1444, %v1444
  %v1477 = vmul.f32 %v1445, %v1445
  %v1478 = vmul.f32 %v1446, %v1446
  %v1479 = vmul.f32 %v1447, %v1447
  %v1480 = vmul.f32 %v1448, %v1448
  %v1481 = vmul.f32 %v1449, %v1449
  %v1482 = vmul.f32 %v1450, %v1450
  %v1483 = vmul.f32 %v1451, %v1451
  %v1484 = vmul.f32 %v1452, %v1452
  %v1485 = vmul.f32 %v1453, %v1453
  %v1486 = vmul.f32 %v1454, %v1454
  %v1487 = vmul.f32 %v1455, %v1455
  %v1488 = vmul.f32 %v1456, %v1456
  %v1489 = vmul.f32 %v1457, %v1457
  %v1490 = vmul.f32 %v1458, %v1458
  %v1491 = vmul.f32 %v1459, %v1459
  %v1492 = vmul.f32 %v1460, %v1460
  %v1493 = vadd.f32 %v1461, %v1462
  %v1494 = vadd.f32 %v1493, %v1463
  %v1495 = vadd.f32 %v1494, %v1464
  %v1496 = vrot.slane %v1495, 4
  %v1497 = vadd.f32 %v1495, %v1496
  %v1498 = vrot.slane %v1497, 2
  %v1499 = vadd.f32 %v1497, %v1498
  %v1500 = vrot.slane %v1499, 1
  %v1501 = vadd.f32 %v1499, %v1500
  %v1502 = vadd.f32 %v1465, %v1466
  %v1503 = vadd.f32 %v1502, %v1467
  %v1504 = vadd.f32 %v1503, %v1468
  %v1505 = vrot.slane %v1504, 4
  %v1506 = vadd.f32 %v1504, %v1505
  %v1507 = vrot.slane %v1506, 2
  %v1508 = vadd.f32 %v1506, %v1507
  %v1509 = vrot.slane %v1508, 1
  %v1510 = vadd.f32 %v1508, %v1509
  %v1511 = vadd.f32 %v1469, %v1470
  %v1512 = vadd.f32 %v1511, %v1471
  %v1513 = vadd.f32 %v1512, %v1472
  %v1514 = vrot.slane %v1513, 4
  %v1515 = vadd.f32 %v1513, %v1514
  %v1516 = vrot.slane %v1515, 2
  %v1517 = vadd.f32 %v1515, %v1516
  %v1518 = vrot.slane %v1517, 1
  %v1519 = vadd.f32 %v1517, %v1518
  %v1520 = vadd.f32 %v1473, %v1474
  %v1521 = vadd.f32 %v1520, %v1475
  %v1522 = vadd.f32 %v1521, %v1476
  %v1523 = vrot.slane %v1522, 4
  %v1524 = vadd.f32 %v1522, %v1523
  %v1525 = vrot.slane %v1524, 2
  %v1526 = vadd.f32 %v1524, %v1525
  %v1527 = vrot.slane %v1526, 1
  %v1528 = vadd.f32 %v1526, %v1527
  %v1529 = vadd.f32 %v1477, %v1478
  %v1530 = vadd.f32 %v1529, %v1479
  %v1531 = vadd.f32 %v1530, %v1480
  %v1532 = vrot.slane %v1531, 4
  %v1533 = vadd.f32 %v1531, %v1532
  %v1534 = vrot.slane %v1533, 2
  %v1535 = vadd.f32 %v1533, %v1534
  %v1536 = vrot.slane %v1535, 1
  %v1537 = vadd.f32 %v1535, %v1536
  %v1538 = vadd.f32 %v1481, %v1482
  %v1539 = vadd.f32 %v1538, %v1483
  %v1540 = vadd.f32 %v1539, %v1484
  %v1541 = vrot.slane %v1540, 4
  %v1542 = vadd.f32 %v1540, %v1541
  %v1543 = vrot.slane %v1542, 2
  %v1544 = vadd.f32 %v1542, %v1543
  %v1545 = vrot.slane %v1544, 1
  %v1546 = vadd.f32 %v1544, %v1545
  %v1547 = vadd.f32 %v1485, %v1486
  %v1548 = vadd.f32 %v1547, %v1487
  %v1549 = vadd.f32 %v1548, %v1488
  %v1550 = vrot.slane %v1549, 4
  %v1551 = vadd.f32 %v1549, %v1550
  %v1552 = vrot.slane %v1551, 2
  %v1553 = vadd.f32 %v1551, %v1552
  %v1554 = vrot.slane %v1553, 1
  %v1555 = vadd.f32 %v1553, %v1554
  %v1556 = vadd.f32 %v1489, %v1490
  %v1557 = vadd.f32 %v1556, %v1491
  %v1558 = vadd.f32 %v1557, %v1492
  %v1559 = vrot.slane %v1558, 4
  %v1560 = vadd.f32 %v1558, %v1559
  %v1561 = vrot.slane %v1560, 2
  %v1562 = vadd.f32 %v1560, %v1561
  %v1563 = vrot.slane %v1562, 1
  %v1564 = vadd.f32 %v1562, %v1563
  %v1565 = vmul.f32 %v14, %v1429
  %v1566 = vmul.f32 %v15, %v1430
  %v1567 = vmul.f32 %v16, %v1431
  %v1568 = vmul.f32 %v17, %v1432
  %v1569 = vmul.f32 %v14, %v1433
  %v1570 = vmul.f32 %v15, %v1434
  %v1571 = vmul.f32 %v16, %v1435
  %v1572 = vmul.f32 %v17, %v1436
  %v1573 = vmul.f32 %v14, %v1437
  %v1574 = vmul.f32 %v15, %v1438
  %v1575 = vmul.f32 %v16, %v1439
  %v1576 = vmul.f32 %v17, %v1440
  %v1577 = vmul.f32 %v14, %v1441
  %v1578 = vmul.f32 %v15, %v1442
  %v1579 = vmul.f32 %v16, %v1443
  %v1580 = vmul.f32 %v17, %v1444
  %v1581 = vmul.f32 %v14, %v1445
  %v1582 = vmul.f32 %v15, %v1446
  %v1583 = vmul.f32 %v16, %v1447
  %v1584 = vmul.f32 %v17, %v1448
  %v1585 = vmul.f32 %v14, %v1449
  %v1586 = vmul.f32 %v15, %v1450
  %v1587 = vmul.f32 %v16, %v1451
  %v1588 = vmul.f32 %v17, %v1452
  %v1589 = vmul.f32 %v14, %v1453
  %v1590 = vmul.f32 %v15, %v1454
  %v1591 = vmul.f32 %v16, %v1455
  %v1592 = vmul.f32 %v17, %v1456
  %v1593 = vmul.f32 %v14, %v1457
  %v1594 = vmul.f32 %v15, %v1458
  %v1595 = vmul.f32 %v16, %v1459
  %v1596 = vmul.f32 %v17, %v1460
  %v1597 = vadd.f32 %v1565, %v1566
  %v1598 = vadd.f32 %v1597, %v1567
  %v1599 = vadd.f32 %v1598, %v1568
  %v1600 = vrot.slane %v1599, 4
  %v1601 = vadd.f32 %v1599, %v1600
  %v1602 = vrot.slane %v1601, 2
  %v1603 = vadd.f32 %v1601, %v1602
  %v1604 = vrot.slane %v1603, 1
  %v1605 = vadd.f32 %v1603, %v1604
  %v1606 = vadd.f32 %v1569, %v1570
  %v1607 = vadd.f32 %v1606, %v1571
  %v1608 = vadd.f32 %v1607, %v1572
  %v1609 = vrot.slane %v1608, 4
  %v1610 = vadd.f32 %v1608, %v1609
  %v1611 = vrot.slane %v1610, 2
  %v1612 = vadd.f32 %v1610, %v1611
  %v1613 = vrot.slane %v1612, 1
  %v1614 = vadd.f32 %v1612, %v1613
  %v1615 = vadd.f32 %v1573, %v1574
  %v1616 = vadd.f32 %v1615, %v1575
  %v1617 = vadd.f32 %v1616, %v1576
  %v1618 = vrot.slane %v1617, 4
  %v1619 = vadd.f32 %v1617, %v1618
  %v1620 = vrot.slane %v1619, 2
  %v1621 = vadd.f32 %v1619, %v1620
  %v1622 = vrot.slane %v1621, 1
  %v1623 = vadd.f32 %v1621, %v1622
  %v1624 = vadd.f32 %v1577, %v1578
  %v1625 = vadd.f32 %v1624, %v1579
  %v1626 = vadd.f32 %v1625, %v1580
  %v1627 = vrot.slane %v1626, 4
  %v1628 = vadd.f32 %v1626, %v1627
  %v1629 = vrot.slane %v1628, 2
  %v1630 = vadd.f32 %v1628, %v1629
  %v1631 = vrot.slane %v1630, 1
  %v1632 = vadd.f32 %v1630, %v1631
  %v1633 = vadd.f32 %v1581, %v1582
  %v1634 = vadd.f32 %v1633, %v1583
  %v1635 = vadd.f32 %v1634, %v1584
  %v1636 = vrot.slane %v1635, 4
  %v1637 = vadd.f32 %v1635, %v1636
  %v1638 = vrot.slane %v1637, 2
  %v1639 = vadd.f32 %v1637, %v1638
  %v1640 = vrot.slane %v1639, 1
  %v1641 = vadd.f32 %v1639, %v1640
  %v1642 = vadd.f32 %v1585, %v1586
  %v1643 = vadd.f32 %v1642, %v1587
  %v1644 = vadd.f32 %v1643, %v1588
  %v1645 = vrot.slane %v1644, 4
  %v1646 = vadd.f32 %v1644, %v1645
  %v1647 = vrot.slane %v1646, 2
  %v1648 = vadd.f32 %v1646, %v1647
  %v1649 = vrot.slane %v1648, 1
  %v1650 = vadd.f32 %v1648, %v1649
  %v1651 = vadd.f32 %v1589, %v1590
  %v1652 = vadd.f32 %v1651, %v1591
  %v1653 = vadd.f32 %v1652, %v1592
  %v1654 = vrot.slane %v1653, 4
  %v1655 = vadd.f32 %v1653, %v1654
  %v1656 = vrot.slane %v1655, 2
  %v1657 = vadd.f32 %v1655, %v1656
  %v1658 = vrot.slane %v1657, 1
  %v1659 = vadd.f32 %v1657, %v1658
  %v1660 = vadd.f32 %v1593, %v1594
  %v1661 = vadd.f32 %v1660, %v1595
  %v1662 = vadd.f32 %v1661, %v1596
  %v1663 = vrot.slane %v1662, 4
  %v1664 = vadd.f32 %v1662, %v1663
  %v1665 = vrot.slane %v1664, 2
  %v1666 = vadd.f32 %v1664, %v1665
  %v1667 = vrot.slane %v1666, 1
  %v1668 = vadd.f32 %v1666, %v1667
  %v1677 = vsel %vm398, %v1510, %v1501
  %v1678 = vsel %vm400, %v1519, %v1677
  %v1679 = vsel %vm402, %v1528, %v1678
  %v1680 = vsel %vm404, %v1537, %v1679
  %v1681 = vsel %vm406, %v1546, %v1680
  %v1682 = vsel %vm408, %v1555, %v1681
  %v1683 = vsel %vm410, %v1564, %v1682
  %v1685 = vadd.f32 %v86, %v1683
  %v1686 = vmul.f32 %v1605, 2.0
  %v1687 = vmul.f32 %v1614, 2.0
  %v1688 = vmul.f32 %v1623, 2.0
  %v1689 = vmul.f32 %v1632, 2.0
  %v1690 = vmul.f32 %v1641, 2.0
  %v1691 = vmul.f32 %v1650, 2.0
  %v1692 = vmul.f32 %v1659, 2.0
  %v1693 = vmul.f32 %v1668, 2.0
  %v1702 = vsel %vm398, %v1687, %v1686
  %v1703 = vsel %vm400, %v1688, %v1702
  %v1704 = vsel %vm402, %v1689, %v1703
  %v1705 = vsel %vm404, %v1690, %v1704
  %v1706 = vsel %vm406, %v1691, %v1705
  %v1707 = vsel %vm408, %v1692, %v1706
  %v1708 = vsel %vm410, %v1693, %v1707
  %v1710 = vsub.f32 %v1685, %v1708
  %v1711 = vmax.f32 %v1710, 1e-12
  %v1712 = vrsqrt.pop %v1711
  %v1713 = vmul.f32 %v1711, %v1712
  %vm1714 = vcmp.eq.f32.partialorder %v1711, inf
  %v1715 = vsel %vm1714, %v1711, %v1713
  %vm1716 = vcmp.eq.f32.partialorder %v1711, 0.0
  %v1717 = vand.u32 %v1711, 2147483648
  %v1718 = vsel %vm1716, %v1717, %v1715
  %v1719 = vmul.f32 %v1718, 0.5
  %v1720 = vtanh.pop %v1719
  %v1721 = vmul.f32 %v18, %v1429
  %v1722 = vmul.f32 %v19, %v1430
  %v1723 = vmul.f32 %v20, %v1431
  %v1724 = vmul.f32 %v21, %v1432
  %v1725 = vmul.f32 %v18, %v1433
  %v1726 = vmul.f32 %v19, %v1434
  %v1727 = vmul.f32 %v20, %v1435
  %v1728 = vmul.f32 %v21, %v1436
  %v1729 = vmul.f32 %v18, %v1437
  %v1730 = vmul.f32 %v19, %v1438
  %v1731 = vmul.f32 %v20, %v1439
  %v1732 = vmul.f32 %v21, %v1440
  %v1733 = vmul.f32 %v18, %v1441
  %v1734 = vmul.f32 %v19, %v1442
  %v1735 = vmul.f32 %v20, %v1443
  %v1736 = vmul.f32 %v21, %v1444
  %v1737 = vmul.f32 %v18, %v1445
  %v1738 = vmul.f32 %v19, %v1446
  %v1739 = vmul.f32 %v20, %v1447
  %v1740 = vmul.f32 %v21, %v1448
  %v1741 = vmul.f32 %v18, %v1449
  %v1742 = vmul.f32 %v19, %v1450
  %v1743 = vmul.f32 %v20, %v1451
  %v1744 = vmul.f32 %v21, %v1452
  %v1745 = vmul.f32 %v18, %v1453
  %v1746 = vmul.f32 %v19, %v1454
  %v1747 = vmul.f32 %v20, %v1455
  %v1748 = vmul.f32 %v21, %v1456
  %v1749 = vmul.f32 %v18, %v1457
  %v1750 = vmul.f32 %v19, %v1458
  %v1751 = vmul.f32 %v20, %v1459
  %v1752 = vmul.f32 %v21, %v1460
  %v1753 = vadd.f32 %v1721, %v1722
  %v1754 = vadd.f32 %v1753, %v1723
  %v1755 = vadd.f32 %v1754, %v1724
  %v1756 = vrot.slane %v1755, 4
  %v1757 = vadd.f32 %v1755, %v1756
  %v1758 = vrot.slane %v1757, 2
  %v1759 = vadd.f32 %v1757, %v1758
  %v1760 = vrot.slane %v1759, 1
  %v1761 = vadd.f32 %v1759, %v1760
  %v1762 = vadd.f32 %v1725, %v1726
  %v1763 = vadd.f32 %v1762, %v1727
  %v1764 = vadd.f32 %v1763, %v1728
  %v1765 = vrot.slane %v1764, 4
  %v1766 = vadd.f32 %v1764, %v1765
  %v1767 = vrot.slane %v1766, 2
  %v1768 = vadd.f32 %v1766, %v1767
  %v1769 = vrot.slane %v1768, 1
  %v1770 = vadd.f32 %v1768, %v1769
  %v1771 = vadd.f32 %v1729, %v1730
  %v1772 = vadd.f32 %v1771, %v1731
  %v1773 = vadd.f32 %v1772, %v1732
  %v1774 = vrot.slane %v1773, 4
  %v1775 = vadd.f32 %v1773, %v1774
  %v1776 = vrot.slane %v1775, 2
  %v1777 = vadd.f32 %v1775, %v1776
  %v1778 = vrot.slane %v1777, 1
  %v1779 = vadd.f32 %v1777, %v1778
  %v1780 = vadd.f32 %v1733, %v1734
  %v1781 = vadd.f32 %v1780, %v1735
  %v1782 = vadd.f32 %v1781, %v1736
  %v1783 = vrot.slane %v1782, 4
  %v1784 = vadd.f32 %v1782, %v1783
  %v1785 = vrot.slane %v1784, 2
  %v1786 = vadd.f32 %v1784, %v1785
  %v1787 = vrot.slane %v1786, 1
  %v1788 = vadd.f32 %v1786, %v1787
  %v1789 = vadd.f32 %v1737, %v1738
  %v1790 = vadd.f32 %v1789, %v1739
  %v1791 = vadd.f32 %v1790, %v1740
  %v1792 = vrot.slane %v1791, 4
  %v1793 = vadd.f32 %v1791, %v1792
  %v1794 = vrot.slane %v1793, 2
  %v1795 = vadd.f32 %v1793, %v1794
  %v1796 = vrot.slane %v1795, 1
  %v1797 = vadd.f32 %v1795, %v1796
  %v1798 = vadd.f32 %v1741, %v1742
  %v1799 = vadd.f32 %v1798, %v1743
  %v1800 = vadd.f32 %v1799, %v1744
  %v1801 = vrot.slane %v1800, 4
  %v1802 = vadd.f32 %v1800, %v1801
  %v1803 = vrot.slane %v1802, 2
  %v1804 = vadd.f32 %v1802, %v1803
  %v1805 = vrot.slane %v1804, 1
  %v1806 = vadd.f32 %v1804, %v1805
  %v1807 = vadd.f32 %v1745, %v1746
  %v1808 = vadd.f32 %v1807, %v1747
  %v1809 = vadd.f32 %v1808, %v1748
  %v1810 = vrot.slane %v1809, 4
  %v1811 = vadd.f32 %v1809, %v1810
  %v1812 = vrot.slane %v1811, 2
  %v1813 = vadd.f32 %v1811, %v1812
  %v1814 = vrot.slane %v1813, 1
  %v1815 = vadd.f32 %v1813, %v1814
  %v1816 = vadd.f32 %v1749, %v1750
  %v1817 = vadd.f32 %v1816, %v1751
  %v1818 = vadd.f32 %v1817, %v1752
  %v1819 = vrot.slane %v1818, 4
  %v1820 = vadd.f32 %v1818, %v1819
  %v1821 = vrot.slane %v1820, 2
  %v1822 = vadd.f32 %v1820, %v1821
  %v1823 = vrot.slane %v1822, 1
  %v1824 = vadd.f32 %v1822, %v1823
  %v1825 = vadd.f32 %v95, %v1683
  %v1826 = vmul.f32 %v1761, 2.0
  %v1827 = vmul.f32 %v1770, 2.0
  %v1828 = vmul.f32 %v1779, 2.0
  %v1829 = vmul.f32 %v1788, 2.0
  %v1830 = vmul.f32 %v1797, 2.0
  %v1831 = vmul.f32 %v1806, 2.0
  %v1832 = vmul.f32 %v1815, 2.0
  %v1833 = vmul.f32 %v1824, 2.0
  %v1842 = vsel %vm398, %v1827, %v1826
  %v1843 = vsel %vm400, %v1828, %v1842
  %v1844 = vsel %vm402, %v1829, %v1843
  %v1845 = vsel %vm404, %v1830, %v1844
  %v1846 = vsel %vm406, %v1831, %v1845
  %v1847 = vsel %vm408, %v1832, %v1846
  %v1848 = vsel %vm410, %v1833, %v1847
  %v1850 = vsub.f32 %v1825, %v1848
  %v1851 = vmax.f32 %v1850, 1e-12
  %v1852 = vrsqrt.pop %v1851
  %v1853 = vmul.f32 %v1851, %v1852
  %vm1854 = vcmp.eq.f32.partialorder %v1851, inf
  %v1855 = vsel %vm1854, %v1851, %v1853
  %vm1856 = vcmp.eq.f32.partialorder %v1851, 0.0
  %v1857 = vand.u32 %v1851, 2147483648
  %v1858 = vsel %vm1856, %v1857, %v1855
  %v1859 = vmul.f32 %v1858, 0.5
  %v1860 = vtanh.pop %v1859
  %v1861 = vmul.f32 %v22, %v1429
  %v1862 = vmul.f32 %v23, %v1430
  %v1863 = vmul.f32 %v24, %v1431
  %v1864 = vmul.f32 %v25, %v1432
  %v1865 = vmul.f32 %v22, %v1433
  %v1866 = vmul.f32 %v23, %v1434
  %v1867 = vmul.f32 %v24, %v1435
  %v1868 = vmul.f32 %v25, %v1436
  %v1869 = vmul.f32 %v22, %v1437
  %v1870 = vmul.f32 %v23, %v1438
  %v1871 = vmul.f32 %v24, %v1439
  %v1872 = vmul.f32 %v25, %v1440
  %v1873 = vmul.f32 %v22, %v1441
  %v1874 = vmul.f32 %v23, %v1442
  %v1875 = vmul.f32 %v24, %v1443
  %v1876 = vmul.f32 %v25, %v1444
  %v1877 = vmul.f32 %v22, %v1445
  %v1878 = vmul.f32 %v23, %v1446
  %v1879 = vmul.f32 %v24, %v1447
  %v1880 = vmul.f32 %v25, %v1448
  %v1881 = vmul.f32 %v22, %v1449
  %v1882 = vmul.f32 %v23, %v1450
  %v1883 = vmul.f32 %v24, %v1451
  %v1884 = vmul.f32 %v25, %v1452
  %v1885 = vmul.f32 %v22, %v1453
  %v1886 = vmul.f32 %v23, %v1454
  %v1887 = vmul.f32 %v24, %v1455
  %v1888 = vmul.f32 %v25, %v1456
  %v1889 = vmul.f32 %v22, %v1457
  %v1890 = vmul.f32 %v23, %v1458
  %v1891 = vmul.f32 %v24, %v1459
  %v1892 = vmul.f32 %v25, %v1460
  %v1893 = vadd.f32 %v1861, %v1862
  %v1894 = vadd.f32 %v1893, %v1863
  %v1895 = vadd.f32 %v1894, %v1864
  %v1896 = vrot.slane %v1895, 4
  %v1897 = vadd.f32 %v1895, %v1896
  %v1898 = vrot.slane %v1897, 2
  %v1899 = vadd.f32 %v1897, %v1898
  %v1900 = vrot.slane %v1899, 1
  %v1901 = vadd.f32 %v1899, %v1900
  %v1902 = vadd.f32 %v1865, %v1866
  %v1903 = vadd.f32 %v1902, %v1867
  %v1904 = vadd.f32 %v1903, %v1868
  %v1905 = vrot.slane %v1904, 4
  %v1906 = vadd.f32 %v1904, %v1905
  %v1907 = vrot.slane %v1906, 2
  %v1908 = vadd.f32 %v1906, %v1907
  %v1909 = vrot.slane %v1908, 1
  %v1910 = vadd.f32 %v1908, %v1909
  %v1911 = vadd.f32 %v1869, %v1870
  %v1912 = vadd.f32 %v1911, %v1871
  %v1913 = vadd.f32 %v1912, %v1872
  %v1914 = vrot.slane %v1913, 4
  %v1915 = vadd.f32 %v1913, %v1914
  %v1916 = vrot.slane %v1915, 2
  %v1917 = vadd.f32 %v1915, %v1916
  %v1918 = vrot.slane %v1917, 1
  %v1919 = vadd.f32 %v1917, %v1918
  %v1920 = vadd.f32 %v1873, %v1874
  %v1921 = vadd.f32 %v1920, %v1875
  %v1922 = vadd.f32 %v1921, %v1876
  %v1923 = vrot.slane %v1922, 4
  %v1924 = vadd.f32 %v1922, %v1923
  %v1925 = vrot.slane %v1924, 2
  %v1926 = vadd.f32 %v1924, %v1925
  %v1927 = vrot.slane %v1926, 1
  %v1928 = vadd.f32 %v1926, %v1927
  %v1929 = vadd.f32 %v1877, %v1878
  %v1930 = vadd.f32 %v1929, %v1879
  %v1931 = vadd.f32 %v1930, %v1880
  %v1932 = vrot.slane %v1931, 4
  %v1933 = vadd.f32 %v1931, %v1932
  %v1934 = vrot.slane %v1933, 2
  %v1935 = vadd.f32 %v1933, %v1934
  %v1936 = vrot.slane %v1935, 1
  %v1937 = vadd.f32 %v1935, %v1936
  %v1938 = vadd.f32 %v1881, %v1882
  %v1939 = vadd.f32 %v1938, %v1883
  %v1940 = vadd.f32 %v1939, %v1884
  %v1941 = vrot.slane %v1940, 4
  %v1942 = vadd.f32 %v1940, %v1941
  %v1943 = vrot.slane %v1942, 2
  %v1944 = vadd.f32 %v1942, %v1943
  %v1945 = vrot.slane %v1944, 1
  %v1946 = vadd.f32 %v1944, %v1945
  %v1947 = vadd.f32 %v1885, %v1886
  %v1948 = vadd.f32 %v1947, %v1887
  %v1949 = vadd.f32 %v1948, %v1888
  %v1950 = vrot.slane %v1949, 4
  %v1951 = vadd.f32 %v1949, %v1950
  %v1952 = vrot.slane %v1951, 2
  %v1953 = vadd.f32 %v1951, %v1952
  %v1954 = vrot.slane %v1953, 1
  %v1955 = vadd.f32 %v1953, %v1954
  %v1956 = vadd.f32 %v1889, %v1890
  %v1957 = vadd.f32 %v1956, %v1891
  %v1958 = vadd.f32 %v1957, %v1892
  %v1959 = vrot.slane %v1958, 4
  %v1960 = vadd.f32 %v1958, %v1959
  %v1961 = vrot.slane %v1960, 2
  %v1962 = vadd.f32 %v1960, %v1961
  %v1963 = vrot.slane %v1962, 1
  %v1964 = vadd.f32 %v1962, %v1963
  %v1965 = vadd.f32 %v104, %v1683
  %v1966 = vmul.f32 %v1901, 2.0
  %v1967 = vmul.f32 %v1910, 2.0
  %v1968 = vmul.f32 %v1919, 2.0
  %v1969 = vmul.f32 %v1928, 2.0
  %v1970 = vmul.f32 %v1937, 2.0
  %v1971 = vmul.f32 %v1946, 2.0
  %v1972 = vmul.f32 %v1955, 2.0
  %v1973 = vmul.f32 %v1964, 2.0
  %v1982 = vsel %vm398, %v1967, %v1966
  %v1983 = vsel %vm400, %v1968, %v1982
  %v1984 = vsel %vm402, %v1969, %v1983
  %v1985 = vsel %vm404, %v1970, %v1984
  %v1986 = vsel %vm406, %v1971, %v1985
  %v1987 = vsel %vm408, %v1972, %v1986
  %v1988 = vsel %vm410, %v1973, %v1987
  %v1990 = vsub.f32 %v1965, %v1988
  %v1991 = vmax.f32 %v1990, 1e-12
  %v1992 = vrsqrt.pop %v1991
  %v1993 = vmul.f32 %v1991, %v1992
  %vm1994 = vcmp.eq.f32.partialorder %v1991, inf
  %v1995 = vsel %vm1994, %v1991, %v1993
  %vm1996 = vcmp.eq.f32.partialorder %v1991, 0.0
  %v1997 = vand.u32 %v1991, 2147483648
  %v1998 = vsel %vm1996, %v1997, %v1995
  %v1999 = vmul.f32 %v1998, 0.5
  %v2000 = vtanh.pop %v1999
  %v2001 = vmul.f32 %v26, %v1429
  %v2002 = vmul.f32 %v27, %v1430
  %v2003 = vmul.f32 %v28, %v1431
  %v2004 = vmul.f32 %v29, %v1432
  %v2005 = vmul.f32 %v26, %v1433
  %v2006 = vmul.f32 %v27, %v1434
  %v2007 = vmul.f32 %v28, %v1435
  %v2008 = vmul.f32 %v29, %v1436
  %v2009 = vmul.f32 %v26, %v1437
  %v2010 = vmul.f32 %v27, %v1438
  %v2011 = vmul.f32 %v28, %v1439
  %v2012 = vmul.f32 %v29, %v1440
  %v2013 = vmul.f32 %v26, %v1441
  %v2014 = vmul.f32 %v27, %v1442
  %v2015 = vmul.f32 %v28, %v1443
  %v2016 = vmul.f32 %v29, %v1444
  %v2017 = vmul.f32 %v26, %v1445
  %v2018 = vmul.f32 %v27, %v1446
  %v2019 = vmul.f32 %v28, %v1447
  %v2020 = vmul.f32 %v29, %v1448
  %v2021 = vmul.f32 %v26, %v1449
  %v2022 = vmul.f32 %v27, %v1450
  %v2023 = vmul.f32 %v28, %v1451
  %v2024 = vmul.f32 %v29, %v1452
  %v2025 = vmul.f32 %v26, %v1453
  %v2026 = vmul.f32 %v27, %v1454
  %v2027 = vmul.f32 %v28, %v1455
  %v2028 = vmul.f32 %v29, %v1456
  %v2029 = vmul.f32 %v26, %v1457
  %v2030 = vmul.f32 %v27, %v1458
  %v2031 = vmul.f32 %v28, %v1459
  %v2032 = vmul.f32 %v29, %v1460
  %v2033 = vadd.f32 %v2001, %v2002
  %v2034 = vadd.f32 %v2033, %v2003
  %v2035 = vadd.f32 %v2034, %v2004
  %v2036 = vrot.slane %v2035, 4
  %v2037 = vadd.f32 %v2035, %v2036
  %v2038 = vrot.slane %v2037, 2
  %v2039 = vadd.f32 %v2037, %v2038
  %v2040 = vrot.slane %v2039, 1
  %v2041 = vadd.f32 %v2039, %v2040
  %v2042 = vadd.f32 %v2005, %v2006
  %v2043 = vadd.f32 %v2042, %v2007
  %v2044 = vadd.f32 %v2043, %v2008
  %v2045 = vrot.slane %v2044, 4
  %v2046 = vadd.f32 %v2044, %v2045
  %v2047 = vrot.slane %v2046, 2
  %v2048 = vadd.f32 %v2046, %v2047
  %v2049 = vrot.slane %v2048, 1
  %v2050 = vadd.f32 %v2048, %v2049
  %v2051 = vadd.f32 %v2009, %v2010
  %v2052 = vadd.f32 %v2051, %v2011
  %v2053 = vadd.f32 %v2052, %v2012
  %v2054 = vrot.slane %v2053, 4
  %v2055 = vadd.f32 %v2053, %v2054
  %v2056 = vrot.slane %v2055, 2
  %v2057 = vadd.f32 %v2055, %v2056
  %v2058 = vrot.slane %v2057, 1
  %v2059 = vadd.f32 %v2057, %v2058
  %v2060 = vadd.f32 %v2013, %v2014
  %v2061 = vadd.f32 %v2060, %v2015
  %v2062 = vadd.f32 %v2061, %v2016
  %v2063 = vrot.slane %v2062, 4
  %v2064 = vadd.f32 %v2062, %v2063
  %v2065 = vrot.slane %v2064, 2
  %v2066 = vadd.f32 %v2064, %v2065
  %v2067 = vrot.slane %v2066, 1
  %v2068 = vadd.f32 %v2066, %v2067
  %v2069 = vadd.f32 %v2017, %v2018
  %v2070 = vadd.f32 %v2069, %v2019
  %v2071 = vadd.f32 %v2070, %v2020
  %v2072 = vrot.slane %v2071, 4
  %v2073 = vadd.f32 %v2071, %v2072
  %v2074 = vrot.slane %v2073, 2
  %v2075 = vadd.f32 %v2073, %v2074
  %v2076 = vrot.slane %v2075, 1
  %v2077 = vadd.f32 %v2075, %v2076
  %v2078 = vadd.f32 %v2021, %v2022
  %v2079 = vadd.f32 %v2078, %v2023
  %v2080 = vadd.f32 %v2079, %v2024
  %v2081 = vrot.slane %v2080, 4
  %v2082 = vadd.f32 %v2080, %v2081
  %v2083 = vrot.slane %v2082, 2
  %v2084 = vadd.f32 %v2082, %v2083
  %v2085 = vrot.slane %v2084, 1
  %v2086 = vadd.f32 %v2084, %v2085
  %v2087 = vadd.f32 %v2025, %v2026
  %v2088 = vadd.f32 %v2087, %v2027
  %v2089 = vadd.f32 %v2088, %v2028
  %v2090 = vrot.slane %v2089, 4
  %v2091 = vadd.f32 %v2089, %v2090
  %v2092 = vrot.slane %v2091, 2
  %v2093 = vadd.f32 %v2091, %v2092
  %v2094 = vrot.slane %v2093, 1
  %v2095 = vadd.f32 %v2093, %v2094
  %v2096 = vadd.f32 %v2029, %v2030
  %v2097 = vadd.f32 %v2096, %v2031
  %v2098 = vadd.f32 %v2097, %v2032
  %v2099 = vrot.slane %v2098, 4
  %v2100 = vadd.f32 %v2098, %v2099
  %v2101 = vrot.slane %v2100, 2
  %v2102 = vadd.f32 %v2100, %v2101
  %v2103 = vrot.slane %v2102, 1
  %v2104 = vadd.f32 %v2102, %v2103
  %v2105 = vadd.f32 %v113, %v1683
  %v2106 = vmul.f32 %v2041, 2.0
  %v2107 = vmul.f32 %v2050, 2.0
  %v2108 = vmul.f32 %v2059, 2.0
  %v2109 = vmul.f32 %v2068, 2.0
  %v2110 = vmul.f32 %v2077, 2.0
  %v2111 = vmul.f32 %v2086, 2.0
  %v2112 = vmul.f32 %v2095, 2.0
  %v2113 = vmul.f32 %v2104, 2.0
  %v2122 = vsel %vm398, %v2107, %v2106
  %v2123 = vsel %vm400, %v2108, %v2122
  %v2124 = vsel %vm402, %v2109, %v2123
  %v2125 = vsel %vm404, %v2110, %v2124
  %v2126 = vsel %vm406, %v2111, %v2125
  %v2127 = vsel %vm408, %v2112, %v2126
  %v2128 = vsel %vm410, %v2113, %v2127
  %v2130 = vsub.f32 %v2105, %v2128
  %v2131 = vmax.f32 %v2130, 1e-12
  %v2132 = vrsqrt.pop %v2131
  %v2133 = vmul.f32 %v2131, %v2132
  %vm2134 = vcmp.eq.f32.partialorder %v2131, inf
  %v2135 = vsel %vm2134, %v2131, %v2133
  %vm2136 = vcmp.eq.f32.partialorder %v2131, 0.0
  %v2137 = vand.u32 %v2131, 2147483648
  %v2138 = vsel %vm2136, %v2137, %v2135
  %v2139 = vmul.f32 %v2138, 0.5
  %v2140 = vtanh.pop %v2139
  %v2141 = vmul.f32 %v30, %v1429
  %v2142 = vmul.f32 %v31, %v1430
  %v2143 = vmul.f32 %v32, %v1431
  %v2144 = vmul.f32 %v33, %v1432
  %v2145 = vmul.f32 %v30, %v1433
  %v2146 = vmul.f32 %v31, %v1434
  %v2147 = vmul.f32 %v32, %v1435
  %v2148 = vmul.f32 %v33, %v1436
  %v2149 = vmul.f32 %v30, %v1437
  %v2150 = vmul.f32 %v31, %v1438
  %v2151 = vmul.f32 %v32, %v1439
  %v2152 = vmul.f32 %v33, %v1440
  %v2153 = vmul.f32 %v30, %v1441
  %v2154 = vmul.f32 %v31, %v1442
  %v2155 = vmul.f32 %v32, %v1443
  %v2156 = vmul.f32 %v33, %v1444
  %v2157 = vmul.f32 %v30, %v1445
  %v2158 = vmul.f32 %v31, %v1446
  %v2159 = vmul.f32 %v32, %v1447
  %v2160 = vmul.f32 %v33, %v1448
  %v2161 = vmul.f32 %v30, %v1449
  %v2162 = vmul.f32 %v31, %v1450
  %v2163 = vmul.f32 %v32, %v1451
  %v2164 = vmul.f32 %v33, %v1452
  %v2165 = vmul.f32 %v30, %v1453
  %v2166 = vmul.f32 %v31, %v1454
  %v2167 = vmul.f32 %v32, %v1455
  %v2168 = vmul.f32 %v33, %v1456
  %v2169 = vmul.f32 %v30, %v1457
  %v2170 = vmul.f32 %v31, %v1458
  %v2171 = vmul.f32 %v32, %v1459
  %v2172 = vmul.f32 %v33, %v1460
  %v2173 = vadd.f32 %v2141, %v2142
  %v2174 = vadd.f32 %v2173, %v2143
  %v2175 = vadd.f32 %v2174, %v2144
  %v2176 = vrot.slane %v2175, 4
  %v2177 = vadd.f32 %v2175, %v2176
  %v2178 = vrot.slane %v2177, 2
  %v2179 = vadd.f32 %v2177, %v2178
  %v2180 = vrot.slane %v2179, 1
  %v2181 = vadd.f32 %v2179, %v2180
  %v2182 = vadd.f32 %v2145, %v2146
  %v2183 = vadd.f32 %v2182, %v2147
  %v2184 = vadd.f32 %v2183, %v2148
  %v2185 = vrot.slane %v2184, 4
  %v2186 = vadd.f32 %v2184, %v2185
  %v2187 = vrot.slane %v2186, 2
  %v2188 = vadd.f32 %v2186, %v2187
  %v2189 = vrot.slane %v2188, 1
  %v2190 = vadd.f32 %v2188, %v2189
  %v2191 = vadd.f32 %v2149, %v2150
  %v2192 = vadd.f32 %v2191, %v2151
  %v2193 = vadd.f32 %v2192, %v2152
  %v2194 = vrot.slane %v2193, 4
  %v2195 = vadd.f32 %v2193, %v2194
  %v2196 = vrot.slane %v2195, 2
  %v2197 = vadd.f32 %v2195, %v2196
  %v2198 = vrot.slane %v2197, 1
  %v2199 = vadd.f32 %v2197, %v2198
  %v2200 = vadd.f32 %v2153, %v2154
  %v2201 = vadd.f32 %v2200, %v2155
  %v2202 = vadd.f32 %v2201, %v2156
  %v2203 = vrot.slane %v2202, 4
  %v2204 = vadd.f32 %v2202, %v2203
  %v2205 = vrot.slane %v2204, 2
  %v2206 = vadd.f32 %v2204, %v2205
  %v2207 = vrot.slane %v2206, 1
  %v2208 = vadd.f32 %v2206, %v2207
  %v2209 = vadd.f32 %v2157, %v2158
  %v2210 = vadd.f32 %v2209, %v2159
  %v2211 = vadd.f32 %v2210, %v2160
  %v2212 = vrot.slane %v2211, 4
  %v2213 = vadd.f32 %v2211, %v2212
  %v2214 = vrot.slane %v2213, 2
  %v2215 = vadd.f32 %v2213, %v2214
  %v2216 = vrot.slane %v2215, 1
  %v2217 = vadd.f32 %v2215, %v2216
  %v2218 = vadd.f32 %v2161, %v2162
  %v2219 = vadd.f32 %v2218, %v2163
  %v2220 = vadd.f32 %v2219, %v2164
  %v2221 = vrot.slane %v2220, 4
  %v2222 = vadd.f32 %v2220, %v2221
  %v2223 = vrot.slane %v2222, 2
  %v2224 = vadd.f32 %v2222, %v2223
  %v2225 = vrot.slane %v2224, 1
  %v2226 = vadd.f32 %v2224, %v2225
  %v2227 = vadd.f32 %v2165, %v2166
  %v2228 = vadd.f32 %v2227, %v2167
  %v2229 = vadd.f32 %v2228, %v2168
  %v2230 = vrot.slane %v2229, 4
  %v2231 = vadd.f32 %v2229, %v2230
  %v2232 = vrot.slane %v2231, 2
  %v2233 = vadd.f32 %v2231, %v2232
  %v2234 = vrot.slane %v2233, 1
  %v2235 = vadd.f32 %v2233, %v2234
  %v2236 = vadd.f32 %v2169, %v2170
  %v2237 = vadd.f32 %v2236, %v2171
  %v2238 = vadd.f32 %v2237, %v2172
  %v2239 = vrot.slane %v2238, 4
  %v2240 = vadd.f32 %v2238, %v2239
  %v2241 = vrot.slane %v2240, 2
  %v2242 = vadd.f32 %v2240, %v2241
  %v2243 = vrot.slane %v2242, 1
  %v2244 = vadd.f32 %v2242, %v2243
  %v2245 = vadd.f32 %v122, %v1683
  %v2246 = vmul.f32 %v2181, 2.0
  %v2247 = vmul.f32 %v2190, 2.0
  %v2248 = vmul.f32 %v2199, 2.0
  %v2249 = vmul.f32 %v2208, 2.0
  %v2250 = vmul.f32 %v2217, 2.0
  %v2251 = vmul.f32 %v2226, 2.0
  %v2252 = vmul.f32 %v2235, 2.0
  %v2253 = vmul.f32 %v2244, 2.0
  %v2262 = vsel %vm398, %v2247, %v2246
  %v2263 = vsel %vm400, %v2248, %v2262
  %v2264 = vsel %vm402, %v2249, %v2263
  %v2265 = vsel %vm404, %v2250, %v2264
  %v2266 = vsel %vm406, %v2251, %v2265
  %v2267 = vsel %vm408, %v2252, %v2266
  %v2268 = vsel %vm410, %v2253, %v2267
  %v2270 = vsub.f32 %v2245, %v2268
  %v2271 = vmax.f32 %v2270, 1e-12
  %v2272 = vrsqrt.pop %v2271
  %v2273 = vmul.f32 %v2271, %v2272
  %vm2274 = vcmp.eq.f32.partialorder %v2271, inf
  %v2275 = vsel %vm2274, %v2271, %v2273
  %vm2276 = vcmp.eq.f32.partialorder %v2271, 0.0
  %v2277 = vand.u32 %v2271, 2147483648
  %v2278 = vsel %vm2276, %v2277, %v2275
  %v2279 = vmul.f32 %v2278, 0.5
  %v2280 = vtanh.pop %v2279
  %v2281 = vmul.f32 %v34, %v1429
  %v2282 = vmul.f32 %v35, %v1430
  %v2283 = vmul.f32 %v36, %v1431
  %v2284 = vmul.f32 %v37, %v1432
  %v2285 = vmul.f32 %v34, %v1433
  %v2286 = vmul.f32 %v35, %v1434
  %v2287 = vmul.f32 %v36, %v1435
  %v2288 = vmul.f32 %v37, %v1436
  %v2289 = vmul.f32 %v34, %v1437
  %v2290 = vmul.f32 %v35, %v1438
  %v2291 = vmul.f32 %v36, %v1439
  %v2292 = vmul.f32 %v37, %v1440
  %v2293 = vmul.f32 %v34, %v1441
  %v2294 = vmul.f32 %v35, %v1442
  %v2295 = vmul.f32 %v36, %v1443
  %v2296 = vmul.f32 %v37, %v1444
  %v2297 = vmul.f32 %v34, %v1445
  %v2298 = vmul.f32 %v35, %v1446
  %v2299 = vmul.f32 %v36, %v1447
  %v2300 = vmul.f32 %v37, %v1448
  %v2301 = vmul.f32 %v34, %v1449
  %v2302 = vmul.f32 %v35, %v1450
  %v2303 = vmul.f32 %v36, %v1451
  %v2304 = vmul.f32 %v37, %v1452
  %v2305 = vmul.f32 %v34, %v1453
  %v2306 = vmul.f32 %v35, %v1454
  %v2307 = vmul.f32 %v36, %v1455
  %v2308 = vmul.f32 %v37, %v1456
  %v2309 = vmul.f32 %v34, %v1457
  %v2310 = vmul.f32 %v35, %v1458
  %v2311 = vmul.f32 %v36, %v1459
  %v2312 = vmul.f32 %v37, %v1460
  %v2313 = vadd.f32 %v2281, %v2282
  %v2314 = vadd.f32 %v2313, %v2283
  %v2315 = vadd.f32 %v2314, %v2284
  %v2316 = vrot.slane %v2315, 4
  %v2317 = vadd.f32 %v2315, %v2316
  %v2318 = vrot.slane %v2317, 2
  %v2319 = vadd.f32 %v2317, %v2318
  %v2320 = vrot.slane %v2319, 1
  %v2321 = vadd.f32 %v2319, %v2320
  %v2322 = vadd.f32 %v2285, %v2286
  %v2323 = vadd.f32 %v2322, %v2287
  %v2324 = vadd.f32 %v2323, %v2288
  %v2325 = vrot.slane %v2324, 4
  %v2326 = vadd.f32 %v2324, %v2325
  %v2327 = vrot.slane %v2326, 2
  %v2328 = vadd.f32 %v2326, %v2327
  %v2329 = vrot.slane %v2328, 1
  %v2330 = vadd.f32 %v2328, %v2329
  %v2331 = vadd.f32 %v2289, %v2290
  %v2332 = vadd.f32 %v2331, %v2291
  %v2333 = vadd.f32 %v2332, %v2292
  %v2334 = vrot.slane %v2333, 4
  %v2335 = vadd.f32 %v2333, %v2334
  %v2336 = vrot.slane %v2335, 2
  %v2337 = vadd.f32 %v2335, %v2336
  %v2338 = vrot.slane %v2337, 1
  %v2339 = vadd.f32 %v2337, %v2338
  %v2340 = vadd.f32 %v2293, %v2294
  %v2341 = vadd.f32 %v2340, %v2295
  %v2342 = vadd.f32 %v2341, %v2296
  %v2343 = vrot.slane %v2342, 4
  %v2344 = vadd.f32 %v2342, %v2343
  %v2345 = vrot.slane %v2344, 2
  %v2346 = vadd.f32 %v2344, %v2345
  %v2347 = vrot.slane %v2346, 1
  %v2348 = vadd.f32 %v2346, %v2347
  %v2349 = vadd.f32 %v2297, %v2298
  %v2350 = vadd.f32 %v2349, %v2299
  %v2351 = vadd.f32 %v2350, %v2300
  %v2352 = vrot.slane %v2351, 4
  %v2353 = vadd.f32 %v2351, %v2352
  %v2354 = vrot.slane %v2353, 2
  %v2355 = vadd.f32 %v2353, %v2354
  %v2356 = vrot.slane %v2355, 1
  %v2357 = vadd.f32 %v2355, %v2356
  %v2358 = vadd.f32 %v2301, %v2302
  %v2359 = vadd.f32 %v2358, %v2303
  %v2360 = vadd.f32 %v2359, %v2304
  %v2361 = vrot.slane %v2360, 4
  %v2362 = vadd.f32 %v2360, %v2361
  %v2363 = vrot.slane %v2362, 2
  %v2364 = vadd.f32 %v2362, %v2363
  %v2365 = vrot.slane %v2364, 1
  %v2366 = vadd.f32 %v2364, %v2365
  %v2367 = vadd.f32 %v2305, %v2306
  %v2368 = vadd.f32 %v2367, %v2307
  %v2369 = vadd.f32 %v2368, %v2308
  %v2370 = vrot.slane %v2369, 4
  %v2371 = vadd.f32 %v2369, %v2370
  %v2372 = vrot.slane %v2371, 2
  %v2373 = vadd.f32 %v2371, %v2372
  %v2374 = vrot.slane %v2373, 1
  %v2375 = vadd.f32 %v2373, %v2374
  %v2376 = vadd.f32 %v2309, %v2310
  %v2377 = vadd.f32 %v2376, %v2311
  %v2378 = vadd.f32 %v2377, %v2312
  %v2379 = vrot.slane %v2378, 4
  %v2380 = vadd.f32 %v2378, %v2379
  %v2381 = vrot.slane %v2380, 2
  %v2382 = vadd.f32 %v2380, %v2381
  %v2383 = vrot.slane %v2382, 1
  %v2384 = vadd.f32 %v2382, %v2383
  %v2385 = vadd.f32 %v131, %v1683
  %v2386 = vmul.f32 %v2321, 2.0
  %v2387 = vmul.f32 %v2330, 2.0
  %v2388 = vmul.f32 %v2339, 2.0
  %v2389 = vmul.f32 %v2348, 2.0
  %v2390 = vmul.f32 %v2357, 2.0
  %v2391 = vmul.f32 %v2366, 2.0
  %v2392 = vmul.f32 %v2375, 2.0
  %v2393 = vmul.f32 %v2384, 2.0
  %v2402 = vsel %vm398, %v2387, %v2386
  %v2403 = vsel %vm400, %v2388, %v2402
  %v2404 = vsel %vm402, %v2389, %v2403
  %v2405 = vsel %vm404, %v2390, %v2404
  %v2406 = vsel %vm406, %v2391, %v2405
  %v2407 = vsel %vm408, %v2392, %v2406
  %v2408 = vsel %vm410, %v2393, %v2407
  %v2410 = vsub.f32 %v2385, %v2408
  %v2411 = vmax.f32 %v2410, 1e-12
  %v2412 = vrsqrt.pop %v2411
  %v2413 = vmul.f32 %v2411, %v2412
  %vm2414 = vcmp.eq.f32.partialorder %v2411, inf
  %v2415 = vsel %vm2414, %v2411, %v2413
  %vm2416 = vcmp.eq.f32.partialorder %v2411, 0.0
  %v2417 = vand.u32 %v2411, 2147483648
  %v2418 = vsel %vm2416, %v2417, %v2415
  %v2419 = vmul.f32 %v2418, 0.5
  %v2420 = vtanh.pop %v2419
  %v2421 = vmul.f32 %v38, %v1429
  %v2422 = vmul.f32 %v39, %v1430
  %v2423 = vmul.f32 %v40, %v1431
  %v2424 = vmul.f32 %v41, %v1432
  %v2425 = vmul.f32 %v38, %v1433
  %v2426 = vmul.f32 %v39, %v1434
  %v2427 = vmul.f32 %v40, %v1435
  %v2428 = vmul.f32 %v41, %v1436
  %v2429 = vmul.f32 %v38, %v1437
  %v2430 = vmul.f32 %v39, %v1438
  %v2431 = vmul.f32 %v40, %v1439
  %v2432 = vmul.f32 %v41, %v1440
  %v2433 = vmul.f32 %v38, %v1441
  %v2434 = vmul.f32 %v39, %v1442
  %v2435 = vmul.f32 %v40, %v1443
  %v2436 = vmul.f32 %v41, %v1444
  %v2437 = vmul.f32 %v38, %v1445
  %v2438 = vmul.f32 %v39, %v1446
  %v2439 = vmul.f32 %v40, %v1447
  %v2440 = vmul.f32 %v41, %v1448
  %v2441 = vmul.f32 %v38, %v1449
  %v2442 = vmul.f32 %v39, %v1450
  %v2443 = vmul.f32 %v40, %v1451
  %v2444 = vmul.f32 %v41, %v1452
  %v2445 = vmul.f32 %v38, %v1453
  %v2446 = vmul.f32 %v39, %v1454
  %v2447 = vmul.f32 %v40, %v1455
  %v2448 = vmul.f32 %v41, %v1456
  %v2449 = vmul.f32 %v38, %v1457
  %v2450 = vmul.f32 %v39, %v1458
  %v2451 = vmul.f32 %v40, %v1459
  %v2452 = vmul.f32 %v41, %v1460
  %v2453 = vadd.f32 %v2421, %v2422
  %v2454 = vadd.f32 %v2453, %v2423
  %v2455 = vadd.f32 %v2454, %v2424
  %v2456 = vrot.slane %v2455, 4
  %v2457 = vadd.f32 %v2455, %v2456
  %v2458 = vrot.slane %v2457, 2
  %v2459 = vadd.f32 %v2457, %v2458
  %v2460 = vrot.slane %v2459, 1
  %v2461 = vadd.f32 %v2459, %v2460
  %v2462 = vadd.f32 %v2425, %v2426
  %v2463 = vadd.f32 %v2462, %v2427
  %v2464 = vadd.f32 %v2463, %v2428
  %v2465 = vrot.slane %v2464, 4
  %v2466 = vadd.f32 %v2464, %v2465
  %v2467 = vrot.slane %v2466, 2
  %v2468 = vadd.f32 %v2466, %v2467
  %v2469 = vrot.slane %v2468, 1
  %v2470 = vadd.f32 %v2468, %v2469
  %v2471 = vadd.f32 %v2429, %v2430
  %v2472 = vadd.f32 %v2471, %v2431
  %v2473 = vadd.f32 %v2472, %v2432
  %v2474 = vrot.slane %v2473, 4
  %v2475 = vadd.f32 %v2473, %v2474
  %v2476 = vrot.slane %v2475, 2
  %v2477 = vadd.f32 %v2475, %v2476
  %v2478 = vrot.slane %v2477, 1
  %v2479 = vadd.f32 %v2477, %v2478
  %v2480 = vadd.f32 %v2433, %v2434
  %v2481 = vadd.f32 %v2480, %v2435
  %v2482 = vadd.f32 %v2481, %v2436
  %v2483 = vrot.slane %v2482, 4
  %v2484 = vadd.f32 %v2482, %v2483
  %v2485 = vrot.slane %v2484, 2
  %v2486 = vadd.f32 %v2484, %v2485
  %v2487 = vrot.slane %v2486, 1
  %v2488 = vadd.f32 %v2486, %v2487
  %v2489 = vadd.f32 %v2437, %v2438
  %v2490 = vadd.f32 %v2489, %v2439
  %v2491 = vadd.f32 %v2490, %v2440
  %v2492 = vrot.slane %v2491, 4
  %v2493 = vadd.f32 %v2491, %v2492
  %v2494 = vrot.slane %v2493, 2
  %v2495 = vadd.f32 %v2493, %v2494
  %v2496 = vrot.slane %v2495, 1
  %v2497 = vadd.f32 %v2495, %v2496
  %v2498 = vadd.f32 %v2441, %v2442
  %v2499 = vadd.f32 %v2498, %v2443
  %v2500 = vadd.f32 %v2499, %v2444
  %v2501 = vrot.slane %v2500, 4
  %v2502 = vadd.f32 %v2500, %v2501
  %v2503 = vrot.slane %v2502, 2
  %v2504 = vadd.f32 %v2502, %v2503
  %v2505 = vrot.slane %v2504, 1
  %v2506 = vadd.f32 %v2504, %v2505
  %v2507 = vadd.f32 %v2445, %v2446
  %v2508 = vadd.f32 %v2507, %v2447
  %v2509 = vadd.f32 %v2508, %v2448
  %v2510 = vrot.slane %v2509, 4
  %v2511 = vadd.f32 %v2509, %v2510
  %v2512 = vrot.slane %v2511, 2
  %v2513 = vadd.f32 %v2511, %v2512
  %v2514 = vrot.slane %v2513, 1
  %v2515 = vadd.f32 %v2513, %v2514
  %v2516 = vadd.f32 %v2449, %v2450
  %v2517 = vadd.f32 %v2516, %v2451
  %v2518 = vadd.f32 %v2517, %v2452
  %v2519 = vrot.slane %v2518, 4
  %v2520 = vadd.f32 %v2518, %v2519
  %v2521 = vrot.slane %v2520, 2
  %v2522 = vadd.f32 %v2520, %v2521
  %v2523 = vrot.slane %v2522, 1
  %v2524 = vadd.f32 %v2522, %v2523
  %v2525 = vadd.f32 %v140, %v1683
  %v2526 = vmul.f32 %v2461, 2.0
  %v2527 = vmul.f32 %v2470, 2.0
  %v2528 = vmul.f32 %v2479, 2.0
  %v2529 = vmul.f32 %v2488, 2.0
  %v2530 = vmul.f32 %v2497, 2.0
  %v2531 = vmul.f32 %v2506, 2.0
  %v2532 = vmul.f32 %v2515, 2.0
  %v2533 = vmul.f32 %v2524, 2.0
  %v2542 = vsel %vm398, %v2527, %v2526
  %v2543 = vsel %vm400, %v2528, %v2542
  %v2544 = vsel %vm402, %v2529, %v2543
  %v2545 = vsel %vm404, %v2530, %v2544
  %v2546 = vsel %vm406, %v2531, %v2545
  %v2547 = vsel %vm408, %v2532, %v2546
  %v2548 = vsel %vm410, %v2533, %v2547
  %v2550 = vsub.f32 %v2525, %v2548
  %v2551 = vmax.f32 %v2550, 1e-12
  %v2552 = vrsqrt.pop %v2551
  %v2553 = vmul.f32 %v2551, %v2552
  %vm2554 = vcmp.eq.f32.partialorder %v2551, inf
  %v2555 = vsel %vm2554, %v2551, %v2553
  %vm2556 = vcmp.eq.f32.partialorder %v2551, 0.0
  %v2557 = vand.u32 %v2551, 2147483648
  %v2558 = vsel %vm2556, %v2557, %v2555
  %v2559 = vmul.f32 %v2558, 0.5
  %v2560 = vtanh.pop %v2559
  %v2561 = vmul.f32 %v42, %v1429
  %v2562 = vmul.f32 %v43, %v1430
  %v2563 = vmul.f32 %v44, %v1431
  %v2564 = vmul.f32 %v45, %v1432
  %v2565 = vmul.f32 %v42, %v1433
  %v2566 = vmul.f32 %v43, %v1434
  %v2567 = vmul.f32 %v44, %v1435
  %v2568 = vmul.f32 %v45, %v1436
  %v2569 = vmul.f32 %v42, %v1437
  %v2570 = vmul.f32 %v43, %v1438
  %v2571 = vmul.f32 %v44, %v1439
  %v2572 = vmul.f32 %v45, %v1440
  %v2573 = vmul.f32 %v42, %v1441
  %v2574 = vmul.f32 %v43, %v1442
  %v2575 = vmul.f32 %v44, %v1443
  %v2576 = vmul.f32 %v45, %v1444
  %v2577 = vmul.f32 %v42, %v1445
  %v2578 = vmul.f32 %v43, %v1446
  %v2579 = vmul.f32 %v44, %v1447
  %v2580 = vmul.f32 %v45, %v1448
  %v2581 = vmul.f32 %v42, %v1449
  %v2582 = vmul.f32 %v43, %v1450
  %v2583 = vmul.f32 %v44, %v1451
  %v2584 = vmul.f32 %v45, %v1452
  %v2585 = vmul.f32 %v42, %v1453
  %v2586 = vmul.f32 %v43, %v1454
  %v2587 = vmul.f32 %v44, %v1455
  %v2588 = vmul.f32 %v45, %v1456
  %v2589 = vmul.f32 %v42, %v1457
  %v2590 = vmul.f32 %v43, %v1458
  %v2591 = vmul.f32 %v44, %v1459
  %v2592 = vmul.f32 %v45, %v1460
  %v2593 = vadd.f32 %v2561, %v2562
  %v2594 = vadd.f32 %v2593, %v2563
  %v2595 = vadd.f32 %v2594, %v2564
  %v2596 = vrot.slane %v2595, 4
  %v2597 = vadd.f32 %v2595, %v2596
  %v2598 = vrot.slane %v2597, 2
  %v2599 = vadd.f32 %v2597, %v2598
  %v2600 = vrot.slane %v2599, 1
  %v2601 = vadd.f32 %v2599, %v2600
  %v2602 = vadd.f32 %v2565, %v2566
  %v2603 = vadd.f32 %v2602, %v2567
  %v2604 = vadd.f32 %v2603, %v2568
  %v2605 = vrot.slane %v2604, 4
  %v2606 = vadd.f32 %v2604, %v2605
  %v2607 = vrot.slane %v2606, 2
  %v2608 = vadd.f32 %v2606, %v2607
  %v2609 = vrot.slane %v2608, 1
  %v2610 = vadd.f32 %v2608, %v2609
  %v2611 = vadd.f32 %v2569, %v2570
  %v2612 = vadd.f32 %v2611, %v2571
  %v2613 = vadd.f32 %v2612, %v2572
  %v2614 = vrot.slane %v2613, 4
  %v2615 = vadd.f32 %v2613, %v2614
  %v2616 = vrot.slane %v2615, 2
  %v2617 = vadd.f32 %v2615, %v2616
  %v2618 = vrot.slane %v2617, 1
  %v2619 = vadd.f32 %v2617, %v2618
  %v2620 = vadd.f32 %v2573, %v2574
  %v2621 = vadd.f32 %v2620, %v2575
  %v2622 = vadd.f32 %v2621, %v2576
  %v2623 = vrot.slane %v2622, 4
  %v2624 = vadd.f32 %v2622, %v2623
  %v2625 = vrot.slane %v2624, 2
  %v2626 = vadd.f32 %v2624, %v2625
  %v2627 = vrot.slane %v2626, 1
  %v2628 = vadd.f32 %v2626, %v2627
  %v2629 = vadd.f32 %v2577, %v2578
  %v2630 = vadd.f32 %v2629, %v2579
  %v2631 = vadd.f32 %v2630, %v2580
  %v2632 = vrot.slane %v2631, 4
  %v2633 = vadd.f32 %v2631, %v2632
  %v2634 = vrot.slane %v2633, 2
  %v2635 = vadd.f32 %v2633, %v2634
  %v2636 = vrot.slane %v2635, 1
  %v2637 = vadd.f32 %v2635, %v2636
  %v2638 = vadd.f32 %v2581, %v2582
  %v2639 = vadd.f32 %v2638, %v2583
  %v2640 = vadd.f32 %v2639, %v2584
  %v2641 = vrot.slane %v2640, 4
  %v2642 = vadd.f32 %v2640, %v2641
  %v2643 = vrot.slane %v2642, 2
  %v2644 = vadd.f32 %v2642, %v2643
  %v2645 = vrot.slane %v2644, 1
  %v2646 = vadd.f32 %v2644, %v2645
  %v2647 = vadd.f32 %v2585, %v2586
  %v2648 = vadd.f32 %v2647, %v2587
  %v2649 = vadd.f32 %v2648, %v2588
  %v2650 = vrot.slane %v2649, 4
  %v2651 = vadd.f32 %v2649, %v2650
  %v2652 = vrot.slane %v2651, 2
  %v2653 = vadd.f32 %v2651, %v2652
  %v2654 = vrot.slane %v2653, 1
  %v2655 = vadd.f32 %v2653, %v2654
  %v2656 = vadd.f32 %v2589, %v2590
  %v2657 = vadd.f32 %v2656, %v2591
  %v2658 = vadd.f32 %v2657, %v2592
  %v2659 = vrot.slane %v2658, 4
  %v2660 = vadd.f32 %v2658, %v2659
  %v2661 = vrot.slane %v2660, 2
  %v2662 = vadd.f32 %v2660, %v2661
  %v2663 = vrot.slane %v2662, 1
  %v2664 = vadd.f32 %v2662, %v2663
  %v2665 = vadd.f32 %v149, %v1683
  %v2666 = vmul.f32 %v2601, 2.0
  %v2667 = vmul.f32 %v2610, 2.0
  %v2668 = vmul.f32 %v2619, 2.0
  %v2669 = vmul.f32 %v2628, 2.0
  %v2670 = vmul.f32 %v2637, 2.0
  %v2671 = vmul.f32 %v2646, 2.0
  %v2672 = vmul.f32 %v2655, 2.0
  %v2673 = vmul.f32 %v2664, 2.0
  %v2682 = vsel %vm398, %v2667, %v2666
  %v2683 = vsel %vm400, %v2668, %v2682
  %v2684 = vsel %vm402, %v2669, %v2683
  %v2685 = vsel %vm404, %v2670, %v2684
  %v2686 = vsel %vm406, %v2671, %v2685
  %v2687 = vsel %vm408, %v2672, %v2686
  %v2688 = vsel %vm410, %v2673, %v2687
  %v2690 = vsub.f32 %v2665, %v2688
  %v2691 = vmax.f32 %v2690, 1e-12
  %v2692 = vrsqrt.pop %v2691
  %v2693 = vmul.f32 %v2691, %v2692
  %vm2694 = vcmp.eq.f32.partialorder %v2691, inf
  %v2695 = vsel %vm2694, %v2691, %v2693
  %vm2696 = vcmp.eq.f32.partialorder %v2691, 0.0
  %v2697 = vand.u32 %v2691, 2147483648
  %v2698 = vsel %vm2696, %v2697, %v2695
  %v2699 = vmul.f32 %v2698, 0.5
  %v2700 = vtanh.pop %v2699
  %v2701 = vlaneseq
  %v2702 = vshrl.u32 %v2701, 7
  %vm2703 = vcmp.eq.s32.totalorder %v2702, 0
  %v2704 = vsel %vm2703, 1, 0
  %vm2705 = vcmp.eq.s32.totalorder %v2704, 1
  %v2706 = vlaneseq
  %v2707 = vshrl.u32 %v2706, 7
  %v2708 = vsub.s32 0, %v2707
  %v2709 = vrot.slane %v448, %v2708
  %v2710 = vlaneseq
  %v2711 = vshrl.u32 %v2710, 7
  %v2712 = vsub.s32 0, %v2711
  %v2713 = vrot.slane %v1720, %v2712
  %v2714 = vsel %vm2705, %v2709, inf
  %v2715 = vsel %vm2705, %v2713, inf
  %v2718 = vrot.slane %v2714, 7
  %v2719 = vrot.slane %v2715, 7
  %vm2722 = vcmask 1040384
  %v2723 = vsel %vm2722, %v2718, %v2718
  %v2724 = vsel %vm2722, %v2719, %v2719
  %v2727 = vrot.slane %v448, 1
  %v2728 = vrot.slane %v1720, 1
  %v2733 = vrot.slane %v588, 7
  %v2734 = vrot.slane %v1860, 7
  %v2739 = vrot.slane %v728, 5
  %v2740 = vrot.slane %v2000, 5
  %v2745 = vrot.slane %v868, 3
  %v2746 = vrot.slane %v2140, 3
  %v2751 = vrot.slane %v1008, 1
  %v2752 = vrot.slane %v2280, 1
  %v2757 = vrot.slane %v1148, 7
  %v2758 = vrot.slane %v2420, 7
  %v2763 = vrot.slane %v1288, 5
  %v2764 = vrot.slane %v2560, 5
  %v2769 = vrot.slane %v1428, 3
  %v2770 = vrot.slane %v2700, 3
  %v2773 = vsel %vm2722, %v2727, %v2733
  %v2774 = vsel %vm2722, %v2728, %v2734
  %vm2775 = vcmask 1041408
  %v2776 = vsel %vm2775, %v2773, %v2739
  %v2777 = vsel %vm2775, %v2774, %v2740
  %vm2778 = vcmask 1042432
  %v2779 = vsel %vm2778, %v2776, %v2745
  %v2780 = vsel %vm2778, %v2777, %v2746
  %vm2781 = vcmask 1043456
  %v2782 = vsel %vm2781, %v2779, %v2751
  %v2783 = vsel %vm2781, %v2780, %v2752
  %vm2784 = vcmask 1044480
  %v2785 = vsel %vm2784, %v2782, %v2757
  %v2786 = vsel %vm2784, %v2783, %v2758
  %vm2787 = vcmask 1045504
  %v2788 = vsel %vm2787, %v2785, %v2763
  %v2789 = vsel %vm2787, %v2786, %v2764
  %vm2790 = vcmask 1046528
  %v2791 = vsel %vm2790, %v2788, %v2769
  %v2792 = vsel %vm2790, %v2789, %v2770
  %v2793 = vmin.f32 %v2714, %v2723
  %v2794 = vmin.f32 %v2715, %v2724
  %v2795 = vadd.f32 %v2793, %v2791
  %v2796 = vadd.f32 %v2794, %v2792
  %vm2797 = vcmp.le.s32.totalorder %v2702, 1
  %vm2798 = vcmp.ge.s32.totalorder %v2702, 4294967290
  %vm2799 = vmand %vm2797, %vm2798
  %v2800 = vsel %vm2799, 1, 0
  %vm2801 = vcmp.eq.s32.totalorder %v2800, 1
  %v2802 = vsel %vm2801, %v2795, inf
  %v2803 = vsel %vm2801, %v2796, inf
  %v2806 = vrot.slane %v2802, 7
  %v2807 = vrot.slane %v2803, 7
  %v2810 = vsel %vm2722, %v2806, %v2806
  %v2811 = vsel %vm2722, %v2807, %v2807
  %v2812 = vrot.slane %v448, 2
  %v2813 = vrot.slane %v1720, 2
  %v2816 = vrot.slane %v728, 6
  %v2817 = vrot.slane %v2000, 6
  %v2820 = vrot.slane %v868, 4
  %v2821 = vrot.slane %v2140, 4
  %v2824 = vrot.slane %v1008, 2
  %v2825 = vrot.slane %v2280, 2
  %v2828 = vrot.slane %v1288, 6
  %v2829 = vrot.slane %v2560, 6
  %v2832 = vrot.slane %v1428, 4
  %v2833 = vrot.slane %v2700, 4
  %v2836 = vsel %vm2722, %v2812, %v588
  %v2837 = vsel %vm2722, %v2813, %v1860
  %v2838 = vsel %vm2775, %v2836, %v2816
  %v2839 = vsel %vm2775, %v2837, %v2817
  %v2840 = vsel %vm2778, %v2838, %v2820
  %v2841 = vsel %vm2778, %v2839, %v2821
  %v2842 = vsel %vm2781, %v2840, %v2824
  %v2843 = vsel %vm2781, %v2841, %v2825
  %v2844 = vsel %vm2784, %v2842, %v1148
  %v2845 = vsel %vm2784, %v2843, %v2420
  %v2846 = vsel %vm2787, %v2844, %v2828
  %v2847 = vsel %vm2787, %v2845, %v2829
  %v2848 = vsel %vm2790, %v2846, %v2832
  %v2849 = vsel %vm2790, %v2847, %v2833
  %v2850 = vmin.f32 %v2802, %v2810
  %v2851 = vmin.f32 %v2803, %v2811
  %v2852 = vadd.f32 %v2850, %v2848
  %v2853 = vadd.f32 %v2851, %v2849
  %vm2854 = vcmp.le.s32.totalorder %v2702, 2
  %vm2855 = vcmp.ge.s32.totalorder %v2702, 4294967291
  %vm2856 = vmand %vm2854, %vm2855
  %v2857 = vsel %vm2856, 1, 0
  %vm2858 = vcmp.eq.s32.totalorder %v2857, 1
  %v2859 = vsel %vm2858, %v2852, inf
  %v2860 = vsel %vm2858, %v2853, inf
  %v2863 = vrot.slane %v2859, 7
  %v2864 = vrot.slane %v2860, 7
  %v2867 = vsel %vm2722, %v2863, %v2863
  %v2868 = vsel %vm2722, %v2864, %v2864
  %v2869 = vrot.slane %v448, 3
  %v2870 = vrot.slane %v1720, 3
  %v2873 = vrot.slane %v588, 1
  %v2874 = vrot.slane %v1860, 1
  %v2877 = vrot.slane %v728, 7
  %v2878 = vrot.slane %v2000, 7
  %v2881 = vrot.slane %v868, 5
  %v2882 = vrot.slane %v2140, 5
  %v2885 = vrot.slane %v1008, 3
  %v2886 = vrot.slane %v2280, 3
  %v2889 = vrot.slane %v1148, 1
  %v2890 = vrot.slane %v2420, 1
  %v2893 = vrot.slane %v1288, 7
  %v2894 = vrot.slane %v2560, 7
  %v2897 = vrot.slane %v1428, 5
  %v2898 = vrot.slane %v2700, 5
  %v2901 = vsel %vm2722, %v2869, %v2873
  %v2902 = vsel %vm2722, %v2870, %v2874
  %v2903 = vsel %vm2775, %v2901, %v2877
  %v2904 = vsel %vm2775, %v2902, %v2878
  %v2905 = vsel %vm2778, %v2903, %v2881
  %v2906 = vsel %vm2778, %v2904, %v2882
  %v2907 = vsel %vm2781, %v2905, %v2885
  %v2908 = vsel %vm2781, %v2906, %v2886
  %v2909 = vsel %vm2784, %v2907, %v2889
  %v2910 = vsel %vm2784, %v2908, %v2890
  %v2911 = vsel %vm2787, %v2909, %v2893
  %v2912 = vsel %vm2787, %v2910, %v2894
  %v2913 = vsel %vm2790, %v2911, %v2897
  %v2914 = vsel %vm2790, %v2912, %v2898
  %v2915 = vmin.f32 %v2859, %v2867
  %v2916 = vmin.f32 %v2860, %v2868
  %v2917 = vadd.f32 %v2915, %v2913
  %v2918 = vadd.f32 %v2916, %v2914
  %vm2919 = vcmp.le.s32.totalorder %v2702, 3
  %vm2920 = vcmp.ge.s32.totalorder %v2702, 4294967292
  %vm2921 = vmand %vm2919, %vm2920
  %v2922 = vsel %vm2921, 1, 0
  %vm2923 = vcmp.eq.s32.totalorder %v2922, 1
  %v2924 = vsel %vm2923, %v2917, inf
  %v2925 = vsel %vm2923, %v2918, inf
  %v2928 = vrot.slane %v2924, 7
  %v2929 = vrot.slane %v2925, 7
  %v2932 = vsel %vm2722, %v2928, %v2928
  %v2933 = vsel %vm2722, %v2929, %v2929
  %v2934 = vrot.slane %v448, 4
  %v2935 = vrot.slane %v1720, 4
  %v2938 = vrot.slane %v588, 2
  %v2939 = vrot.slane %v1860, 2
  %v2942 = vrot.slane %v868, 6
  %v2943 = vrot.slane %v2140, 6
  %v2946 = vrot.slane %v1008, 4
  %v2947 = vrot.slane %v2280, 4
  %v2950 = vrot.slane %v1148, 2
  %v2951 = vrot.slane %v2420, 2
  %v2954 = vrot.slane %v1428, 6
  %v2955 = vrot.slane %v2700, 6
  %v2958 = vsel %vm2722, %v2934, %v2938
  %v2959 = vsel %vm2722, %v2935, %v2939
  %v2960 = vsel %vm2775, %v2958, %v728
  %v2961 = vsel %vm2775, %v2959, %v2000
  %v2962 = vsel %vm2778, %v2960, %v2942
  %v2963 = vsel %vm2778, %v2961, %v2943
  %v2964 = vsel %vm2781, %v2962, %v2946
  %v2965 = vsel %vm2781, %v2963, %v2947
  %v2966 = vsel %vm2784, %v2964, %v2950
  %v2967 = vsel %vm2784, %v2965, %v2951
  %v2968 = vsel %vm2787, %v2966, %v1288
  %v2969 = vsel %vm2787, %v2967, %v2560
  %v2970 = vsel %vm2790, %v2968, %v2954
  %v2971 = vsel %vm2790, %v2969, %v2955
  %v2972 = vmin.f32 %v2924, %v2932
  %v2973 = vmin.f32 %v2925, %v2933
  %v2974 = vadd.f32 %v2972, %v2970
  %v2975 = vadd.f32 %v2973, %v2971
  %vm2976 = vcmp.le.s32.totalorder %v2702, 4
  %vm2977 = vcmp.ge.s32.totalorder %v2702, 4294967293
  %vm2978 = vmand %vm2976, %vm2977
  %v2979 = vsel %vm2978, 1, 0
  %vm2980 = vcmp.eq.s32.totalorder %v2979, 1
  %v2981 = vsel %vm2980, %v2974, inf
  %v2982 = vsel %vm2980, %v2975, inf
  %v2985 = vrot.slane %v2981, 7
  %v2986 = vrot.slane %v2982, 7
  %v2989 = vsel %vm2722, %v2985, %v2985
  %v2990 = vsel %vm2722, %v2986, %v2986
  %v2991 = vrot.slane %v448, 5
  %v2992 = vrot.slane %v1720, 5
  %v2995 = vrot.slane %v588, 3
  %v2996 = vrot.slane %v1860, 3
  %v2999 = vrot.slane %v728, 1
  %v3000 = vrot.slane %v2000, 1
  %v3003 = vrot.slane %v868, 7
  %v3004 = vrot.slane %v2140, 7
  %v3007 = vrot.slane %v1008, 5
  %v3008 = vrot.slane %v2280, 5
  %v3011 = vrot.slane %v1148, 3
  %v3012 = vrot.slane %v2420, 3
  %v3015 = vrot.slane %v1288, 1
  %v3016 = vrot.slane %v2560, 1
  %v3019 = vrot.slane %v1428, 7
  %v3020 = vrot.slane %v2700, 7
  %v3023 = vsel %vm2722, %v2991, %v2995
  %v3024 = vsel %vm2722, %v2992, %v2996
  %v3025 = vsel %vm2775, %v3023, %v2999
  %v3026 = vsel %vm2775, %v3024, %v3000
  %v3027 = vsel %vm2778, %v3025, %v3003
  %v3028 = vsel %vm2778, %v3026, %v3004
  %v3029 = vsel %vm2781, %v3027, %v3007
  %v3030 = vsel %vm2781, %v3028, %v3008
  %v3031 = vsel %vm2784, %v3029, %v3011
  %v3032 = vsel %vm2784, %v3030, %v3012
  %v3033 = vsel %vm2787, %v3031, %v3015
  %v3034 = vsel %vm2787, %v3032, %v3016
  %v3035 = vsel %vm2790, %v3033, %v3019
  %v3036 = vsel %vm2790, %v3034, %v3020
  %v3037 = vmin.f32 %v2981, %v2989
  %v3038 = vmin.f32 %v2982, %v2990
  %v3039 = vadd.f32 %v3037, %v3035
  %v3040 = vadd.f32 %v3038, %v3036
  %vm3041 = vcmp.le.s32.totalorder %v2702, 5
  %vm3042 = vcmp.ge.s32.totalorder %v2702, 4294967294
  %vm3043 = vmand %vm3041, %vm3042
  %v3044 = vsel %vm3043, 1, 0
  %vm3045 = vcmp.eq.s32.totalorder %v3044, 1
  %v3046 = vsel %vm3045, %v3039, inf
  %v3047 = vsel %vm3045, %v3040, inf
  %v3050 = vrot.slane %v3046, 7
  %v3051 = vrot.slane %v3047, 7
  %v3054 = vsel %vm2722, %v3050, %v3050
  %v3055 = vsel %vm2722, %v3051, %v3051
  %v3056 = vrot.slane %v448, 6
  %v3057 = vrot.slane %v1720, 6
  %v3060 = vrot.slane %v588, 4
  %v3061 = vrot.slane %v1860, 4
  %v3064 = vrot.slane %v728, 2
  %v3065 = vrot.slane %v2000, 2
  %v3068 = vrot.slane %v1008, 6
  %v3069 = vrot.slane %v2280, 6
  %v3072 = vrot.slane %v1148, 4
  %v3073 = vrot.slane %v2420, 4
  %v3076 = vrot.slane %v1288, 2
  %v3077 = vrot.slane %v2560, 2
  %v3080 = vsel %vm2722, %v3056, %v3060
  %v3081 = vsel %vm2722, %v3057, %v3061
  %v3082 = vsel %vm2775, %v3080, %v3064
  %v3083 = vsel %vm2775, %v3081, %v3065
  %v3084 = vsel %vm2778, %v3082, %v868
  %v3085 = vsel %vm2778, %v3083, %v2140
  %v3086 = vsel %vm2781, %v3084, %v3068
  %v3087 = vsel %vm2781, %v3085, %v3069
  %v3088 = vsel %vm2784, %v3086, %v3072
  %v3089 = vsel %vm2784, %v3087, %v3073
  %v3090 = vsel %vm2787, %v3088, %v3076
  %v3091 = vsel %vm2787, %v3089, %v3077
  %v3092 = vsel %vm2790, %v3090, %v1428
  %v3093 = vsel %vm2790, %v3091, %v2700
  %v3094 = vmin.f32 %v3046, %v3054
  %v3095 = vmin.f32 %v3047, %v3055
  %v3096 = vadd.f32 %v3094, %v3092
  %v3097 = vadd.f32 %v3095, %v3093
  %vm3098 = vcmp.le.s32.totalorder %v2702, 6
  %vm3099 = vcmp.ge.s32.totalorder %v2702, 4294967295
  %vm3100 = vmand %vm3098, %vm3099
  %v3101 = vsel %vm3100, 1, 0
  %vm3102 = vcmp.eq.s32.totalorder %v3101, 1
  %v3103 = vsel %vm3102, %v3096, inf
  %v3104 = vsel %vm3102, %v3097, inf
  %v3107 = vrot.slane %v3103, 7
  %v3108 = vrot.slane %v3104, 7
  %v3111 = vsel %vm2722, %v3107, %v3107
  %v3112 = vsel %vm2722, %v3108, %v3108
  %v3113 = vrot.slane %v448, 7
  %v3114 = vrot.slane %v1720, 7
  %v3117 = vrot.slane %v588, 5
  %v3118 = vrot.slane %v1860, 5
  %v3121 = vrot.slane %v728, 3
  %v3122 = vrot.slane %v2000, 3
  %v3125 = vrot.slane %v868, 1
  %v3126 = vrot.slane %v2140, 1
  %v3129 = vrot.slane %v1008, 7
  %v3130 = vrot.slane %v2280, 7
  %v3133 = vrot.slane %v1148, 5
  %v3134 = vrot.slane %v2420, 5
  %v3137 = vrot.slane %v1288, 3
  %v3138 = vrot.slane %v2560, 3
  %v3141 = vrot.slane %v1428, 1
  %v3142 = vrot.slane %v2700, 1
  %v3145 = vsel %vm2722, %v3113, %v3117
  %v3146 = vsel %vm2722, %v3114, %v3118
  %v3147 = vsel %vm2775, %v3145, %v3121
  %v3148 = vsel %vm2775, %v3146, %v3122
  %v3149 = vsel %vm2778, %v3147, %v3125
  %v3150 = vsel %vm2778, %v3148, %v3126
  %v3151 = vsel %vm2781, %v3149, %v3129
  %v3152 = vsel %vm2781, %v3150, %v3130
  %v3153 = vsel %vm2784, %v3151, %v3133
  %v3154 = vsel %vm2784, %v3152, %v3134
  %v3155 = vsel %vm2787, %v3153, %v3137
  %v3156 = vsel %vm2787, %v3154, %v3138
  %v3157 = vsel %vm2790, %v3155, %v3141
  %v3158 = vsel %vm2790, %v3156, %v3142
  %v3159 = vmin.f32 %v3103, %v3111
  %v3160 = vmin.f32 %v3104, %v3112
  %v3161 = vadd.f32 %v3159, %v3157
  %v3162 = vadd.f32 %v3160, %v3158
  %vm3163 = vcmp.le.s32.totalorder %v2702, 7
  %vm3164 = vcmp.ge.s32.totalorder %v2702, 0
  %vm3165 = vmand %vm3163, %vm3164
  %v3166 = vsel %vm3165, 1, 0
  %vm3167 = vcmp.eq.s32.totalorder %v3166, 1
  %v3168 = vsel %vm3167, %v3161, inf
  %v3169 = vsel %vm3167, %v3162, inf
  %v3172 = vrot.slane %v3168, 7
  %v3173 = vrot.slane %v3169, 7
  %v3176 = vsel %vm2722, %v3172, %v3172
  %v3177 = vsel %vm2722, %v3173, %v3173
  %v3178 = vrot.slane %v588, 6
  %v3179 = vrot.slane %v1860, 6
  %v3182 = vrot.slane %v728, 4
  %v3183 = vrot.slane %v2000, 4
  %v3186 = vrot.slane %v868, 2
  %v3187 = vrot.slane %v2140, 2
  %v3190 = vrot.slane %v1148, 6
  %v3191 = vrot.slane %v2420, 6
  %v3194 = vrot.slane %v1288, 4
  %v3195 = vrot.slane %v2560, 4
  %v3198 = vrot.slane %v1428, 2
  %v3199 = vrot.slane %v2700, 2
  %v3202 = vsel %vm2722, %v448, %v3178
  %v3203 = vsel %vm2722, %v1720, %v3179
  %v3204 = vsel %vm2775, %v3202, %v3182
  %v3205 = vsel %vm2775, %v3203, %v3183
  %v3206 = vsel %vm2778, %v3204, %v3186
  %v3207 = vsel %vm2778, %v3205, %v3187
  %v3208 = vsel %vm2781, %v3206, %v1008
  %v3209 = vsel %vm2781, %v3207, %v2280
  %v3210 = vsel %vm2784, %v3208, %v3190
  %v3211 = vsel %vm2784, %v3209, %v3191
  %v3212 = vsel %vm2787, %v3210, %v3194
  %v3213 = vsel %vm2787, %v3211, %v3195
  %v3214 = vsel %vm2790, %v3212, %v3198
  %v3215 = vsel %vm2790, %v3213, %v3199
  %v3216 = vmin.f32 %v3168, %v3176
  %v3217 = vmin.f32 %v3169, %v3177
  %v3218 = vadd.f32 %v3216, %v3214
  %v3219 = vadd.f32 %v3217, %v3215
  %vm3220 = vcmp.le.s32.totalorder %v2702, 8
  %vm3221 = vcmp.ge.s32.totalorder %v2702, 1
  %vm3222 = vmand %vm3220, %vm3221
  %v3223 = vsel %vm3222, 1, 0
  %vm3224 = vcmp.eq.s32.totalorder %v3223, 1
  %v3225 = vsel %vm3224, %v3218, inf
  %v3226 = vsel %vm3224, %v3219, inf
  %v3229 = vrot.slane %v3225, 7
  %v3230 = vrot.slane %v3226, 7
  %v3233 = vsel %vm2722, %v3229, %v3229
  %v3234 = vsel %vm2722, %v3230, %v3230
  %v3235 = vmin.f32 %v3225, %v3233
  %v3236 = vmin.f32 %v3226, %v3234
  %v3237 = vadd.f32 %v3235, %v2791
  %v3238 = vadd.f32 %v3236, %v2792
  %vm3239 = vcmp.le.s32.totalorder %v2702, 9
  %vm3240 = vcmp.ge.s32.totalorder %v2702, 2
  %vm3241 = vmand %vm3239, %vm3240
  %v3242 = vsel %vm3241, 1, 0
  %vm3243 = vcmp.eq.s32.totalorder %v3242, 1
  %v3244 = vsel %vm3243, %v3237, inf
  %v3245 = vsel %vm3243, %v3238, inf
  %v3248 = vrot.slane %v3244, 7
  %v3249 = vrot.slane %v3245, 7
  %v3252 = vsel %vm2722, %v3248, %v3248
  %v3253 = vsel %vm2722, %v3249, %v3249
  %v3254 = vmin.f32 %v3244, %v3252
  %v3255 = vmin.f32 %v3245, %v3253
  %v3256 = vadd.f32 %v3254, %v2848
  %v3257 = vadd.f32 %v3255, %v2849
  %vm3258 = vcmp.le.s32.totalorder %v2702, 10
  %vm3259 = vcmp.ge.s32.totalorder %v2702, 3
  %vm3260 = vmand %vm3258, %vm3259
  %v3261 = vsel %vm3260, 1, 0
  %vm3262 = vcmp.eq.s32.totalorder %v3261, 1
  %v3263 = vsel %vm3262, %v3256, inf
  %v3264 = vsel %vm3262, %v3257, inf
  %v3267 = vrot.slane %v3263, 7
  %v3268 = vrot.slane %v3264, 7
  %v3271 = vsel %vm2722, %v3267, %v3267
  %v3272 = vsel %vm2722, %v3268, %v3268
  %v3273 = vmin.f32 %v3263, %v3271
  %v3274 = vmin.f32 %v3264, %v3272
  %v3275 = vadd.f32 %v3273, %v2913
  %v3276 = vadd.f32 %v3274, %v2914
  %vm3277 = vcmp.le.s32.totalorder %v2702, 11
  %vm3278 = vcmp.ge.s32.totalorder %v2702, 4
  %vm3279 = vmand %vm3277, %vm3278
  %v3280 = vsel %vm3279, 1, 0
  %vm3281 = vcmp.eq.s32.totalorder %v3280, 1
  %v3282 = vsel %vm3281, %v3275, inf
  %v3283 = vsel %vm3281, %v3276, inf
  %v3286 = vrot.slane %v3282, 7
  %v3287 = vrot.slane %v3283, 7
  %v3290 = vsel %vm2722, %v3286, %v3286
  %v3291 = vsel %vm2722, %v3287, %v3287
  %v3292 = vmin.f32 %v3282, %v3290
  %v3293 = vmin.f32 %v3283, %v3291
  %v3294 = vadd.f32 %v3292, %v2970
  %v3295 = vadd.f32 %v3293, %v2971
  %vm3296 = vcmp.le.s32.totalorder %v2702, 12
  %vm3297 = vcmp.ge.s32.totalorder %v2702, 5
  %vm3298 = vmand %vm3296, %vm3297
  %v3299 = vsel %vm3298, 1, 0
  %vm3300 = vcmp.eq.s32.totalorder %v3299, 1
  %v3301 = vsel %vm3300, %v3294, inf
  %v3302 = vsel %vm3300, %v3295, inf
  %v3305 = vrot.slane %v3301, 7
  %v3306 = vrot.slane %v3302, 7
  %v3309 = vsel %vm2722, %v3305, %v3305
  %v3310 = vsel %vm2722, %v3306, %v3306
  %v3311 = vmin.f32 %v3301, %v3309
  %v3312 = vmin.f32 %v3302, %v3310
  %v3313 = vadd.f32 %v3311, %v3035
  %v3314 = vadd.f32 %v3312, %v3036
  %vm3315 = vcmp.le.s32.totalorder %v2702, 13
  %vm3316 = vcmp.ge.s32.totalorder %v2702, 6
  %vm3317 = vmand %vm3315, %vm3316
  %v3318 = vsel %vm3317, 1, 0
  %vm3319 = vcmp.eq.s32.totalorder %v3318, 1
  %v3320 = vsel %vm3319, %v3313, inf
  %v3321 = vsel %vm3319, %v3314, inf
  %v3324 = vrot.slane %v3320, 7
  %v3325 = vrot.slane %v3321, 7
  %v3328 = vsel %vm2722, %v3324, %v3324
  %v3329 = vsel %vm2722, %v3325, %v3325
  %v3330 = vmin.f32 %v3320, %v3328
  %v3331 = vmin.f32 %v3321, %v3329
  %v3332 = vadd.f32 %v3330, %v3092
  %v3333 = vadd.f32 %v3331, %v3093
  %vm3334 = vcmp.le.s32.totalorder %v2702, 14
  %vm3335 = vcmp.ge.s32.totalorder %v2702, 7
  %vm3336 = vmand %vm3334, %vm3335
  %v3337 = vsel %vm3336, 1, 0
  %vm3338 = vcmp.eq.s32.totalorder %v3337, 1
  %v3339 = vsel %vm3338, %v3332, inf
  %v3340 = vsel %vm3338, %v3333, inf
  %3341 = vst [vmem:[%s3 - $0x7] sm:$0x80] %v3339
  %3342 = vst [vmem:[%s3 - $0x6] sm:$0x80] %v3340
  // Predicated region
  $region14: #{triplet_loss_aligned_reid.3} parent=0 // pred_check
    _
  $region15: #{triplet_loss_aligned_reid.3} parent=0 // pred_check_branch
    %3344 = sbr.rel (0) target = $region17
  $region16: #{triplet_loss_aligned_reid.3} parent=0 // pred_region
    _
  $region17: #{triplet_loss_aligned_reid.3} parent=0 // pred_fallthru
    _
  // Predicated region
  $region18: #{triplet_loss_aligned_reid.3} parent=0 // pred_check
    _
  $region19: #{triplet_loss_aligned_reid.3} parent=0 // pred_check_branch
    %3346 = sbr.rel (0) target = $region21
  $region20: #{triplet_loss_aligned_reid.3} parent=0 // pred_region
    _
  $region21: #{triplet_loss_aligned_reid.3} parent=0 // pred_fallthru
    _

</llo_original>
